<compile_context>
chip_gen: v7x
topology: tpu7x:2x2x1
jax: 0.10.0
libtpu: 0.0.40
codegen_flags: <defaults>
</compile_context>

<pallas_src>
import functools

import jax
import jax.numpy as jnp
from jax.experimental import pallas as pl
from jax.experimental.pallas import tpu as pltpu


def _mk_hidden_kernel(enc_len, d_model, group, num_chunks, chunk_rows, batch,
                      offset_align,
                      off_ref, cnt_ref,      # scalar-prefetch refs (SMEM)
                      feats_hbm,             # raw HBM ref (pl.ANY)
                      hid_ref,               # (group, enc_len, d_model) VMEM out block
                      sem):                  # (group, num_chunks) DMA semaphores
    t = pl.program_id(0)
    base = t * group

    # Hoist ALL SMEM scalar reads above any DMA wait (waits break sst->sld
    # forwarding, so reads placed after them would stall).
    offs, cnts, valid = [], [], []
    for g in range(group):
        off = off_ref[base + g]
        if offset_align is not None and offset_align > 1:
            off = pl.multiple_of(off, offset_align)   # caller-guaranteed tile alignment
        offs.append(off)
        cnts.append(cnt_ref[base + g])
        valid.append(base + g < batch)                # guard for the ragged last step

    def _chunk_copy(g, c):
        start = c * chunk_rows
        return pltpu.make_async_copy(
            feats_hbm.at[pl.ds(offs[g] + start, chunk_rows), :],
            hid_ref.at[g, pl.ds(start, chunk_rows), :],
            sem.at[g, c])

    # Issue every needed chunk DMA of the whole group up front: HBM latency of
    # later graphs hides behind the wait/finalize work of earlier ones.
    # Chunks that hold only padding rows are never read from HBM.
    for g in range(group):
        for c in range(num_chunks):
            start = c * chunk_rows

            @pl.when(jnp.logical_and(valid[g], start < cnts[g]))
            def _(g=g, c=c):
                _chunk_copy(g, c).start()

    chunk_ids = jax.lax.broadcasted_iota(jnp.int32, (chunk_rows, 1), 0)

    for g in range(group):
        n = cnts[g]

        # Wait only on this graph's chunks; later graphs' DMAs stay in flight.
        for c in range(num_chunks):
            start = c * chunk_rows

            @pl.when(jnp.logical_and(valid[g], start < n))
            def _(g=g, c=c):
                _chunk_copy(g, c).wait()

        # Zero the padding rows (rows >= n) chunk by chunk:
        #   * fully-valid chunks: skipped entirely (no load, no store),
        #   * fully-padding chunks: store-only zero fill (no load),
        #   * the single straddling chunk: masked read-modify-write.
        for c in range(num_chunks):
            start = c * chunk_rows
            end = start + chunk_rows

            @pl.when(jnp.logical_and(valid[g], n <= start))
            def _(g=g, start=start):
                hid_ref[g, pl.ds(start, chunk_rows), :] = jnp.zeros(
                    (chunk_rows, d_model), hid_ref.dtype)

            @pl.when(jnp.logical_and(valid[g],
                                     jnp.logical_and(start < n, n < end)))
            def _(g=g, start=start, n=n):
                vals = hid_ref[g, pl.ds(start, chunk_rows), :]
                keep = (start + chunk_ids) < n
                hid_ref[g, pl.ds(start, chunk_rows), :] = jnp.where(
                    keep, vals, jnp.zeros((), hid_ref.dtype))


def _vmem_budget_bytes():
    """~3/4 of this chip's VMEM (128 MiB on v5e/v6e, 64 MiB per TC on v7x).
    Conservative fallback (48 MiB) is safe on every generation."""
    cap = None
    try:
        cap = getattr(pltpu.get_tpu_info(), "vmem_capacity_bytes", None)
    except Exception:
        cap = None
    if not cap:
        cap = 64 * 1024 * 1024
    return int(cap) * 3 // 4


def _sublane_rows(itemsize):
    # f32 -> 8, bf16 -> 16, int8/fp8 -> 32 (sub-32-bit dtypes pack along sublanes).
    return max(8, 32 // max(1, itemsize))


def _pick_chunks(enc_len, sublane, max_chunks=4):
    """Number of sublane-aligned row chunks each graph window is split into."""
    for c in range(max_chunks, 1, -1):
        if enc_len % c == 0 and (enc_len // c) % sublane == 0:
            return c
    return 1


def _pick_group(batch, slab_bytes, vmem_budget, max_unroll=16):
    """Largest graphs-per-step G whose double-buffered output block fits the
    VMEM budget, while keeping enough grid steps for megacore (v7x) and
    bounding the in-kernel unroll."""
    max_by_vmem = max(1, vmem_budget // (2 * slab_bytes))
    if batch >= 8:
        min_steps = 4          # plenty of independent steps for 2 TCs
    elif batch >= 2:
        min_steps = 2
    else:
        min_steps = 1
    max_by_grid = max(1, batch // min_steps)
    return int(max(1, min(max_by_vmem, max_by_grid, batch, max_unroll)))


def mk_hidden(feats, offsets, counts, *, enc_len, d_model,
              feats_has_slack=False, offsets_multiple_of=None,
              mask_dtype=jnp.int32):
    """Pallas implementation of MkHidden.forward.

    feats   : [node_rows, d_model]  concatenated node features.
    offsets : [B] int32   start row of each graph in `feats`.
    counts  : [B] int32   nodes per graph; counts[i] <= enc_len
              (counts[i] > enc_len is clamped, where PyTorch would raise).
    feats_has_slack : if False (default), `feats` is padded in-wrapper so the
              chunked fetch windows can never read out of bounds.  Pass True
              when the node-feature storage already has sublane-aligned
              per-graph blocks (zero-copy fast path).
    offsets_multiple_of : declare that every offset is a multiple of this
              (sublane tile) -> full-rate, tile-aligned DMA reads.
    mask_dtype : dtype of the attention mask (int32 default; use int8/bool to
              cut its HBM traffic if the consumer allows).

    Returns (hidden_states [B, enc_len, d_model], attention_mask [B, enc_len]).
    """
    B = int(counts.shape[0])
    assert feats.shape[1] == d_model
    offsets = jnp.asarray(offsets, jnp.int32)
    counts = jnp.asarray(counts, jnp.int32)

    itemsize = jnp.dtype(feats.dtype).itemsize
    sublane = _sublane_rows(itemsize)
    num_chunks = _pick_chunks(enc_len, sublane)
    chunk_rows = enc_len // num_chunks

    if not feats_has_slack:
        # A fetch window never extends more than chunk_rows-1 rows past a
        # graph's last node, so chunk_rows slack rows make every DMA in-bounds.
        feats = jnp.pad(feats, ((0, chunk_rows), (0, 0)))

    slab_bytes = enc_len * d_model * itemsize
    vmem_budget = _vmem_budget_bytes()
    G = _pick_group(B, slab_bytes, vmem_budget)
    steps = -(-B // G)                       # cdiv: no divisibility requirement
    padded_B = steps * G
    if padded_B != B:                        # keep SMEM prefetch reads in bounds
        pad = padded_B - B
        offsets = jnp.pad(offsets, (0, pad))
        counts = jnp.pad(counts, (0, pad))

    kernel = functools.partial(
        _mk_hidden_kernel, enc_len, d_model, G, num_chunks, chunk_rows, B,
        offsets_multiple_of)

    grid_spec = pltpu.PrefetchScalarGridSpec(
        num_scalar_prefetch=2,                        # offsets, counts -> SMEM
        grid=(steps,),
        in_specs=[pl.BlockSpec(memory_space=pl.ANY)],  # feats stay in HBM
        out_specs=pl.BlockSpec((G, enc_len, d_model),
                               lambda t, off, cnt: (t, 0, 0)),
        scratch_shapes=[pltpu.SemaphoreType.DMA((G, num_chunks))],
    )

    hid = pl.pallas_call(
        kernel,
        out_shape=jax.ShapeDtypeStruct((B, enc_len, d_model), feats.dtype),
        grid_spec=grid_spec,
        compiler_params=pltpu.CompilerParams(
            dimension_semantics=("parallel",),        # steps are independent
            vmem_limit_bytes=int(vmem_budget)),
    )(offsets, counts, feats)

    # Attention mask: tiny [B, enc_len] compare; cheaper as plain JAX than as a
    # 1-sublane masked-store output pipeline inside the kernel.
    mask = (jnp.arange(enc_len, dtype=jnp.int32)[None, :]
            < counts[:B, None]).astype(mask_dtype)
    return hid, mask


if __name__ == "__main__":
    # Synthetic "batched graph": 16 graphs, enc_len=32, d_model=128 (lane-dense).
    B = 16
    ENC_LEN = 32
    D_MODEL = 128
    ALIGN = 8   # f32 sublane tile: graph start offsets kept tile-aligned

    counts = jnp.array([11, 5, 32, 0, 3, 8, 1, 32, 7, 2, 13, 32, 0, 9, 24, 6],
                       dtype=jnp.int32)
    # Tile-aligned node-feature storage: each graph occupies ceil(n/8)*8 rows,
    # so offsets are multiples of 8 and the chunked fetch windows stay within
    # the storage -> zero-copy path (feats_has_slack=True).
    aligned = ((counts + ALIGN - 1) // ALIGN) * ALIGN
    offsets = (jnp.cumsum(aligned) - aligned).astype(jnp.int32)
    total_rows = int(aligned.sum())

    key = jax.random.PRNGKey(0)
    storage = jax.random.normal(key, (total_rows, D_MODEL), dtype=jnp.float32)

    hid, mask = mk_hidden(storage, offsets, counts,
                          enc_len=ENC_LEN, d_model=D_MODEL,
                          feats_has_slack=True, offsets_multiple_of=ALIGN)
    hid = jax.block_until_ready(hid)
    mask = jax.block_until_ready(mask)

    # Pure-JAX reference (mirrors the PyTorch loop).
    ref_hid = jnp.zeros((B, ENC_LEN, D_MODEL), jnp.float32)
    ref_mask = jnp.zeros((B, ENC_LEN), jnp.int32)
    for i in range(B):
        n = int(counts[i])
        o = int(offsets[i])
        ref_hid = ref_hid.at[i, :n, :].set(storage[o:o + n, :])
        ref_mask = ref_mask.at[i, :n].set(1)

    assert jnp.allclose(hid, ref_hid), "hidden states mismatch"
    assert jnp.array_equal(mask, ref_mask), "attention mask mismatch"
    print("KERNEL_OK")
</pallas_src>

<mosaic_0001>
module attributes {stable_mosaic.version = 11 : i64} {
  func.func @_mk_hidden_kernel(%arg0: i32, %arg1: memref<16xi32, #tpu.memory_space<smem>>, %arg2: memref<16xi32, #tpu.memory_space<smem>>, %arg3: memref<224x128xf32, #tpu.memory_space<any>>, %arg4: memref<4x32x128xf32, #tpu.memory_space<vmem>>, %arg5: memref<4x4x!tpu.dma_semaphore, #tpu.memory_space<semaphore_mem>>) attributes {dimension_semantics = [#tpu.dimension_semantics<parallel>], iteration_bounds = array<i64: 4>, scalar_prefetch = 2 : i64, scratch_operands = 1 : i64, tpu.core_type = #tpu.core_type<tc>, window_params = [{}, {transform_indices = @transform_1, window_bounds = array<i64: 4, 32, 128>}]} {
    %c4_i32 = arith.constant 4 : i32
    %0 = arith.muli %arg0, %c4_i32 : i32
    %c0_i32 = arith.constant 0 : i32
    %1 = arith.addi %0, %c0_i32 : i32
    %2 = arith.index_cast %1 : i32 to index
    %3 = memref.load %arg1[%2] : memref<16xi32, #tpu.memory_space<smem>>
    %4 = tpu.assume_multiple %3, 8 : i32
    %c0_i32_0 = arith.constant 0 : i32
    %5 = arith.addi %0, %c0_i32_0 : i32
    %6 = arith.index_cast %5 : i32 to index
    %7 = memref.load %arg2[%6] : memref<16xi32, #tpu.memory_space<smem>>
    %c0_i32_1 = arith.constant 0 : i32
    %8 = arith.addi %0, %c0_i32_1 : i32
    %c16_i32 = arith.constant 16 : i32
    %9 = arith.cmpi slt, %8, %c16_i32 : i32
    %c1_i32 = arith.constant 1 : i32
    %10 = arith.addi %0, %c1_i32 : i32
    %11 = arith.index_cast %10 : i32 to index
    %12 = memref.load %arg1[%11] : memref<16xi32, #tpu.memory_space<smem>>
    %13 = tpu.assume_multiple %12, 8 : i32
    %c1_i32_2 = arith.constant 1 : i32
    %14 = arith.addi %0, %c1_i32_2 : i32
    %15 = arith.index_cast %14 : i32 to index
    %16 = memref.load %arg2[%15] : memref<16xi32, #tpu.memory_space<smem>>
    %c1_i32_3 = arith.constant 1 : i32
    %17 = arith.addi %0, %c1_i32_3 : i32
    %c16_i32_4 = arith.constant 16 : i32
    %18 = arith.cmpi slt, %17, %c16_i32_4 : i32
    %c2_i32 = arith.constant 2 : i32
    %19 = arith.addi %0, %c2_i32 : i32
    %20 = arith.index_cast %19 : i32 to index
    %21 = memref.load %arg1[%20] : memref<16xi32, #tpu.memory_space<smem>>
    %22 = tpu.assume_multiple %21, 8 : i32
    %c2_i32_5 = arith.constant 2 : i32
    %23 = arith.addi %0, %c2_i32_5 : i32
    %24 = arith.index_cast %23 : i32 to index
    %25 = memref.load %arg2[%24] : memref<16xi32, #tpu.memory_space<smem>>
    %c2_i32_6 = arith.constant 2 : i32
    %26 = arith.addi %0, %c2_i32_6 : i32
    %c16_i32_7 = arith.constant 16 : i32
    %27 = arith.cmpi slt, %26, %c16_i32_7 : i32
    %c3_i32 = arith.constant 3 : i32
    %28 = arith.addi %0, %c3_i32 : i32
    %29 = arith.index_cast %28 : i32 to index
    %30 = memref.load %arg1[%29] : memref<16xi32, #tpu.memory_space<smem>>
    %31 = tpu.assume_multiple %30, 8 : i32
    %c3_i32_8 = arith.constant 3 : i32
    %32 = arith.addi %0, %c3_i32_8 : i32
    %33 = arith.index_cast %32 : i32 to index
    %34 = memref.load %arg2[%33] : memref<16xi32, #tpu.memory_space<smem>>
    %c3_i32_9 = arith.constant 3 : i32
    %35 = arith.addi %0, %c3_i32_9 : i32
    %c16_i32_10 = arith.constant 16 : i32
    %36 = arith.cmpi slt, %35, %c16_i32_10 : i32
    %c0_i32_11 = arith.constant 0 : i32
    %37 = arith.cmpi sgt, %7, %c0_i32_11 : i32
    %38 = arith.andi %9, %37 : i1
    %39 = arith.extui %38 : i1 to i32
    %c0_i32_12 = arith.constant 0 : i32
    %40 = arith.cmpi ne, %39, %c0_i32_12 : i32
    scf.if %40 {
      %c0_i32_152 = arith.constant 0 : i32
      %326 = arith.addi %4, %c0_i32_152 : i32
      %c0_i32_153 = arith.constant 0 : i32
      %c0_i32_154 = arith.constant 0 : i32
      %c0_i32_155 = arith.constant 0 : i32
      %c0_i32_156 = arith.constant 0 : i32
      %327 = tpu.memref_slice %arg3[%326, %c0_i32_156] : memref<224x128xf32, #tpu.memory_space<any>> -> memref<8x128xf32, #tpu.memory_space<any>>
      %c0_i32_157 = arith.constant 0 : i32
      %c0_i32_158 = arith.constant 0 : i32
      %328 = tpu.memref_slice %arg4[%c0_i32_153, %c0_i32_157, %c0_i32_158] : memref<4x32x128xf32, #tpu.memory_space<vmem>> -> memref<1x8x128xf32, #tpu.memory_space<vmem>>
      %329 = tpu.memref_squeeze %328 : memref<1x8x128xf32, #tpu.memory_space<vmem>> -> memref<8x128xf32, #tpu.memory_space<vmem>>
      %330 = tpu.memref_slice %arg5[%c0_i32_154, %c0_i32_155] : memref<4x4x!tpu.dma_semaphore, #tpu.memory_space<semaphore_mem>> -> memref<1x1x!tpu.dma_semaphore, #tpu.memory_space<semaphore_mem>>
      %331 = tpu.memref_squeeze %330 : memref<1x1x!tpu.dma_semaphore, #tpu.memory_space<semaphore_mem>> -> memref<!tpu.dma_semaphore, #tpu.memory_space<semaphore_mem>>
      tpu.enqueue_dma source(%327 : memref<8x128xf32, #tpu.memory_space<any>>) target(%329 : memref<8x128xf32, #tpu.memory_space<vmem>>) target_semaphore(%331 : memref<!tpu.dma_semaphore, #tpu.memory_space<semaphore_mem>>)
    } else {
    }
    %c8_i32 = arith.constant 8 : i32
    %41 = arith.cmpi sgt, %7, %c8_i32 : i32
    %42 = arith.andi %9, %41 : i1
    %43 = arith.extui %42 : i1 to i32
    %c0_i32_13 = arith.constant 0 : i32
    %44 = arith.cmpi ne, %43, %c0_i32_13 : i32
    scf.if %44 {
      %c8_i32_152 = arith.constant 8 : i32
      %326 = arith.addi %4, %c8_i32_152 : i32
      %c0_i32_153 = arith.constant 0 : i32
      %c0_i32_154 = arith.constant 0 : i32
      %c1_i32_155 = arith.constant 1 : i32
      %c0_i32_156 = arith.constant 0 : i32
      %327 = tpu.memref_slice %arg3[%326, %c0_i32_156] : memref<224x128xf32, #tpu.memory_space<any>> -> memref<8x128xf32, #tpu.memory_space<any>>
      %c8_i32_157 = arith.constant 8 : i32
      %c0_i32_158 = arith.constant 0 : i32
      %328 = tpu.memref_slice %arg4[%c0_i32_153, %c8_i32_157, %c0_i32_158] : memref<4x32x128xf32, #tpu.memory_space<vmem>> -> memref<1x8x128xf32, #tpu.memory_space<vmem>>
      %329 = tpu.memref_squeeze %328 : memref<1x8x128xf32, #tpu.memory_space<vmem>> -> memref<8x128xf32, #tpu.memory_space<vmem>>
      %330 = tpu.memref_slice %arg5[%c0_i32_154, %c1_i32_155] : memref<4x4x!tpu.dma_semaphore, #tpu.memory_space<semaphore_mem>> -> memref<1x1x!tpu.dma_semaphore, #tpu.memory_space<semaphore_mem>>
      %331 = tpu.memref_squeeze %330 : memref<1x1x!tpu.dma_semaphore, #tpu.memory_space<semaphore_mem>> -> memref<!tpu.dma_semaphore, #tpu.memory_space<semaphore_mem>>
      tpu.enqueue_dma source(%327 : memref<8x128xf32, #tpu.memory_space<any>>) target(%329 : memref<8x128xf32, #tpu.memory_space<vmem>>) target_semaphore(%331 : memref<!tpu.dma_semaphore, #tpu.memory_space<semaphore_mem>>)
    } else {
    }
    %c16_i32_14 = arith.constant 16 : i32
    %45 = arith.cmpi sgt, %7, %c16_i32_14 : i32
    %46 = arith.andi %9, %45 : i1
    %47 = arith.extui %46 : i1 to i32
    %c0_i32_15 = arith.constant 0 : i32
    %48 = arith.cmpi ne, %47, %c0_i32_15 : i32
    scf.if %48 {
      %c16_i32_152 = arith.constant 16 : i32
      %326 = arith.addi %4, %c16_i32_152 : i32
      %c0_i32_153 = arith.constant 0 : i32
      %c0_i32_154 = arith.constant 0 : i32
      %c2_i32_155 = arith.constant 2 : i32
      %c0_i32_156 = arith.constant 0 : i32
      %327 = tpu.memref_slice %arg3[%326, %c0_i32_156] : memref<224x128xf32, #tpu.memory_space<any>> -> memref<8x128xf32, #tpu.memory_space<any>>
      %c16_i32_157 = arith.constant 16 : i32
      %c0_i32_158 = arith.constant 0 : i32
      %328 = tpu.memref_slice %arg4[%c0_i32_153, %c16_i32_157, %c0_i32_158] : memref<4x32x128xf32, #tpu.memory_space<vmem>> -> memref<1x8x128xf32, #tpu.memory_space<vmem>>
      %329 = tpu.memref_squeeze %328 : memref<1x8x128xf32, #tpu.memory_space<vmem>> -> memref<8x128xf32, #tpu.memory_space<vmem>>
      %330 = tpu.memref_slice %arg5[%c0_i32_154, %c2_i32_155] : memref<4x4x!tpu.dma_semaphore, #tpu.memory_space<semaphore_mem>> -> memref<1x1x!tpu.dma_semaphore, #tpu.memory_space<semaphore_mem>>
      %331 = tpu.memref_squeeze %330 : memref<1x1x!tpu.dma_semaphore, #tpu.memory_space<semaphore_mem>> -> memref<!tpu.dma_semaphore, #tpu.memory_space<semaphore_mem>>
      tpu.enqueue_dma source(%327 : memref<8x128xf32, #tpu.memory_space<any>>) target(%329 : memref<8x128xf32, #tpu.memory_space<vmem>>) target_semaphore(%331 : memref<!tpu.dma_semaphore, #tpu.memory_space<semaphore_mem>>)
    } else {
    }
    %c24_i32 = arith.constant 24 : i32
    %49 = arith.cmpi sgt, %7, %c24_i32 : i32
    %50 = arith.andi %9, %49 : i1
    %51 = arith.extui %50 : i1 to i32
    %c0_i32_16 = arith.constant 0 : i32
    %52 = arith.cmpi ne, %51, %c0_i32_16 : i32
    scf.if %52 {
      %c24_i32_152 = arith.constant 24 : i32
      %326 = arith.addi %4, %c24_i32_152 : i32
      %c0_i32_153 = arith.constant 0 : i32
      %c0_i32_154 = arith.constant 0 : i32
      %c3_i32_155 = arith.constant 3 : i32
      %c0_i32_156 = arith.constant 0 : i32
      %327 = tpu.memref_slice %arg3[%326, %c0_i32_156] : memref<224x128xf32, #tpu.memory_space<any>> -> memref<8x128xf32, #tpu.memory_space<any>>
      %c24_i32_157 = arith.constant 24 : i32
      %c0_i32_158 = arith.constant 0 : i32
      %328 = tpu.memref_slice %arg4[%c0_i32_153, %c24_i32_157, %c0_i32_158] : memref<4x32x128xf32, #tpu.memory_space<vmem>> -> memref<1x8x128xf32, #tpu.memory_space<vmem>>
      %329 = tpu.memref_squeeze %328 : memref<1x8x128xf32, #tpu.memory_space<vmem>> -> memref<8x128xf32, #tpu.memory_space<vmem>>
      %330 = tpu.memref_slice %arg5[%c0_i32_154, %c3_i32_155] : memref<4x4x!tpu.dma_semaphore, #tpu.memory_space<semaphore_mem>> -> memref<1x1x!tpu.dma_semaphore, #tpu.memory_space<semaphore_mem>>
      %331 = tpu.memref_squeeze %330 : memref<1x1x!tpu.dma_semaphore, #tpu.memory_space<semaphore_mem>> -> memref<!tpu.dma_semaphore, #tpu.memory_space<semaphore_mem>>
      tpu.enqueue_dma source(%327 : memref<8x128xf32, #tpu.memory_space<any>>) target(%329 : memref<8x128xf32, #tpu.memory_space<vmem>>) target_semaphore(%331 : memref<!tpu.dma_semaphore, #tpu.memory_space<semaphore_mem>>)
    } else {
    }
    %c0_i32_17 = arith.constant 0 : i32
    %53 = arith.cmpi sgt, %16, %c0_i32_17 : i32
    %54 = arith.andi %18, %53 : i1
    %55 = arith.extui %54 : i1 to i32
    %c0_i32_18 = arith.constant 0 : i32
    %56 = arith.cmpi ne, %55, %c0_i32_18 : i32
    scf.if %56 {
      %c0_i32_152 = arith.constant 0 : i32
      %326 = arith.addi %13, %c0_i32_152 : i32
      %c1_i32_153 = arith.constant 1 : i32
      %c1_i32_154 = arith.constant 1 : i32
      %c0_i32_155 = arith.constant 0 : i32
      %c0_i32_156 = arith.constant 0 : i32
      %327 = tpu.memref_slice %arg3[%326, %c0_i32_156] : memref<224x128xf32, #tpu.memory_space<any>> -> memref<8x128xf32, #tpu.memory_space<any>>
      %c0_i32_157 = arith.constant 0 : i32
      %c0_i32_158 = arith.constant 0 : i32
      %328 = tpu.memref_slice %arg4[%c1_i32_153, %c0_i32_157, %c0_i32_158] : memref<4x32x128xf32, #tpu.memory_space<vmem>> -> memref<1x8x128xf32, #tpu.memory_space<vmem>>
      %329 = tpu.memref_squeeze %328 : memref<1x8x128xf32, #tpu.memory_space<vmem>> -> memref<8x128xf32, #tpu.memory_space<vmem>>
      %330 = tpu.memref_slice %arg5[%c1_i32_154, %c0_i32_155] : memref<4x4x!tpu.dma_semaphore, #tpu.memory_space<semaphore_mem>> -> memref<1x1x!tpu.dma_semaphore, #tpu.memory_space<semaphore_mem>>
      %331 = tpu.memref_squeeze %330 : memref<1x1x!tpu.dma_semaphore, #tpu.memory_space<semaphore_mem>> -> memref<!tpu.dma_semaphore, #tpu.memory_space<semaphore_mem>>
      tpu.enqueue_dma source(%327 : memref<8x128xf32, #tpu.memory_space<any>>) target(%329 : memref<8x128xf32, #tpu.memory_space<vmem>>) target_semaphore(%331 : memref<!tpu.dma_semaphore, #tpu.memory_space<semaphore_mem>>)
    } else {
    }
    %c8_i32_19 = arith.constant 8 : i32
    %57 = arith.cmpi sgt, %16, %c8_i32_19 : i32
    %58 = arith.andi %18, %57 : i1
    %59 = arith.extui %58 : i1 to i32
    %c0_i32_20 = arith.constant 0 : i32
    %60 = arith.cmpi ne, %59, %c0_i32_20 : i32
    scf.if %60 {
      %c8_i32_152 = arith.constant 8 : i32
      %326 = arith.addi %13, %c8_i32_152 : i32
      %c1_i32_153 = arith.constant 1 : i32
      %c1_i32_154 = arith.constant 1 : i32
      %c1_i32_155 = arith.constant 1 : i32
      %c0_i32_156 = arith.constant 0 : i32
      %327 = tpu.memref_slice %arg3[%326, %c0_i32_156] : memref<224x128xf32, #tpu.memory_space<any>> -> memref<8x128xf32, #tpu.memory_space<any>>
      %c8_i32_157 = arith.constant 8 : i32
      %c0_i32_158 = arith.constant 0 : i32
      %328 = tpu.memref_slice %arg4[%c1_i32_153, %c8_i32_157, %c0_i32_158] : memref<4x32x128xf32, #tpu.memory_space<vmem>> -> memref<1x8x128xf32, #tpu.memory_space<vmem>>
      %329 = tpu.memref_squeeze %328 : memref<1x8x128xf32, #tpu.memory_space<vmem>> -> memref<8x128xf32, #tpu.memory_space<vmem>>
      %330 = tpu.memref_slice %arg5[%c1_i32_154, %c1_i32_155] : memref<4x4x!tpu.dma_semaphore, #tpu.memory_space<semaphore_mem>> -> memref<1x1x!tpu.dma_semaphore, #tpu.memory_space<semaphore_mem>>
      %331 = tpu.memref_squeeze %330 : memref<1x1x!tpu.dma_semaphore, #tpu.memory_space<semaphore_mem>> -> memref<!tpu.dma_semaphore, #tpu.memory_space<semaphore_mem>>
      tpu.enqueue_dma source(%327 : memref<8x128xf32, #tpu.memory_space<any>>) target(%329 : memref<8x128xf32, #tpu.memory_space<vmem>>) target_semaphore(%331 : memref<!tpu.dma_semaphore, #tpu.memory_space<semaphore_mem>>)
    } else {
    }
    %c16_i32_21 = arith.constant 16 : i32
    %61 = arith.cmpi sgt, %16, %c16_i32_21 : i32
    %62 = arith.andi %18, %61 : i1
    %63 = arith.extui %62 : i1 to i32
    %c0_i32_22 = arith.constant 0 : i32
    %64 = arith.cmpi ne, %63, %c0_i32_22 : i32
    scf.if %64 {
      %c16_i32_152 = arith.constant 16 : i32
      %326 = arith.addi %13, %c16_i32_152 : i32
      %c1_i32_153 = arith.constant 1 : i32
      %c1_i32_154 = arith.constant 1 : i32
      %c2_i32_155 = arith.constant 2 : i32
      %c0_i32_156 = arith.constant 0 : i32
      %327 = tpu.memref_slice %arg3[%326, %c0_i32_156] : memref<224x128xf32, #tpu.memory_space<any>> -> memref<8x128xf32, #tpu.memory_space<any>>
      %c16_i32_157 = arith.constant 16 : i32
      %c0_i32_158 = arith.constant 0 : i32
      %328 = tpu.memref_slice %arg4[%c1_i32_153, %c16_i32_157, %c0_i32_158] : memref<4x32x128xf32, #tpu.memory_space<vmem>> -> memref<1x8x128xf32, #tpu.memory_space<vmem>>
      %329 = tpu.memref_squeeze %328 : memref<1x8x128xf32, #tpu.memory_space<vmem>> -> memref<8x128xf32, #tpu.memory_space<vmem>>
      %330 = tpu.memref_slice %arg5[%c1_i32_154, %c2_i32_155] : memref<4x4x!tpu.dma_semaphore, #tpu.memory_space<semaphore_mem>> -> memref<1x1x!tpu.dma_semaphore, #tpu.memory_space<semaphore_mem>>
      %331 = tpu.memref_squeeze %330 : memref<1x1x!tpu.dma_semaphore, #tpu.memory_space<semaphore_mem>> -> memref<!tpu.dma_semaphore, #tpu.memory_space<semaphore_mem>>
      tpu.enqueue_dma source(%327 : memref<8x128xf32, #tpu.memory_space<any>>) target(%329 : memref<8x128xf32, #tpu.memory_space<vmem>>) target_semaphore(%331 : memref<!tpu.dma_semaphore, #tpu.memory_space<semaphore_mem>>)
    } else {
    }
    %c24_i32_23 = arith.constant 24 : i32
    %65 = arith.cmpi sgt, %16, %c24_i32_23 : i32
    %66 = arith.andi %18, %65 : i1
    %67 = arith.extui %66 : i1 to i32
    %c0_i32_24 = arith.constant 0 : i32
    %68 = arith.cmpi ne, %67, %c0_i32_24 : i32
    scf.if %68 {
      %c24_i32_152 = arith.constant 24 : i32
      %326 = arith.addi %13, %c24_i32_152 : i32
      %c1_i32_153 = arith.constant 1 : i32
      %c1_i32_154 = arith.constant 1 : i32
      %c3_i32_155 = arith.constant 3 : i32
      %c0_i32_156 = arith.constant 0 : i32
      %327 = tpu.memref_slice %arg3[%326, %c0_i32_156] : memref<224x128xf32, #tpu.memory_space<any>> -> memref<8x128xf32, #tpu.memory_space<any>>
      %c24_i32_157 = arith.constant 24 : i32
      %c0_i32_158 = arith.constant 0 : i32
      %328 = tpu.memref_slice %arg4[%c1_i32_153, %c24_i32_157, %c0_i32_158] : memref<4x32x128xf32, #tpu.memory_space<vmem>> -> memref<1x8x128xf32, #tpu.memory_space<vmem>>
      %329 = tpu.memref_squeeze %328 : memref<1x8x128xf32, #tpu.memory_space<vmem>> -> memref<8x128xf32, #tpu.memory_space<vmem>>
      %330 = tpu.memref_slice %arg5[%c1_i32_154, %c3_i32_155] : memref<4x4x!tpu.dma_semaphore, #tpu.memory_space<semaphore_mem>> -> memref<1x1x!tpu.dma_semaphore, #tpu.memory_space<semaphore_mem>>
      %331 = tpu.memref_squeeze %330 : memref<1x1x!tpu.dma_semaphore, #tpu.memory_space<semaphore_mem>> -> memref<!tpu.dma_semaphore, #tpu.memory_space<semaphore_mem>>
      tpu.enqueue_dma source(%327 : memref<8x128xf32, #tpu.memory_space<any>>) target(%329 : memref<8x128xf32, #tpu.memory_space<vmem>>) target_semaphore(%331 : memref<!tpu.dma_semaphore, #tpu.memory_space<semaphore_mem>>)
    } else {
    }
    %c0_i32_25 = arith.constant 0 : i32
    %69 = arith.cmpi sgt, %25, %c0_i32_25 : i32
    %70 = arith.andi %27, %69 : i1
    %71 = arith.extui %70 : i1 to i32
    %c0_i32_26 = arith.constant 0 : i32
    %72 = arith.cmpi ne, %71, %c0_i32_26 : i32
    scf.if %72 {
      %c0_i32_152 = arith.constant 0 : i32
      %326 = arith.addi %22, %c0_i32_152 : i32
      %c2_i32_153 = arith.constant 2 : i32
      %c2_i32_154 = arith.constant 2 : i32
      %c0_i32_155 = arith.constant 0 : i32
      %c0_i32_156 = arith.constant 0 : i32
      %327 = tpu.memref_slice %arg3[%326, %c0_i32_156] : memref<224x128xf32, #tpu.memory_space<any>> -> memref<8x128xf32, #tpu.memory_space<any>>
      %c0_i32_157 = arith.constant 0 : i32
      %c0_i32_158 = arith.constant 0 : i32
      %328 = tpu.memref_slice %arg4[%c2_i32_153, %c0_i32_157, %c0_i32_158] : memref<4x32x128xf32, #tpu.memory_space<vmem>> -> memref<1x8x128xf32, #tpu.memory_space<vmem>>
      %329 = tpu.memref_squeeze %328 : memref<1x8x128xf32, #tpu.memory_space<vmem>> -> memref<8x128xf32, #tpu.memory_space<vmem>>
      %330 = tpu.memref_slice %arg5[%c2_i32_154, %c0_i32_155] : memref<4x4x!tpu.dma_semaphore, #tpu.memory_space<semaphore_mem>> -> memref<1x1x!tpu.dma_semaphore, #tpu.memory_space<semaphore_mem>>
      %331 = tpu.memref_squeeze %330 : memref<1x1x!tpu.dma_semaphore, #tpu.memory_space<semaphore_mem>> -> memref<!tpu.dma_semaphore, #tpu.memory_space<semaphore_mem>>
      tpu.enqueue_dma source(%327 : memref<8x128xf32, #tpu.memory_space<any>>) target(%329 : memref<8x128xf32, #tpu.memory_space<vmem>>) target_semaphore(%331 : memref<!tpu.dma_semaphore, #tpu.memory_space<semaphore_mem>>)
    } else {
    }
    %c8_i32_27 = arith.constant 8 : i32
    %73 = arith.cmpi sgt, %25, %c8_i32_27 : i32
    %74 = arith.andi %27, %73 : i1
    %75 = arith.extui %74 : i1 to i32
    %c0_i32_28 = arith.constant 0 : i32
    %76 = arith.cmpi ne, %75, %c0_i32_28 : i32
    scf.if %76 {
      %c8_i32_152 = arith.constant 8 : i32
      %326 = arith.addi %22, %c8_i32_152 : i32
      %c2_i32_153 = arith.constant 2 : i32
      %c2_i32_154 = arith.constant 2 : i32
      %c1_i32_155 = arith.constant 1 : i32
      %c0_i32_156 = arith.constant 0 : i32
      %327 = tpu.memref_slice %arg3[%326, %c0_i32_156] : memref<224x128xf32, #tpu.memory_space<any>> -> memref<8x128xf32, #tpu.memory_space<any>>
      %c8_i32_157 = arith.constant 8 : i32
      %c0_i32_158 = arith.constant 0 : i32
      %328 = tpu.memref_slice %arg4[%c2_i32_153, %c8_i32_157, %c0_i32_158] : memref<4x32x128xf32, #tpu.memory_space<vmem>> -> memref<1x8x128xf32, #tpu.memory_space<vmem>>
      %329 = tpu.memref_squeeze %328 : memref<1x8x128xf32, #tpu.memory_space<vmem>> -> memref<8x128xf32, #tpu.memory_space<vmem>>
      %330 = tpu.memref_slice %arg5[%c2_i32_154, %c1_i32_155] : memref<4x4x!tpu.dma_semaphore, #tpu.memory_space<semaphore_mem>> -> memref<1x1x!tpu.dma_semaphore, #tpu.memory_space<semaphore_mem>>
      %331 = tpu.memref_squeeze %330 : memref<1x1x!tpu.dma_semaphore, #tpu.memory_space<semaphore_mem>> -> memref<!tpu.dma_semaphore, #tpu.memory_space<semaphore_mem>>
      tpu.enqueue_dma source(%327 : memref<8x128xf32, #tpu.memory_space<any>>) target(%329 : memref<8x128xf32, #tpu.memory_space<vmem>>) target_semaphore(%331 : memref<!tpu.dma_semaphore, #tpu.memory_space<semaphore_mem>>)
    } else {
    }
    %c16_i32_29 = arith.constant 16 : i32
    %77 = arith.cmpi sgt, %25, %c16_i32_29 : i32
    %78 = arith.andi %27, %77 : i1
    %79 = arith.extui %78 : i1 to i32
    %c0_i32_30 = arith.constant 0 : i32
    %80 = arith.cmpi ne, %79, %c0_i32_30 : i32
    scf.if %80 {
      %c16_i32_152 = arith.constant 16 : i32
      %326 = arith.addi %22, %c16_i32_152 : i32
      %c2_i32_153 = arith.constant 2 : i32
      %c2_i32_154 = arith.constant 2 : i32
      %c2_i32_155 = arith.constant 2 : i32
      %c0_i32_156 = arith.constant 0 : i32
      %327 = tpu.memref_slice %arg3[%326, %c0_i32_156] : memref<224x128xf32, #tpu.memory_space<any>> -> memref<8x128xf32, #tpu.memory_space<any>>
      %c16_i32_157 = arith.constant 16 : i32
      %c0_i32_158 = arith.constant 0 : i32
      %328 = tpu.memref_slice %arg4[%c2_i32_153, %c16_i32_157, %c0_i32_158] : memref<4x32x128xf32, #tpu.memory_space<vmem>> -> memref<1x8x128xf32, #tpu.memory_space<vmem>>
      %329 = tpu.memref_squeeze %328 : memref<1x8x128xf32, #tpu.memory_space<vmem>> -> memref<8x128xf32, #tpu.memory_space<vmem>>
      %330 = tpu.memref_slice %arg5[%c2_i32_154, %c2_i32_155] : memref<4x4x!tpu.dma_semaphore, #tpu.memory_space<semaphore_mem>> -> memref<1x1x!tpu.dma_semaphore, #tpu.memory_space<semaphore_mem>>
      %331 = tpu.memref_squeeze %330 : memref<1x1x!tpu.dma_semaphore, #tpu.memory_space<semaphore_mem>> -> memref<!tpu.dma_semaphore, #tpu.memory_space<semaphore_mem>>
      tpu.enqueue_dma source(%327 : memref<8x128xf32, #tpu.memory_space<any>>) target(%329 : memref<8x128xf32, #tpu.memory_space<vmem>>) target_semaphore(%331 : memref<!tpu.dma_semaphore, #tpu.memory_space<semaphore_mem>>)
    } else {
    }
    %c24_i32_31 = arith.constant 24 : i32
    %81 = arith.cmpi sgt, %25, %c24_i32_31 : i32
    %82 = arith.andi %27, %81 : i1
    %83 = arith.extui %82 : i1 to i32
    %c0_i32_32 = arith.constant 0 : i32
    %84 = arith.cmpi ne, %83, %c0_i32_32 : i32
    scf.if %84 {
      %c24_i32_152 = arith.constant 24 : i32
      %326 = arith.addi %22, %c24_i32_152 : i32
      %c2_i32_153 = arith.constant 2 : i32
      %c2_i32_154 = arith.constant 2 : i32
      %c3_i32_155 = arith.constant 3 : i32
      %c0_i32_156 = arith.constant 0 : i32
      %327 = tpu.memref_slice %arg3[%326, %c0_i32_156] : memref<224x128xf32, #tpu.memory_space<any>> -> memref<8x128xf32, #tpu.memory_space<any>>
      %c24_i32_157 = arith.constant 24 : i32
      %c0_i32_158 = arith.constant 0 : i32
      %328 = tpu.memref_slice %arg4[%c2_i32_153, %c24_i32_157, %c0_i32_158] : memref<4x32x128xf32, #tpu.memory_space<vmem>> -> memref<1x8x128xf32, #tpu.memory_space<vmem>>
      %329 = tpu.memref_squeeze %328 : memref<1x8x128xf32, #tpu.memory_space<vmem>> -> memref<8x128xf32, #tpu.memory_space<vmem>>
      %330 = tpu.memref_slice %arg5[%c2_i32_154, %c3_i32_155] : memref<4x4x!tpu.dma_semaphore, #tpu.memory_space<semaphore_mem>> -> memref<1x1x!tpu.dma_semaphore, #tpu.memory_space<semaphore_mem>>
      %331 = tpu.memref_squeeze %330 : memref<1x1x!tpu.dma_semaphore, #tpu.memory_space<semaphore_mem>> -> memref<!tpu.dma_semaphore, #tpu.memory_space<semaphore_mem>>
      tpu.enqueue_dma source(%327 : memref<8x128xf32, #tpu.memory_space<any>>) target(%329 : memref<8x128xf32, #tpu.memory_space<vmem>>) target_semaphore(%331 : memref<!tpu.dma_semaphore, #tpu.memory_space<semaphore_mem>>)
    } else {
    }
    %c0_i32_33 = arith.constant 0 : i32
    %85 = arith.cmpi sgt, %34, %c0_i32_33 : i32
    %86 = arith.andi %36, %85 : i1
    %87 = arith.extui %86 : i1 to i32
    %c0_i32_34 = arith.constant 0 : i32
    %88 = arith.cmpi ne, %87, %c0_i32_34 : i32
    scf.if %88 {
      %c0_i32_152 = arith.constant 0 : i32
      %326 = arith.addi %31, %c0_i32_152 : i32
      %c3_i32_153 = arith.constant 3 : i32
      %c3_i32_154 = arith.constant 3 : i32
      %c0_i32_155 = arith.constant 0 : i32
      %c0_i32_156 = arith.constant 0 : i32
      %327 = tpu.memref_slice %arg3[%326, %c0_i32_156] : memref<224x128xf32, #tpu.memory_space<any>> -> memref<8x128xf32, #tpu.memory_space<any>>
      %c0_i32_157 = arith.constant 0 : i32
      %c0_i32_158 = arith.constant 0 : i32
      %328 = tpu.memref_slice %arg4[%c3_i32_153, %c0_i32_157, %c0_i32_158] : memref<4x32x128xf32, #tpu.memory_space<vmem>> -> memref<1x8x128xf32, #tpu.memory_space<vmem>>
      %329 = tpu.memref_squeeze %328 : memref<1x8x128xf32, #tpu.memory_space<vmem>> -> memref<8x128xf32, #tpu.memory_space<vmem>>
      %330 = tpu.memref_slice %arg5[%c3_i32_154, %c0_i32_155] : memref<4x4x!tpu.dma_semaphore, #tpu.memory_space<semaphore_mem>> -> memref<1x1x!tpu.dma_semaphore, #tpu.memory_space<semaphore_mem>>
      %331 = tpu.memref_squeeze %330 : memref<1x1x!tpu.dma_semaphore, #tpu.memory_space<semaphore_mem>> -> memref<!tpu.dma_semaphore, #tpu.memory_space<semaphore_mem>>
      tpu.enqueue_dma source(%327 : memref<8x128xf32, #tpu.memory_space<any>>) target(%329 : memref<8x128xf32, #tpu.memory_space<vmem>>) target_semaphore(%331 : memref<!tpu.dma_semaphore, #tpu.memory_space<semaphore_mem>>)
    } else {
    }
    %c8_i32_35 = arith.constant 8 : i32
    %89 = arith.cmpi sgt, %34, %c8_i32_35 : i32
    %90 = arith.andi %36, %89 : i1
    %91 = arith.extui %90 : i1 to i32
    %c0_i32_36 = arith.constant 0 : i32
    %92 = arith.cmpi ne, %91, %c0_i32_36 : i32
    scf.if %92 {
      %c8_i32_152 = arith.constant 8 : i32
      %326 = arith.addi %31, %c8_i32_152 : i32
      %c3_i32_153 = arith.constant 3 : i32
      %c3_i32_154 = arith.constant 3 : i32
      %c1_i32_155 = arith.constant 1 : i32
      %c0_i32_156 = arith.constant 0 : i32
      %327 = tpu.memref_slice %arg3[%326, %c0_i32_156] : memref<224x128xf32, #tpu.memory_space<any>> -> memref<8x128xf32, #tpu.memory_space<any>>
      %c8_i32_157 = arith.constant 8 : i32
      %c0_i32_158 = arith.constant 0 : i32
      %328 = tpu.memref_slice %arg4[%c3_i32_153, %c8_i32_157, %c0_i32_158] : memref<4x32x128xf32, #tpu.memory_space<vmem>> -> memref<1x8x128xf32, #tpu.memory_space<vmem>>
      %329 = tpu.memref_squeeze %328 : memref<1x8x128xf32, #tpu.memory_space<vmem>> -> memref<8x128xf32, #tpu.memory_space<vmem>>
      %330 = tpu.memref_slice %arg5[%c3_i32_154, %c1_i32_155] : memref<4x4x!tpu.dma_semaphore, #tpu.memory_space<semaphore_mem>> -> memref<1x1x!tpu.dma_semaphore, #tpu.memory_space<semaphore_mem>>
      %331 = tpu.memref_squeeze %330 : memref<1x1x!tpu.dma_semaphore, #tpu.memory_space<semaphore_mem>> -> memref<!tpu.dma_semaphore, #tpu.memory_space<semaphore_mem>>
      tpu.enqueue_dma source(%327 : memref<8x128xf32, #tpu.memory_space<any>>) target(%329 : memref<8x128xf32, #tpu.memory_space<vmem>>) target_semaphore(%331 : memref<!tpu.dma_semaphore, #tpu.memory_space<semaphore_mem>>)
    } else {
    }
    %c16_i32_37 = arith.constant 16 : i32
    %93 = arith.cmpi sgt, %34, %c16_i32_37 : i32
    %94 = arith.andi %36, %93 : i1
    %95 = arith.extui %94 : i1 to i32
    %c0_i32_38 = arith.constant 0 : i32
    %96 = arith.cmpi ne, %95, %c0_i32_38 : i32
    scf.if %96 {
      %c16_i32_152 = arith.constant 16 : i32
      %326 = arith.addi %31, %c16_i32_152 : i32
      %c3_i32_153 = arith.constant 3 : i32
      %c3_i32_154 = arith.constant 3 : i32
      %c2_i32_155 = arith.constant 2 : i32
      %c0_i32_156 = arith.constant 0 : i32
      %327 = tpu.memref_slice %arg3[%326, %c0_i32_156] : memref<224x128xf32, #tpu.memory_space<any>> -> memref<8x128xf32, #tpu.memory_space<any>>
      %c16_i32_157 = arith.constant 16 : i32
      %c0_i32_158 = arith.constant 0 : i32
      %328 = tpu.memref_slice %arg4[%c3_i32_153, %c16_i32_157, %c0_i32_158] : memref<4x32x128xf32, #tpu.memory_space<vmem>> -> memref<1x8x128xf32, #tpu.memory_space<vmem>>
      %329 = tpu.memref_squeeze %328 : memref<1x8x128xf32, #tpu.memory_space<vmem>> -> memref<8x128xf32, #tpu.memory_space<vmem>>
      %330 = tpu.memref_slice %arg5[%c3_i32_154, %c2_i32_155] : memref<4x4x!tpu.dma_semaphore, #tpu.memory_space<semaphore_mem>> -> memref<1x1x!tpu.dma_semaphore, #tpu.memory_space<semaphore_mem>>
      %331 = tpu.memref_squeeze %330 : memref<1x1x!tpu.dma_semaphore, #tpu.memory_space<semaphore_mem>> -> memref<!tpu.dma_semaphore, #tpu.memory_space<semaphore_mem>>
      tpu.enqueue_dma source(%327 : memref<8x128xf32, #tpu.memory_space<any>>) target(%329 : memref<8x128xf32, #tpu.memory_space<vmem>>) target_semaphore(%331 : memref<!tpu.dma_semaphore, #tpu.memory_space<semaphore_mem>>)
    } else {
    }
    %c24_i32_39 = arith.constant 24 : i32
    %97 = arith.cmpi sgt, %34, %c24_i32_39 : i32
    %98 = arith.andi %36, %97 : i1
    %99 = arith.extui %98 : i1 to i32
    %c0_i32_40 = arith.constant 0 : i32
    %100 = arith.cmpi ne, %99, %c0_i32_40 : i32
    scf.if %100 {
      %c24_i32_152 = arith.constant 24 : i32
      %326 = arith.addi %31, %c24_i32_152 : i32
      %c3_i32_153 = arith.constant 3 : i32
      %c3_i32_154 = arith.constant 3 : i32
      %c3_i32_155 = arith.constant 3 : i32
      %c0_i32_156 = arith.constant 0 : i32
      %327 = tpu.memref_slice %arg3[%326, %c0_i32_156] : memref<224x128xf32, #tpu.memory_space<any>> -> memref<8x128xf32, #tpu.memory_space<any>>
      %c24_i32_157 = arith.constant 24 : i32
      %c0_i32_158 = arith.constant 0 : i32
      %328 = tpu.memref_slice %arg4[%c3_i32_153, %c24_i32_157, %c0_i32_158] : memref<4x32x128xf32, #tpu.memory_space<vmem>> -> memref<1x8x128xf32, #tpu.memory_space<vmem>>
      %329 = tpu.memref_squeeze %328 : memref<1x8x128xf32, #tpu.memory_space<vmem>> -> memref<8x128xf32, #tpu.memory_space<vmem>>
      %330 = tpu.memref_slice %arg5[%c3_i32_154, %c3_i32_155] : memref<4x4x!tpu.dma_semaphore, #tpu.memory_space<semaphore_mem>> -> memref<1x1x!tpu.dma_semaphore, #tpu.memory_space<semaphore_mem>>
      %331 = tpu.memref_squeeze %330 : memref<1x1x!tpu.dma_semaphore, #tpu.memory_space<semaphore_mem>> -> memref<!tpu.dma_semaphore, #tpu.memory_space<semaphore_mem>>
      tpu.enqueue_dma source(%327 : memref<8x128xf32, #tpu.memory_space<any>>) target(%329 : memref<8x128xf32, #tpu.memory_space<vmem>>) target_semaphore(%331 : memref<!tpu.dma_semaphore, #tpu.memory_space<semaphore_mem>>)
    } else {
    }
    %101 = tpu.iota {dimensions = array<i32: 0>} : vector<8x1xi32>
    %c0_i32_41 = arith.constant 0 : i32
    %102 = arith.cmpi sgt, %7, %c0_i32_41 : i32
    %103 = arith.andi %9, %102 : i1
    %104 = arith.extui %103 : i1 to i32
    %c0_i32_42 = arith.constant 0 : i32
    %105 = arith.cmpi ne, %104, %c0_i32_42 : i32
    scf.if %105 {
      %c0_i32_152 = arith.constant 0 : i32
      %326 = arith.addi %4, %c0_i32_152 : i32
      %c0_i32_153 = arith.constant 0 : i32
      %c0_i32_154 = arith.constant 0 : i32
      %c0_i32_155 = arith.constant 0 : i32
      %c0_i32_156 = arith.constant 0 : i32
      %327 = tpu.memref_slice %arg3[%326, %c0_i32_156] : memref<224x128xf32, #tpu.memory_space<any>> -> memref<8x128xf32, #tpu.memory_space<any>>
      %c0_i32_157 = arith.constant 0 : i32
      %c0_i32_158 = arith.constant 0 : i32
      %328 = tpu.memref_slice %arg4[%c0_i32_153, %c0_i32_157, %c0_i32_158] : memref<4x32x128xf32, #tpu.memory_space<vmem>> -> memref<1x8x128xf32, #tpu.memory_space<vmem>>
      %329 = tpu.memref_squeeze %328 : memref<1x8x128xf32, #tpu.memory_space<vmem>> -> memref<8x128xf32, #tpu.memory_space<vmem>>
      %330 = tpu.memref_slice %arg5[%c0_i32_154, %c0_i32_155] : memref<4x4x!tpu.dma_semaphore, #tpu.memory_space<semaphore_mem>> -> memref<1x1x!tpu.dma_semaphore, #tpu.memory_space<semaphore_mem>>
      %331 = tpu.memref_squeeze %330 : memref<1x1x!tpu.dma_semaphore, #tpu.memory_space<semaphore_mem>> -> memref<!tpu.dma_semaphore, #tpu.memory_space<semaphore_mem>>
      tpu.wait_dma2 semaphore(%331 : memref<!tpu.dma_semaphore, #tpu.memory_space<semaphore_mem>>) src(%327 : memref<8x128xf32, #tpu.memory_space<any>>) dst(%329 : memref<8x128xf32, #tpu.memory_space<vmem>>)
    } else {
    }
    %c8_i32_43 = arith.constant 8 : i32
    %106 = arith.cmpi sgt, %7, %c8_i32_43 : i32
    %107 = arith.andi %9, %106 : i1
    %108 = arith.extui %107 : i1 to i32
    %c0_i32_44 = arith.constant 0 : i32
    %109 = arith.cmpi ne, %108, %c0_i32_44 : i32
    scf.if %109 {
      %c8_i32_152 = arith.constant 8 : i32
      %326 = arith.addi %4, %c8_i32_152 : i32
      %c0_i32_153 = arith.constant 0 : i32
      %c0_i32_154 = arith.constant 0 : i32
      %c1_i32_155 = arith.constant 1 : i32
      %c0_i32_156 = arith.constant 0 : i32
      %327 = tpu.memref_slice %arg3[%326, %c0_i32_156] : memref<224x128xf32, #tpu.memory_space<any>> -> memref<8x128xf32, #tpu.memory_space<any>>
      %c8_i32_157 = arith.constant 8 : i32
      %c0_i32_158 = arith.constant 0 : i32
      %328 = tpu.memref_slice %arg4[%c0_i32_153, %c8_i32_157, %c0_i32_158] : memref<4x32x128xf32, #tpu.memory_space<vmem>> -> memref<1x8x128xf32, #tpu.memory_space<vmem>>
      %329 = tpu.memref_squeeze %328 : memref<1x8x128xf32, #tpu.memory_space<vmem>> -> memref<8x128xf32, #tpu.memory_space<vmem>>
      %330 = tpu.memref_slice %arg5[%c0_i32_154, %c1_i32_155] : memref<4x4x!tpu.dma_semaphore, #tpu.memory_space<semaphore_mem>> -> memref<1x1x!tpu.dma_semaphore, #tpu.memory_space<semaphore_mem>>
      %331 = tpu.memref_squeeze %330 : memref<1x1x!tpu.dma_semaphore, #tpu.memory_space<semaphore_mem>> -> memref<!tpu.dma_semaphore, #tpu.memory_space<semaphore_mem>>
      tpu.wait_dma2 semaphore(%331 : memref<!tpu.dma_semaphore, #tpu.memory_space<semaphore_mem>>) src(%327 : memref<8x128xf32, #tpu.memory_space<any>>) dst(%329 : memref<8x128xf32, #tpu.memory_space<vmem>>)
    } else {
    }
    %c16_i32_45 = arith.constant 16 : i32
    %110 = arith.cmpi sgt, %7, %c16_i32_45 : i32
    %111 = arith.andi %9, %110 : i1
    %112 = arith.extui %111 : i1 to i32
    %c0_i32_46 = arith.constant 0 : i32
    %113 = arith.cmpi ne, %112, %c0_i32_46 : i32
    scf.if %113 {
      %c16_i32_152 = arith.constant 16 : i32
      %326 = arith.addi %4, %c16_i32_152 : i32
      %c0_i32_153 = arith.constant 0 : i32
      %c0_i32_154 = arith.constant 0 : i32
      %c2_i32_155 = arith.constant 2 : i32
      %c0_i32_156 = arith.constant 0 : i32
      %327 = tpu.memref_slice %arg3[%326, %c0_i32_156] : memref<224x128xf32, #tpu.memory_space<any>> -> memref<8x128xf32, #tpu.memory_space<any>>
      %c16_i32_157 = arith.constant 16 : i32
      %c0_i32_158 = arith.constant 0 : i32
      %328 = tpu.memref_slice %arg4[%c0_i32_153, %c16_i32_157, %c0_i32_158] : memref<4x32x128xf32, #tpu.memory_space<vmem>> -> memref<1x8x128xf32, #tpu.memory_space<vmem>>
      %329 = tpu.memref_squeeze %328 : memref<1x8x128xf32, #tpu.memory_space<vmem>> -> memref<8x128xf32, #tpu.memory_space<vmem>>
      %330 = tpu.memref_slice %arg5[%c0_i32_154, %c2_i32_155] : memref<4x4x!tpu.dma_semaphore, #tpu.memory_space<semaphore_mem>> -> memref<1x1x!tpu.dma_semaphore, #tpu.memory_space<semaphore_mem>>
      %331 = tpu.memref_squeeze %330 : memref<1x1x!tpu.dma_semaphore, #tpu.memory_space<semaphore_mem>> -> memref<!tpu.dma_semaphore, #tpu.memory_space<semaphore_mem>>
      tpu.wait_dma2 semaphore(%331 : memref<!tpu.dma_semaphore, #tpu.memory_space<semaphore_mem>>) src(%327 : memref<8x128xf32, #tpu.memory_space<any>>) dst(%329 : memref<8x128xf32, #tpu.memory_space<vmem>>)
    } else {
    }
    %c24_i32_47 = arith.constant 24 : i32
    %114 = arith.cmpi sgt, %7, %c24_i32_47 : i32
    %115 = arith.andi %9, %114 : i1
    %116 = arith.extui %115 : i1 to i32
    %c0_i32_48 = arith.constant 0 : i32
    %117 = arith.cmpi ne, %116, %c0_i32_48 : i32
    scf.if %117 {
      %c24_i32_152 = arith.constant 24 : i32
      %326 = arith.addi %4, %c24_i32_152 : i32
      %c0_i32_153 = arith.constant 0 : i32
      %c0_i32_154 = arith.constant 0 : i32
      %c3_i32_155 = arith.constant 3 : i32
      %c0_i32_156 = arith.constant 0 : i32
      %327 = tpu.memref_slice %arg3[%326, %c0_i32_156] : memref<224x128xf32, #tpu.memory_space<any>> -> memref<8x128xf32, #tpu.memory_space<any>>
      %c24_i32_157 = arith.constant 24 : i32
      %c0_i32_158 = arith.constant 0 : i32
      %328 = tpu.memref_slice %arg4[%c0_i32_153, %c24_i32_157, %c0_i32_158] : memref<4x32x128xf32, #tpu.memory_space<vmem>> -> memref<1x8x128xf32, #tpu.memory_space<vmem>>
      %329 = tpu.memref_squeeze %328 : memref<1x8x128xf32, #tpu.memory_space<vmem>> -> memref<8x128xf32, #tpu.memory_space<vmem>>
      %330 = tpu.memref_slice %arg5[%c0_i32_154, %c3_i32_155] : memref<4x4x!tpu.dma_semaphore, #tpu.memory_space<semaphore_mem>> -> memref<1x1x!tpu.dma_semaphore, #tpu.memory_space<semaphore_mem>>
      %331 = tpu.memref_squeeze %330 : memref<1x1x!tpu.dma_semaphore, #tpu.memory_space<semaphore_mem>> -> memref<!tpu.dma_semaphore, #tpu.memory_space<semaphore_mem>>
      tpu.wait_dma2 semaphore(%331 : memref<!tpu.dma_semaphore, #tpu.memory_space<semaphore_mem>>) src(%327 : memref<8x128xf32, #tpu.memory_space<any>>) dst(%329 : memref<8x128xf32, #tpu.memory_space<vmem>>)
    } else {
    }
    %c0_i32_49 = arith.constant 0 : i32
    %118 = arith.cmpi sle, %7, %c0_i32_49 : i32
    %119 = arith.andi %9, %118 : i1
    %120 = arith.extui %119 : i1 to i32
    %c0_i32_50 = arith.constant 0 : i32
    %121 = arith.cmpi ne, %120, %c0_i32_50 : i32
    scf.if %121 {
      %cst = arith.constant 0.000000e+00 : f32
      %326 = vector.broadcast %cst : f32 to vector<8x128xf32>
      %c0 = arith.constant 0 : index
      %c0_152 = arith.constant 0 : index
      %c0_153 = arith.constant 0 : index
      %327 = vector.load %arg4[%c0, %c0_152, %c0_153] : memref<4x32x128xf32, #tpu.memory_space<vmem>>, vector<1x8x128xf32>
      %328 = vector.shape_cast %327 : vector<1x8x128xf32> to vector<8x128xf32>
      %329 = vector.shape_cast %326 : vector<8x128xf32> to vector<1x8x128xf32>
      tpu.vector_store %arg4[%c0, %c0_152, %c0_153], %329 {strides = array<i32>} : memref<4x32x128xf32, #tpu.memory_space<vmem>>, vector<1x8x128xf32>,
    } else {
    }
    %c0_i32_51 = arith.constant 0 : i32
    %122 = arith.cmpi sgt, %7, %c0_i32_51 : i32
    %c8_i32_52 = arith.constant 8 : i32
    %123 = arith.cmpi slt, %7, %c8_i32_52 : i32
    %124 = arith.andi %122, %123 : i1
    %125 = arith.andi %9, %124 : i1
    %126 = arith.extui %125 : i1 to i32
    %c0_i32_53 = arith.constant 0 : i32
    %127 = arith.cmpi ne, %126, %c0_i32_53 : i32
    scf.if %127 {
      %c0 = arith.constant 0 : index
      %c0_152 = arith.constant 0 : index
      %c0_153 = arith.constant 0 : index
      %326 = vector.load %arg4[%c0, %c0_152, %c0_153] : memref<4x32x128xf32, #tpu.memory_space<vmem>>, vector<1x8x128xf32>
      %327 = vector.shape_cast %326 : vector<1x8x128xf32> to vector<8x128xf32>
      %c0_i32_154 = arith.constant 0 : i32
      %328 = vector.broadcast %c0_i32_154 : i32 to vector<8x1xi32>
      %329 = arith.addi %328, %101 : vector<8x1xi32>
      %330 = vector.broadcast %7 : i32 to vector<8x1xi32>
      %331 = arith.cmpi slt, %329, %330 : vector<8x1xi32>
      %cst = arith.constant 0.000000e+00 : f32
      %332 = vector.shape_cast %331 : vector<8x1xi1> to vector<8x1xi1>
      %333 = vector.broadcast %332 : vector<8x1xi1> to vector<8x128xi1>
      %334 = vector.broadcast %cst : f32 to vector<8x128xf32>
      %335 = arith.select %333, %327, %334 : vector<8x128xi1>, vector<8x128xf32>
      %c0_155 = arith.constant 0 : index
      %c0_156 = arith.constant 0 : index
      %c0_157 = arith.constant 0 : index
      %336 = vector.load %arg4[%c0_155, %c0_156, %c0_157] : memref<4x32x128xf32, #tpu.memory_space<vmem>>, vector<1x8x128xf32>
      %337 = vector.shape_cast %336 : vector<1x8x128xf32> to vector<8x128xf32>
      %338 = vector.shape_cast %335 : vector<8x128xf32> to vector<1x8x128xf32>
      tpu.vector_store %arg4[%c0_155, %c0_156, %c0_157], %338 {strides = array<i32>} : memref<4x32x128xf32, #tpu.memory_space<vmem>>, vector<1x8x128xf32>,
    } else {
    }
    %c8_i32_54 = arith.constant 8 : i32
    %128 = arith.cmpi sle, %7, %c8_i32_54 : i32
    %129 = arith.andi %9, %128 : i1
    %130 = arith.extui %129 : i1 to i32
    %c0_i32_55 = arith.constant 0 : i32
    %131 = arith.cmpi ne, %130, %c0_i32_55 : i32
    scf.if %131 {
      %cst = arith.constant 0.000000e+00 : f32
      %326 = vector.broadcast %cst : f32 to vector<8x128xf32>
      %c0 = arith.constant 0 : index
      %c8 = arith.constant 8 : index
      %c0_152 = arith.constant 0 : index
      %327 = vector.load %arg4[%c0, %c8, %c0_152] : memref<4x32x128xf32, #tpu.memory_space<vmem>>, vector<1x8x128xf32>
      %328 = vector.shape_cast %327 : vector<1x8x128xf32> to vector<8x128xf32>
      %329 = vector.shape_cast %326 : vector<8x128xf32> to vector<1x8x128xf32>
      tpu.vector_store %arg4[%c0, %c8, %c0_152], %329 {strides = array<i32>} : memref<4x32x128xf32, #tpu.memory_space<vmem>>, vector<1x8x128xf32>,
    } else {
    }
    %c8_i32_56 = arith.constant 8 : i32
    %132 = arith.cmpi sgt, %7, %c8_i32_56 : i32
    %c16_i32_57 = arith.constant 16 : i32
    %133 = arith.cmpi slt, %7, %c16_i32_57 : i32
    %134 = arith.andi %132, %133 : i1
    %135 = arith.andi %9, %134 : i1
    %136 = arith.extui %135 : i1 to i32
    %c0_i32_58 = arith.constant 0 : i32
    %137 = arith.cmpi ne, %136, %c0_i32_58 : i32
    scf.if %137 {
      %c0 = arith.constant 0 : index
      %c8 = arith.constant 8 : index
      %c0_152 = arith.constant 0 : index
      %326 = vector.load %arg4[%c0, %c8, %c0_152] : memref<4x32x128xf32, #tpu.memory_space<vmem>>, vector<1x8x128xf32>
      %327 = vector.shape_cast %326 : vector<1x8x128xf32> to vector<8x128xf32>
      %c8_i32_153 = arith.constant 8 : i32
      %328 = vector.broadcast %c8_i32_153 : i32 to vector<8x1xi32>
      %329 = arith.addi %328, %101 : vector<8x1xi32>
      %330 = vector.broadcast %7 : i32 to vector<8x1xi32>
      %331 = arith.cmpi slt, %329, %330 : vector<8x1xi32>
      %cst = arith.constant 0.000000e+00 : f32
      %332 = vector.shape_cast %331 : vector<8x1xi1> to vector<8x1xi1>
      %333 = vector.broadcast %332 : vector<8x1xi1> to vector<8x128xi1>
      %334 = vector.broadcast %cst : f32 to vector<8x128xf32>
      %335 = arith.select %333, %327, %334 : vector<8x128xi1>, vector<8x128xf32>
      %c0_154 = arith.constant 0 : index
      %c8_155 = arith.constant 8 : index
      %c0_156 = arith.constant 0 : index
      %336 = vector.load %arg4[%c0_154, %c8_155, %c0_156] : memref<4x32x128xf32, #tpu.memory_space<vmem>>, vector<1x8x128xf32>
      %337 = vector.shape_cast %336 : vector<1x8x128xf32> to vector<8x128xf32>
      %338 = vector.shape_cast %335 : vector<8x128xf32> to vector<1x8x128xf32>
      tpu.vector_store %arg4[%c0_154, %c8_155, %c0_156], %338 {strides = array<i32>} : memref<4x32x128xf32, #tpu.memory_space<vmem>>, vector<1x8x128xf32>,
    } else {
    }
    %c16_i32_59 = arith.constant 16 : i32
    %138 = arith.cmpi sle, %7, %c16_i32_59 : i32
    %139 = arith.andi %9, %138 : i1
    %140 = arith.extui %139 : i1 to i32
    %c0_i32_60 = arith.constant 0 : i32
    %141 = arith.cmpi ne, %140, %c0_i32_60 : i32
    scf.if %141 {
      %cst = arith.constant 0.000000e+00 : f32
      %326 = vector.broadcast %cst : f32 to vector<8x128xf32>
      %c0 = arith.constant 0 : index
      %c16 = arith.constant 16 : index
      %c0_152 = arith.constant 0 : index
      %327 = vector.load %arg4[%c0, %c16, %c0_152] : memref<4x32x128xf32, #tpu.memory_space<vmem>>, vector<1x8x128xf32>
      %328 = vector.shape_cast %327 : vector<1x8x128xf32> to vector<8x128xf32>
      %329 = vector.shape_cast %326 : vector<8x128xf32> to vector<1x8x128xf32>
      tpu.vector_store %arg4[%c0, %c16, %c0_152], %329 {strides = array<i32>} : memref<4x32x128xf32, #tpu.memory_space<vmem>>, vector<1x8x128xf32>,
    } else {
    }
    %c16_i32_61 = arith.constant 16 : i32
    %142 = arith.cmpi sgt, %7, %c16_i32_61 : i32
    %c24_i32_62 = arith.constant 24 : i32
    %143 = arith.cmpi slt, %7, %c24_i32_62 : i32
    %144 = arith.andi %142, %143 : i1
    %145 = arith.andi %9, %144 : i1
    %146 = arith.extui %145 : i1 to i32
    %c0_i32_63 = arith.constant 0 : i32
    %147 = arith.cmpi ne, %146, %c0_i32_63 : i32
    scf.if %147 {
      %c0 = arith.constant 0 : index
      %c16 = arith.constant 16 : index
      %c0_152 = arith.constant 0 : index
      %326 = vector.load %arg4[%c0, %c16, %c0_152] : memref<4x32x128xf32, #tpu.memory_space<vmem>>, vector<1x8x128xf32>
      %327 = vector.shape_cast %326 : vector<1x8x128xf32> to vector<8x128xf32>
      %c16_i32_153 = arith.constant 16 : i32
      %328 = vector.broadcast %c16_i32_153 : i32 to vector<8x1xi32>
      %329 = arith.addi %328, %101 : vector<8x1xi32>
      %330 = vector.broadcast %7 : i32 to vector<8x1xi32>
      %331 = arith.cmpi slt, %329, %330 : vector<8x1xi32>
      %cst = arith.constant 0.000000e+00 : f32
      %332 = vector.shape_cast %331 : vector<8x1xi1> to vector<8x1xi1>
      %333 = vector.broadcast %332 : vector<8x1xi1> to vector<8x128xi1>
      %334 = vector.broadcast %cst : f32 to vector<8x128xf32>
      %335 = arith.select %333, %327, %334 : vector<8x128xi1>, vector<8x128xf32>
      %c0_154 = arith.constant 0 : index
      %c16_155 = arith.constant 16 : index
      %c0_156 = arith.constant 0 : index
      %336 = vector.load %arg4[%c0_154, %c16_155, %c0_156] : memref<4x32x128xf32, #tpu.memory_space<vmem>>, vector<1x8x128xf32>
      %337 = vector.shape_cast %336 : vector<1x8x128xf32> to vector<8x128xf32>
      %338 = vector.shape_cast %335 : vector<8x128xf32> to vector<1x8x128xf32>
      tpu.vector_store %arg4[%c0_154, %c16_155, %c0_156], %338 {strides = array<i32>} : memref<4x32x128xf32, #tpu.memory_space<vmem>>, vector<1x8x128xf32>,
    } else {
    }
    %c24_i32_64 = arith.constant 24 : i32
    %148 = arith.cmpi sle, %7, %c24_i32_64 : i32
    %149 = arith.andi %9, %148 : i1
    %150 = arith.extui %149 : i1 to i32
    %c0_i32_65 = arith.constant 0 : i32
    %151 = arith.cmpi ne, %150, %c0_i32_65 : i32
    scf.if %151 {
      %cst = arith.constant 0.000000e+00 : f32
      %326 = vector.broadcast %cst : f32 to vector<8x128xf32>
      %c0 = arith.constant 0 : index
      %c24 = arith.constant 24 : index
      %c0_152 = arith.constant 0 : index
      %327 = vector.load %arg4[%c0, %c24, %c0_152] : memref<4x32x128xf32, #tpu.memory_space<vmem>>, vector<1x8x128xf32>
      %328 = vector.shape_cast %327 : vector<1x8x128xf32> to vector<8x128xf32>
      %329 = vector.shape_cast %326 : vector<8x128xf32> to vector<1x8x128xf32>
      tpu.vector_store %arg4[%c0, %c24, %c0_152], %329 {strides = array<i32>} : memref<4x32x128xf32, #tpu.memory_space<vmem>>, vector<1x8x128xf32>,
    } else {
    }
    %c24_i32_66 = arith.constant 24 : i32
    %152 = arith.cmpi sgt, %7, %c24_i32_66 : i32
    %c32_i32 = arith.constant 32 : i32
    %153 = arith.cmpi slt, %7, %c32_i32 : i32
    %154 = arith.andi %152, %153 : i1
    %155 = arith.andi %9, %154 : i1
    %156 = arith.extui %155 : i1 to i32
    %c0_i32_67 = arith.constant 0 : i32
    %157 = arith.cmpi ne, %156, %c0_i32_67 : i32
    scf.if %157 {
      %c0 = arith.constant 0 : index
      %c24 = arith.constant 24 : index
      %c0_152 = arith.constant 0 : index
      %326 = vector.load %arg4[%c0, %c24, %c0_152] : memref<4x32x128xf32, #tpu.memory_space<vmem>>, vector<1x8x128xf32>
      %327 = vector.shape_cast %326 : vector<1x8x128xf32> to vector<8x128xf32>
      %c24_i32_153 = arith.constant 24 : i32
      %328 = vector.broadcast %c24_i32_153 : i32 to vector<8x1xi32>
      %329 = arith.addi %328, %101 : vector<8x1xi32>
      %330 = vector.broadcast %7 : i32 to vector<8x1xi32>
      %331 = arith.cmpi slt, %329, %330 : vector<8x1xi32>
      %cst = arith.constant 0.000000e+00 : f32
      %332 = vector.shape_cast %331 : vector<8x1xi1> to vector<8x1xi1>
      %333 = vector.broadcast %332 : vector<8x1xi1> to vector<8x128xi1>
      %334 = vector.broadcast %cst : f32 to vector<8x128xf32>
      %335 = arith.select %333, %327, %334 : vector<8x128xi1>, vector<8x128xf32>
      %c0_154 = arith.constant 0 : index
      %c24_155 = arith.constant 24 : index
      %c0_156 = arith.constant 0 : index
      %336 = vector.load %arg4[%c0_154, %c24_155, %c0_156] : memref<4x32x128xf32, #tpu.memory_space<vmem>>, vector<1x8x128xf32>
      %337 = vector.shape_cast %336 : vector<1x8x128xf32> to vector<8x128xf32>
      %338 = vector.shape_cast %335 : vector<8x128xf32> to vector<1x8x128xf32>
      tpu.vector_store %arg4[%c0_154, %c24_155, %c0_156], %338 {strides = array<i32>} : memref<4x32x128xf32, #tpu.memory_space<vmem>>, vector<1x8x128xf32>,
    } else {
    }
    %c0_i32_68 = arith.constant 0 : i32
    %158 = arith.cmpi sgt, %16, %c0_i32_68 : i32
    %159 = arith.andi %18, %158 : i1
    %160 = arith.extui %159 : i1 to i32
    %c0_i32_69 = arith.constant 0 : i32
    %161 = arith.cmpi ne, %160, %c0_i32_69 : i32
    scf.if %161 {
      %c0_i32_152 = arith.constant 0 : i32
      %326 = arith.addi %13, %c0_i32_152 : i32
      %c1_i32_153 = arith.constant 1 : i32
      %c1_i32_154 = arith.constant 1 : i32
      %c0_i32_155 = arith.constant 0 : i32
      %c0_i32_156 = arith.constant 0 : i32
      %327 = tpu.memref_slice %arg3[%326, %c0_i32_156] : memref<224x128xf32, #tpu.memory_space<any>> -> memref<8x128xf32, #tpu.memory_space<any>>
      %c0_i32_157 = arith.constant 0 : i32
      %c0_i32_158 = arith.constant 0 : i32
      %328 = tpu.memref_slice %arg4[%c1_i32_153, %c0_i32_157, %c0_i32_158] : memref<4x32x128xf32, #tpu.memory_space<vmem>> -> memref<1x8x128xf32, #tpu.memory_space<vmem>>
      %329 = tpu.memref_squeeze %328 : memref<1x8x128xf32, #tpu.memory_space<vmem>> -> memref<8x128xf32, #tpu.memory_space<vmem>>
      %330 = tpu.memref_slice %arg5[%c1_i32_154, %c0_i32_155] : memref<4x4x!tpu.dma_semaphore, #tpu.memory_space<semaphore_mem>> -> memref<1x1x!tpu.dma_semaphore, #tpu.memory_space<semaphore_mem>>
      %331 = tpu.memref_squeeze %330 : memref<1x1x!tpu.dma_semaphore, #tpu.memory_space<semaphore_mem>> -> memref<!tpu.dma_semaphore, #tpu.memory_space<semaphore_mem>>
      tpu.wait_dma2 semaphore(%331 : memref<!tpu.dma_semaphore, #tpu.memory_space<semaphore_mem>>) src(%327 : memref<8x128xf32, #tpu.memory_space<any>>) dst(%329 : memref<8x128xf32, #tpu.memory_space<vmem>>)
    } else {
    }
    %c8_i32_70 = arith.constant 8 : i32
    %162 = arith.cmpi sgt, %16, %c8_i32_70 : i32
    %163 = arith.andi %18, %162 : i1
    %164 = arith.extui %163 : i1 to i32
    %c0_i32_71 = arith.constant 0 : i32
    %165 = arith.cmpi ne, %164, %c0_i32_71 : i32
    scf.if %165 {
      %c8_i32_152 = arith.constant 8 : i32
      %326 = arith.addi %13, %c8_i32_152 : i32
      %c1_i32_153 = arith.constant 1 : i32
      %c1_i32_154 = arith.constant 1 : i32
      %c1_i32_155 = arith.constant 1 : i32
      %c0_i32_156 = arith.constant 0 : i32
      %327 = tpu.memref_slice %arg3[%326, %c0_i32_156] : memref<224x128xf32, #tpu.memory_space<any>> -> memref<8x128xf32, #tpu.memory_space<any>>
      %c8_i32_157 = arith.constant 8 : i32
      %c0_i32_158 = arith.constant 0 : i32
      %328 = tpu.memref_slice %arg4[%c1_i32_153, %c8_i32_157, %c0_i32_158] : memref<4x32x128xf32, #tpu.memory_space<vmem>> -> memref<1x8x128xf32, #tpu.memory_space<vmem>>
      %329 = tpu.memref_squeeze %328 : memref<1x8x128xf32, #tpu.memory_space<vmem>> -> memref<8x128xf32, #tpu.memory_space<vmem>>
      %330 = tpu.memref_slice %arg5[%c1_i32_154, %c1_i32_155] : memref<4x4x!tpu.dma_semaphore, #tpu.memory_space<semaphore_mem>> -> memref<1x1x!tpu.dma_semaphore, #tpu.memory_space<semaphore_mem>>
      %331 = tpu.memref_squeeze %330 : memref<1x1x!tpu.dma_semaphore, #tpu.memory_space<semaphore_mem>> -> memref<!tpu.dma_semaphore, #tpu.memory_space<semaphore_mem>>
      tpu.wait_dma2 semaphore(%331 : memref<!tpu.dma_semaphore, #tpu.memory_space<semaphore_mem>>) src(%327 : memref<8x128xf32, #tpu.memory_space<any>>) dst(%329 : memref<8x128xf32, #tpu.memory_space<vmem>>)
    } else {
    }
    %c16_i32_72 = arith.constant 16 : i32
    %166 = arith.cmpi sgt, %16, %c16_i32_72 : i32
    %167 = arith.andi %18, %166 : i1
    %168 = arith.extui %167 : i1 to i32
    %c0_i32_73 = arith.constant 0 : i32
    %169 = arith.cmpi ne, %168, %c0_i32_73 : i32
    scf.if %169 {
      %c16_i32_152 = arith.constant 16 : i32
      %326 = arith.addi %13, %c16_i32_152 : i32
      %c1_i32_153 = arith.constant 1 : i32
      %c1_i32_154 = arith.constant 1 : i32
      %c2_i32_155 = arith.constant 2 : i32
      %c0_i32_156 = arith.constant 0 : i32
      %327 = tpu.memref_slice %arg3[%326, %c0_i32_156] : memref<224x128xf32, #tpu.memory_space<any>> -> memref<8x128xf32, #tpu.memory_space<any>>
      %c16_i32_157 = arith.constant 16 : i32
      %c0_i32_158 = arith.constant 0 : i32
      %328 = tpu.memref_slice %arg4[%c1_i32_153, %c16_i32_157, %c0_i32_158] : memref<4x32x128xf32, #tpu.memory_space<vmem>> -> memref<1x8x128xf32, #tpu.memory_space<vmem>>
      %329 = tpu.memref_squeeze %328 : memref<1x8x128xf32, #tpu.memory_space<vmem>> -> memref<8x128xf32, #tpu.memory_space<vmem>>
      %330 = tpu.memref_slice %arg5[%c1_i32_154, %c2_i32_155] : memref<4x4x!tpu.dma_semaphore, #tpu.memory_space<semaphore_mem>> -> memref<1x1x!tpu.dma_semaphore, #tpu.memory_space<semaphore_mem>>
      %331 = tpu.memref_squeeze %330 : memref<1x1x!tpu.dma_semaphore, #tpu.memory_space<semaphore_mem>> -> memref<!tpu.dma_semaphore, #tpu.memory_space<semaphore_mem>>
      tpu.wait_dma2 semaphore(%331 : memref<!tpu.dma_semaphore, #tpu.memory_space<semaphore_mem>>) src(%327 : memref<8x128xf32, #tpu.memory_space<any>>) dst(%329 : memref<8x128xf32, #tpu.memory_space<vmem>>)
    } else {
    }
    %c24_i32_74 = arith.constant 24 : i32
    %170 = arith.cmpi sgt, %16, %c24_i32_74 : i32
    %171 = arith.andi %18, %170 : i1
    %172 = arith.extui %171 : i1 to i32
    %c0_i32_75 = arith.constant 0 : i32
    %173 = arith.cmpi ne, %172, %c0_i32_75 : i32
    scf.if %173 {
      %c24_i32_152 = arith.constant 24 : i32
      %326 = arith.addi %13, %c24_i32_152 : i32
      %c1_i32_153 = arith.constant 1 : i32
      %c1_i32_154 = arith.constant 1 : i32
      %c3_i32_155 = arith.constant 3 : i32
      %c0_i32_156 = arith.constant 0 : i32
      %327 = tpu.memref_slice %arg3[%326, %c0_i32_156] : memref<224x128xf32, #tpu.memory_space<any>> -> memref<8x128xf32, #tpu.memory_space<any>>
      %c24_i32_157 = arith.constant 24 : i32
      %c0_i32_158 = arith.constant 0 : i32
      %328 = tpu.memref_slice %arg4[%c1_i32_153, %c24_i32_157, %c0_i32_158] : memref<4x32x128xf32, #tpu.memory_space<vmem>> -> memref<1x8x128xf32, #tpu.memory_space<vmem>>
      %329 = tpu.memref_squeeze %328 : memref<1x8x128xf32, #tpu.memory_space<vmem>> -> memref<8x128xf32, #tpu.memory_space<vmem>>
      %330 = tpu.memref_slice %arg5[%c1_i32_154, %c3_i32_155] : memref<4x4x!tpu.dma_semaphore, #tpu.memory_space<semaphore_mem>> -> memref<1x1x!tpu.dma_semaphore, #tpu.memory_space<semaphore_mem>>
      %331 = tpu.memref_squeeze %330 : memref<1x1x!tpu.dma_semaphore, #tpu.memory_space<semaphore_mem>> -> memref<!tpu.dma_semaphore, #tpu.memory_space<semaphore_mem>>
      tpu.wait_dma2 semaphore(%331 : memref<!tpu.dma_semaphore, #tpu.memory_space<semaphore_mem>>) src(%327 : memref<8x128xf32, #tpu.memory_space<any>>) dst(%329 : memref<8x128xf32, #tpu.memory_space<vmem>>)
    } else {
    }
    %c0_i32_76 = arith.constant 0 : i32
    %174 = arith.cmpi sle, %16, %c0_i32_76 : i32
    %175 = arith.andi %18, %174 : i1
    %176 = arith.extui %175 : i1 to i32
    %c0_i32_77 = arith.constant 0 : i32
    %177 = arith.cmpi ne, %176, %c0_i32_77 : i32
    scf.if %177 {
      %cst = arith.constant 0.000000e+00 : f32
      %326 = vector.broadcast %cst : f32 to vector<8x128xf32>
      %c1 = arith.constant 1 : index
      %c0 = arith.constant 0 : index
      %c0_152 = arith.constant 0 : index
      %327 = vector.load %arg4[%c1, %c0, %c0_152] : memref<4x32x128xf32, #tpu.memory_space<vmem>>, vector<1x8x128xf32>
      %328 = vector.shape_cast %327 : vector<1x8x128xf32> to vector<8x128xf32>
      %329 = vector.shape_cast %326 : vector<8x128xf32> to vector<1x8x128xf32>
      tpu.vector_store %arg4[%c1, %c0, %c0_152], %329 {strides = array<i32>} : memref<4x32x128xf32, #tpu.memory_space<vmem>>, vector<1x8x128xf32>,
    } else {
    }
    %c0_i32_78 = arith.constant 0 : i32
    %178 = arith.cmpi sgt, %16, %c0_i32_78 : i32
    %c8_i32_79 = arith.constant 8 : i32
    %179 = arith.cmpi slt, %16, %c8_i32_79 : i32
    %180 = arith.andi %178, %179 : i1
    %181 = arith.andi %18, %180 : i1
    %182 = arith.extui %181 : i1 to i32
    %c0_i32_80 = arith.constant 0 : i32
    %183 = arith.cmpi ne, %182, %c0_i32_80 : i32
    scf.if %183 {
      %c1 = arith.constant 1 : index
      %c0 = arith.constant 0 : index
      %c0_152 = arith.constant 0 : index
      %326 = vector.load %arg4[%c1, %c0, %c0_152] : memref<4x32x128xf32, #tpu.memory_space<vmem>>, vector<1x8x128xf32>
      %327 = vector.shape_cast %326 : vector<1x8x128xf32> to vector<8x128xf32>
      %c0_i32_153 = arith.constant 0 : i32
      %328 = vector.broadcast %c0_i32_153 : i32 to vector<8x1xi32>
      %329 = arith.addi %328, %101 : vector<8x1xi32>
      %330 = vector.broadcast %16 : i32 to vector<8x1xi32>
      %331 = arith.cmpi slt, %329, %330 : vector<8x1xi32>
      %cst = arith.constant 0.000000e+00 : f32
      %332 = vector.shape_cast %331 : vector<8x1xi1> to vector<8x1xi1>
      %333 = vector.broadcast %332 : vector<8x1xi1> to vector<8x128xi1>
      %334 = vector.broadcast %cst : f32 to vector<8x128xf32>
      %335 = arith.select %333, %327, %334 : vector<8x128xi1>, vector<8x128xf32>
      %c1_154 = arith.constant 1 : index
      %c0_155 = arith.constant 0 : index
      %c0_156 = arith.constant 0 : index
      %336 = vector.load %arg4[%c1_154, %c0_155, %c0_156] : memref<4x32x128xf32, #tpu.memory_space<vmem>>, vector<1x8x128xf32>
      %337 = vector.shape_cast %336 : vector<1x8x128xf32> to vector<8x128xf32>
      %338 = vector.shape_cast %335 : vector<8x128xf32> to vector<1x8x128xf32>
      tpu.vector_store %arg4[%c1_154, %c0_155, %c0_156], %338 {strides = array<i32>} : memref<4x32x128xf32, #tpu.memory_space<vmem>>, vector<1x8x128xf32>,
    } else {
    }
    %c8_i32_81 = arith.constant 8 : i32
    %184 = arith.cmpi sle, %16, %c8_i32_81 : i32
    %185 = arith.andi %18, %184 : i1
    %186 = arith.extui %185 : i1 to i32
    %c0_i32_82 = arith.constant 0 : i32
    %187 = arith.cmpi ne, %186, %c0_i32_82 : i32
    scf.if %187 {
      %cst = arith.constant 0.000000e+00 : f32
      %326 = vector.broadcast %cst : f32 to vector<8x128xf32>
      %c1 = arith.constant 1 : index
      %c8 = arith.constant 8 : index
      %c0 = arith.constant 0 : index
      %327 = vector.load %arg4[%c1, %c8, %c0] : memref<4x32x128xf32, #tpu.memory_space<vmem>>, vector<1x8x128xf32>
      %328 = vector.shape_cast %327 : vector<1x8x128xf32> to vector<8x128xf32>
      %329 = vector.shape_cast %326 : vector<8x128xf32> to vector<1x8x128xf32>
      tpu.vector_store %arg4[%c1, %c8, %c0], %329 {strides = array<i32>} : memref<4x32x128xf32, #tpu.memory_space<vmem>>, vector<1x8x128xf32>,
    } else {
    }
    %c8_i32_83 = arith.constant 8 : i32
    %188 = arith.cmpi sgt, %16, %c8_i32_83 : i32
    %c16_i32_84 = arith.constant 16 : i32
    %189 = arith.cmpi slt, %16, %c16_i32_84 : i32
    %190 = arith.andi %188, %189 : i1
    %191 = arith.andi %18, %190 : i1
    %192 = arith.extui %191 : i1 to i32
    %c0_i32_85 = arith.constant 0 : i32
    %193 = arith.cmpi ne, %192, %c0_i32_85 : i32
    scf.if %193 {
      %c1 = arith.constant 1 : index
      %c8 = arith.constant 8 : index
      %c0 = arith.constant 0 : index
      %326 = vector.load %arg4[%c1, %c8, %c0] : memref<4x32x128xf32, #tpu.memory_space<vmem>>, vector<1x8x128xf32>
      %327 = vector.shape_cast %326 : vector<1x8x128xf32> to vector<8x128xf32>
      %c8_i32_152 = arith.constant 8 : i32
      %328 = vector.broadcast %c8_i32_152 : i32 to vector<8x1xi32>
      %329 = arith.addi %328, %101 : vector<8x1xi32>
      %330 = vector.broadcast %16 : i32 to vector<8x1xi32>
      %331 = arith.cmpi slt, %329, %330 : vector<8x1xi32>
      %cst = arith.constant 0.000000e+00 : f32
      %332 = vector.shape_cast %331 : vector<8x1xi1> to vector<8x1xi1>
      %333 = vector.broadcast %332 : vector<8x1xi1> to vector<8x128xi1>
      %334 = vector.broadcast %cst : f32 to vector<8x128xf32>
      %335 = arith.select %333, %327, %334 : vector<8x128xi1>, vector<8x128xf32>
      %c1_153 = arith.constant 1 : index
      %c8_154 = arith.constant 8 : index
      %c0_155 = arith.constant 0 : index
      %336 = vector.load %arg4[%c1_153, %c8_154, %c0_155] : memref<4x32x128xf32, #tpu.memory_space<vmem>>, vector<1x8x128xf32>
      %337 = vector.shape_cast %336 : vector<1x8x128xf32> to vector<8x128xf32>
      %338 = vector.shape_cast %335 : vector<8x128xf32> to vector<1x8x128xf32>
      tpu.vector_store %arg4[%c1_153, %c8_154, %c0_155], %338 {strides = array<i32>} : memref<4x32x128xf32, #tpu.memory_space<vmem>>, vector<1x8x128xf32>,
    } else {
    }
    %c16_i32_86 = arith.constant 16 : i32
    %194 = arith.cmpi sle, %16, %c16_i32_86 : i32
    %195 = arith.andi %18, %194 : i1
    %196 = arith.extui %195 : i1 to i32
    %c0_i32_87 = arith.constant 0 : i32
    %197 = arith.cmpi ne, %196, %c0_i32_87 : i32
    scf.if %197 {
      %cst = arith.constant 0.000000e+00 : f32
      %326 = vector.broadcast %cst : f32 to vector<8x128xf32>
      %c1 = arith.constant 1 : index
      %c16 = arith.constant 16 : index
      %c0 = arith.constant 0 : index
      %327 = vector.load %arg4[%c1, %c16, %c0] : memref<4x32x128xf32, #tpu.memory_space<vmem>>, vector<1x8x128xf32>
      %328 = vector.shape_cast %327 : vector<1x8x128xf32> to vector<8x128xf32>
      %329 = vector.shape_cast %326 : vector<8x128xf32> to vector<1x8x128xf32>
      tpu.vector_store %arg4[%c1, %c16, %c0], %329 {strides = array<i32>} : memref<4x32x128xf32, #tpu.memory_space<vmem>>, vector<1x8x128xf32>,
    } else {
    }
    %c16_i32_88 = arith.constant 16 : i32
    %198 = arith.cmpi sgt, %16, %c16_i32_88 : i32
    %c24_i32_89 = arith.constant 24 : i32
    %199 = arith.cmpi slt, %16, %c24_i32_89 : i32
    %200 = arith.andi %198, %199 : i1
    %201 = arith.andi %18, %200 : i1
    %202 = arith.extui %201 : i1 to i32
    %c0_i32_90 = arith.constant 0 : i32
    %203 = arith.cmpi ne, %202, %c0_i32_90 : i32
    scf.if %203 {
      %c1 = arith.constant 1 : index
      %c16 = arith.constant 16 : index
      %c0 = arith.constant 0 : index
      %326 = vector.load %arg4[%c1, %c16, %c0] : memref<4x32x128xf32, #tpu.memory_space<vmem>>, vector<1x8x128xf32>
      %327 = vector.shape_cast %326 : vector<1x8x128xf32> to vector<8x128xf32>
      %c16_i32_152 = arith.constant 16 : i32
      %328 = vector.broadcast %c16_i32_152 : i32 to vector<8x1xi32>
      %329 = arith.addi %328, %101 : vector<8x1xi32>
      %330 = vector.broadcast %16 : i32 to vector<8x1xi32>
      %331 = arith.cmpi slt, %329, %330 : vector<8x1xi32>
      %cst = arith.constant 0.000000e+00 : f32
      %332 = vector.shape_cast %331 : vector<8x1xi1> to vector<8x1xi1>
      %333 = vector.broadcast %332 : vector<8x1xi1> to vector<8x128xi1>
      %334 = vector.broadcast %cst : f32 to vector<8x128xf32>
      %335 = arith.select %333, %327, %334 : vector<8x128xi1>, vector<8x128xf32>
      %c1_153 = arith.constant 1 : index
      %c16_154 = arith.constant 16 : index
      %c0_155 = arith.constant 0 : index
      %336 = vector.load %arg4[%c1_153, %c16_154, %c0_155] : memref<4x32x128xf32, #tpu.memory_space<vmem>>, vector<1x8x128xf32>
      %337 = vector.shape_cast %336 : vector<1x8x128xf32> to vector<8x128xf32>
      %338 = vector.shape_cast %335 : vector<8x128xf32> to vector<1x8x128xf32>
      tpu.vector_store %arg4[%c1_153, %c16_154, %c0_155], %338 {strides = array<i32>} : memref<4x32x128xf32, #tpu.memory_space<vmem>>, vector<1x8x128xf32>,
    } else {
    }
    %c24_i32_91 = arith.constant 24 : i32
    %204 = arith.cmpi sle, %16, %c24_i32_91 : i32
    %205 = arith.andi %18, %204 : i1
    %206 = arith.extui %205 : i1 to i32
    %c0_i32_92 = arith.constant 0 : i32
    %207 = arith.cmpi ne, %206, %c0_i32_92 : i32
    scf.if %207 {
      %cst = arith.constant 0.000000e+00 : f32
      %326 = vector.broadcast %cst : f32 to vector<8x128xf32>
      %c1 = arith.constant 1 : index
      %c24 = arith.constant 24 : index
      %c0 = arith.constant 0 : index
      %327 = vector.load %arg4[%c1, %c24, %c0] : memref<4x32x128xf32, #tpu.memory_space<vmem>>, vector<1x8x128xf32>
      %328 = vector.shape_cast %327 : vector<1x8x128xf32> to vector<8x128xf32>
      %329 = vector.shape_cast %326 : vector<8x128xf32> to vector<1x8x128xf32>
      tpu.vector_store %arg4[%c1, %c24, %c0], %329 {strides = array<i32>} : memref<4x32x128xf32, #tpu.memory_space<vmem>>, vector<1x8x128xf32>,
    } else {
    }
    %c24_i32_93 = arith.constant 24 : i32
    %208 = arith.cmpi sgt, %16, %c24_i32_93 : i32
    %c32_i32_94 = arith.constant 32 : i32
    %209 = arith.cmpi slt, %16, %c32_i32_94 : i32
    %210 = arith.andi %208, %209 : i1
    %211 = arith.andi %18, %210 : i1
    %212 = arith.extui %211 : i1 to i32
    %c0_i32_95 = arith.constant 0 : i32
    %213 = arith.cmpi ne, %212, %c0_i32_95 : i32
    scf.if %213 {
      %c1 = arith.constant 1 : index
      %c24 = arith.constant 24 : index
      %c0 = arith.constant 0 : index
      %326 = vector.load %arg4[%c1, %c24, %c0] : memref<4x32x128xf32, #tpu.memory_space<vmem>>, vector<1x8x128xf32>
      %327 = vector.shape_cast %326 : vector<1x8x128xf32> to vector<8x128xf32>
      %c24_i32_152 = arith.constant 24 : i32
      %328 = vector.broadcast %c24_i32_152 : i32 to vector<8x1xi32>
      %329 = arith.addi %328, %101 : vector<8x1xi32>
      %330 = vector.broadcast %16 : i32 to vector<8x1xi32>
      %331 = arith.cmpi slt, %329, %330 : vector<8x1xi32>
      %cst = arith.constant 0.000000e+00 : f32
      %332 = vector.shape_cast %331 : vector<8x1xi1> to vector<8x1xi1>
      %333 = vector.broadcast %332 : vector<8x1xi1> to vector<8x128xi1>
      %334 = vector.broadcast %cst : f32 to vector<8x128xf32>
      %335 = arith.select %333, %327, %334 : vector<8x128xi1>, vector<8x128xf32>
      %c1_153 = arith.constant 1 : index
      %c24_154 = arith.constant 24 : index
      %c0_155 = arith.constant 0 : index
      %336 = vector.load %arg4[%c1_153, %c24_154, %c0_155] : memref<4x32x128xf32, #tpu.memory_space<vmem>>, vector<1x8x128xf32>
      %337 = vector.shape_cast %336 : vector<1x8x128xf32> to vector<8x128xf32>
      %338 = vector.shape_cast %335 : vector<8x128xf32> to vector<1x8x128xf32>
      tpu.vector_store %arg4[%c1_153, %c24_154, %c0_155], %338 {strides = array<i32>} : memref<4x32x128xf32, #tpu.memory_space<vmem>>, vector<1x8x128xf32>,
    } else {
    }
    %c0_i32_96 = arith.constant 0 : i32
    %214 = arith.cmpi sgt, %25, %c0_i32_96 : i32
    %215 = arith.andi %27, %214 : i1
    %216 = arith.extui %215 : i1 to i32
    %c0_i32_97 = arith.constant 0 : i32
    %217 = arith.cmpi ne, %216, %c0_i32_97 : i32
    scf.if %217 {
      %c0_i32_152 = arith.constant 0 : i32
      %326 = arith.addi %22, %c0_i32_152 : i32
      %c2_i32_153 = arith.constant 2 : i32
      %c2_i32_154 = arith.constant 2 : i32
      %c0_i32_155 = arith.constant 0 : i32
      %c0_i32_156 = arith.constant 0 : i32
      %327 = tpu.memref_slice %arg3[%326, %c0_i32_156] : memref<224x128xf32, #tpu.memory_space<any>> -> memref<8x128xf32, #tpu.memory_space<any>>
      %c0_i32_157 = arith.constant 0 : i32
      %c0_i32_158 = arith.constant 0 : i32
      %328 = tpu.memref_slice %arg4[%c2_i32_153, %c0_i32_157, %c0_i32_158] : memref<4x32x128xf32, #tpu.memory_space<vmem>> -> memref<1x8x128xf32, #tpu.memory_space<vmem>>
      %329 = tpu.memref_squeeze %328 : memref<1x8x128xf32, #tpu.memory_space<vmem>> -> memref<8x128xf32, #tpu.memory_space<vmem>>
      %330 = tpu.memref_slice %arg5[%c2_i32_154, %c0_i32_155] : memref<4x4x!tpu.dma_semaphore, #tpu.memory_space<semaphore_mem>> -> memref<1x1x!tpu.dma_semaphore, #tpu.memory_space<semaphore_mem>>
      %331 = tpu.memref_squeeze %330 : memref<1x1x!tpu.dma_semaphore, #tpu.memory_space<semaphore_mem>> -> memref<!tpu.dma_semaphore, #tpu.memory_space<semaphore_mem>>
      tpu.wait_dma2 semaphore(%331 : memref<!tpu.dma_semaphore, #tpu.memory_space<semaphore_mem>>) src(%327 : memref<8x128xf32, #tpu.memory_space<any>>) dst(%329 : memref<8x128xf32, #tpu.memory_space<vmem>>)
    } else {
    }
    %c8_i32_98 = arith.constant 8 : i32
    %218 = arith.cmpi sgt, %25, %c8_i32_98 : i32
    %219 = arith.andi %27, %218 : i1
    %220 = arith.extui %219 : i1 to i32
    %c0_i32_99 = arith.constant 0 : i32
    %221 = arith.cmpi ne, %220, %c0_i32_99 : i32
    scf.if %221 {
      %c8_i32_152 = arith.constant 8 : i32
      %326 = arith.addi %22, %c8_i32_152 : i32
      %c2_i32_153 = arith.constant 2 : i32
      %c2_i32_154 = arith.constant 2 : i32
      %c1_i32_155 = arith.constant 1 : i32
      %c0_i32_156 = arith.constant 0 : i32
      %327 = tpu.memref_slice %arg3[%326, %c0_i32_156] : memref<224x128xf32, #tpu.memory_space<any>> -> memref<8x128xf32, #tpu.memory_space<any>>
      %c8_i32_157 = arith.constant 8 : i32
      %c0_i32_158 = arith.constant 0 : i32
      %328 = tpu.memref_slice %arg4[%c2_i32_153, %c8_i32_157, %c0_i32_158] : memref<4x32x128xf32, #tpu.memory_space<vmem>> -> memref<1x8x128xf32, #tpu.memory_space<vmem>>
      %329 = tpu.memref_squeeze %328 : memref<1x8x128xf32, #tpu.memory_space<vmem>> -> memref<8x128xf32, #tpu.memory_space<vmem>>
      %330 = tpu.memref_slice %arg5[%c2_i32_154, %c1_i32_155] : memref<4x4x!tpu.dma_semaphore, #tpu.memory_space<semaphore_mem>> -> memref<1x1x!tpu.dma_semaphore, #tpu.memory_space<semaphore_mem>>
      %331 = tpu.memref_squeeze %330 : memref<1x1x!tpu.dma_semaphore, #tpu.memory_space<semaphore_mem>> -> memref<!tpu.dma_semaphore, #tpu.memory_space<semaphore_mem>>
      tpu.wait_dma2 semaphore(%331 : memref<!tpu.dma_semaphore, #tpu.memory_space<semaphore_mem>>) src(%327 : memref<8x128xf32, #tpu.memory_space<any>>) dst(%329 : memref<8x128xf32, #tpu.memory_space<vmem>>)
    } else {
    }
    %c16_i32_100 = arith.constant 16 : i32
    %222 = arith.cmpi sgt, %25, %c16_i32_100 : i32
    %223 = arith.andi %27, %222 : i1
    %224 = arith.extui %223 : i1 to i32
    %c0_i32_101 = arith.constant 0 : i32
    %225 = arith.cmpi ne, %224, %c0_i32_101 : i32
    scf.if %225 {
      %c16_i32_152 = arith.constant 16 : i32
      %326 = arith.addi %22, %c16_i32_152 : i32
      %c2_i32_153 = arith.constant 2 : i32
      %c2_i32_154 = arith.constant 2 : i32
      %c2_i32_155 = arith.constant 2 : i32
      %c0_i32_156 = arith.constant 0 : i32
      %327 = tpu.memref_slice %arg3[%326, %c0_i32_156] : memref<224x128xf32, #tpu.memory_space<any>> -> memref<8x128xf32, #tpu.memory_space<any>>
      %c16_i32_157 = arith.constant 16 : i32
      %c0_i32_158 = arith.constant 0 : i32
      %328 = tpu.memref_slice %arg4[%c2_i32_153, %c16_i32_157, %c0_i32_158] : memref<4x32x128xf32, #tpu.memory_space<vmem>> -> memref<1x8x128xf32, #tpu.memory_space<vmem>>
      %329 = tpu.memref_squeeze %328 : memref<1x8x128xf32, #tpu.memory_space<vmem>> -> memref<8x128xf32, #tpu.memory_space<vmem>>
      %330 = tpu.memref_slice %arg5[%c2_i32_154, %c2_i32_155] : memref<4x4x!tpu.dma_semaphore, #tpu.memory_space<semaphore_mem>> -> memref<1x1x!tpu.dma_semaphore, #tpu.memory_space<semaphore_mem>>
      %331 = tpu.memref_squeeze %330 : memref<1x1x!tpu.dma_semaphore, #tpu.memory_space<semaphore_mem>> -> memref<!tpu.dma_semaphore, #tpu.memory_space<semaphore_mem>>
      tpu.wait_dma2 semaphore(%331 : memref<!tpu.dma_semaphore, #tpu.memory_space<semaphore_mem>>) src(%327 : memref<8x128xf32, #tpu.memory_space<any>>) dst(%329 : memref<8x128xf32, #tpu.memory_space<vmem>>)
    } else {
    }
    %c24_i32_102 = arith.constant 24 : i32
    %226 = arith.cmpi sgt, %25, %c24_i32_102 : i32
    %227 = arith.andi %27, %226 : i1
    %228 = arith.extui %227 : i1 to i32
    %c0_i32_103 = arith.constant 0 : i32
    %229 = arith.cmpi ne, %228, %c0_i32_103 : i32
    scf.if %229 {
      %c24_i32_152 = arith.constant 24 : i32
      %326 = arith.addi %22, %c24_i32_152 : i32
      %c2_i32_153 = arith.constant 2 : i32
      %c2_i32_154 = arith.constant 2 : i32
      %c3_i32_155 = arith.constant 3 : i32
      %c0_i32_156 = arith.constant 0 : i32
      %327 = tpu.memref_slice %arg3[%326, %c0_i32_156] : memref<224x128xf32, #tpu.memory_space<any>> -> memref<8x128xf32, #tpu.memory_space<any>>
      %c24_i32_157 = arith.constant 24 : i32
      %c0_i32_158 = arith.constant 0 : i32
      %328 = tpu.memref_slice %arg4[%c2_i32_153, %c24_i32_157, %c0_i32_158] : memref<4x32x128xf32, #tpu.memory_space<vmem>> -> memref<1x8x128xf32, #tpu.memory_space<vmem>>
      %329 = tpu.memref_squeeze %328 : memref<1x8x128xf32, #tpu.memory_space<vmem>> -> memref<8x128xf32, #tpu.memory_space<vmem>>
      %330 = tpu.memref_slice %arg5[%c2_i32_154, %c3_i32_155] : memref<4x4x!tpu.dma_semaphore, #tpu.memory_space<semaphore_mem>> -> memref<1x1x!tpu.dma_semaphore, #tpu.memory_space<semaphore_mem>>
      %331 = tpu.memref_squeeze %330 : memref<1x1x!tpu.dma_semaphore, #tpu.memory_space<semaphore_mem>> -> memref<!tpu.dma_semaphore, #tpu.memory_space<semaphore_mem>>
      tpu.wait_dma2 semaphore(%331 : memref<!tpu.dma_semaphore, #tpu.memory_space<semaphore_mem>>) src(%327 : memref<8x128xf32, #tpu.memory_space<any>>) dst(%329 : memref<8x128xf32, #tpu.memory_space<vmem>>)
    } else {
    }
    %c0_i32_104 = arith.constant 0 : i32
    %230 = arith.cmpi sle, %25, %c0_i32_104 : i32
    %231 = arith.andi %27, %230 : i1
    %232 = arith.extui %231 : i1 to i32
    %c0_i32_105 = arith.constant 0 : i32
    %233 = arith.cmpi ne, %232, %c0_i32_105 : i32
    scf.if %233 {
      %cst = arith.constant 0.000000e+00 : f32
      %326 = vector.broadcast %cst : f32 to vector<8x128xf32>
      %c2 = arith.constant 2 : index
      %c0 = arith.constant 0 : index
      %c0_152 = arith.constant 0 : index
      %327 = vector.load %arg4[%c2, %c0, %c0_152] : memref<4x32x128xf32, #tpu.memory_space<vmem>>, vector<1x8x128xf32>
      %328 = vector.shape_cast %327 : vector<1x8x128xf32> to vector<8x128xf32>
      %329 = vector.shape_cast %326 : vector<8x128xf32> to vector<1x8x128xf32>
      tpu.vector_store %arg4[%c2, %c0, %c0_152], %329 {strides = array<i32>} : memref<4x32x128xf32, #tpu.memory_space<vmem>>, vector<1x8x128xf32>,
    } else {
    }
    %c0_i32_106 = arith.constant 0 : i32
    %234 = arith.cmpi sgt, %25, %c0_i32_106 : i32
    %c8_i32_107 = arith.constant 8 : i32
    %235 = arith.cmpi slt, %25, %c8_i32_107 : i32
    %236 = arith.andi %234, %235 : i1
    %237 = arith.andi %27, %236 : i1
    %238 = arith.extui %237 : i1 to i32
    %c0_i32_108 = arith.constant 0 : i32
    %239 = arith.cmpi ne, %238, %c0_i32_108 : i32
    scf.if %239 {
      %c2 = arith.constant 2 : index
      %c0 = arith.constant 0 : index
      %c0_152 = arith.constant 0 : index
      %326 = vector.load %arg4[%c2, %c0, %c0_152] : memref<4x32x128xf32, #tpu.memory_space<vmem>>, vector<1x8x128xf32>
      %327 = vector.shape_cast %326 : vector<1x8x128xf32> to vector<8x128xf32>
      %c0_i32_153 = arith.constant 0 : i32
      %328 = vector.broadcast %c0_i32_153 : i32 to vector<8x1xi32>
      %329 = arith.addi %328, %101 : vector<8x1xi32>
      %330 = vector.broadcast %25 : i32 to vector<8x1xi32>
      %331 = arith.cmpi slt, %329, %330 : vector<8x1xi32>
      %cst = arith.constant 0.000000e+00 : f32
      %332 = vector.shape_cast %331 : vector<8x1xi1> to vector<8x1xi1>
      %333 = vector.broadcast %332 : vector<8x1xi1> to vector<8x128xi1>
      %334 = vector.broadcast %cst : f32 to vector<8x128xf32>
      %335 = arith.select %333, %327, %334 : vector<8x128xi1>, vector<8x128xf32>
      %c2_154 = arith.constant 2 : index
      %c0_155 = arith.constant 0 : index
      %c0_156 = arith.constant 0 : index
      %336 = vector.load %arg4[%c2_154, %c0_155, %c0_156] : memref<4x32x128xf32, #tpu.memory_space<vmem>>, vector<1x8x128xf32>
      %337 = vector.shape_cast %336 : vector<1x8x128xf32> to vector<8x128xf32>
      %338 = vector.shape_cast %335 : vector<8x128xf32> to vector<1x8x128xf32>
      tpu.vector_store %arg4[%c2_154, %c0_155, %c0_156], %338 {strides = array<i32>} : memref<4x32x128xf32, #tpu.memory_space<vmem>>, vector<1x8x128xf32>,
    } else {
    }
    %c8_i32_109 = arith.constant 8 : i32
    %240 = arith.cmpi sle, %25, %c8_i32_109 : i32
    %241 = arith.andi %27, %240 : i1
    %242 = arith.extui %241 : i1 to i32
    %c0_i32_110 = arith.constant 0 : i32
    %243 = arith.cmpi ne, %242, %c0_i32_110 : i32
    scf.if %243 {
      %cst = arith.constant 0.000000e+00 : f32
      %326 = vector.broadcast %cst : f32 to vector<8x128xf32>
      %c2 = arith.constant 2 : index
      %c8 = arith.constant 8 : index
      %c0 = arith.constant 0 : index
      %327 = vector.load %arg4[%c2, %c8, %c0] : memref<4x32x128xf32, #tpu.memory_space<vmem>>, vector<1x8x128xf32>
      %328 = vector.shape_cast %327 : vector<1x8x128xf32> to vector<8x128xf32>
      %329 = vector.shape_cast %326 : vector<8x128xf32> to vector<1x8x128xf32>
      tpu.vector_store %arg4[%c2, %c8, %c0], %329 {strides = array<i32>} : memref<4x32x128xf32, #tpu.memory_space<vmem>>, vector<1x8x128xf32>,
    } else {
    }
    %c8_i32_111 = arith.constant 8 : i32
    %244 = arith.cmpi sgt, %25, %c8_i32_111 : i32
    %c16_i32_112 = arith.constant 16 : i32
    %245 = arith.cmpi slt, %25, %c16_i32_112 : i32
    %246 = arith.andi %244, %245 : i1
    %247 = arith.andi %27, %246 : i1
    %248 = arith.extui %247 : i1 to i32
    %c0_i32_113 = arith.constant 0 : i32
    %249 = arith.cmpi ne, %248, %c0_i32_113 : i32
    scf.if %249 {
      %c2 = arith.constant 2 : index
      %c8 = arith.constant 8 : index
      %c0 = arith.constant 0 : index
      %326 = vector.load %arg4[%c2, %c8, %c0] : memref<4x32x128xf32, #tpu.memory_space<vmem>>, vector<1x8x128xf32>
      %327 = vector.shape_cast %326 : vector<1x8x128xf32> to vector<8x128xf32>
      %c8_i32_152 = arith.constant 8 : i32
      %328 = vector.broadcast %c8_i32_152 : i32 to vector<8x1xi32>
      %329 = arith.addi %328, %101 : vector<8x1xi32>
      %330 = vector.broadcast %25 : i32 to vector<8x1xi32>
      %331 = arith.cmpi slt, %329, %330 : vector<8x1xi32>
      %cst = arith.constant 0.000000e+00 : f32
      %332 = vector.shape_cast %331 : vector<8x1xi1> to vector<8x1xi1>
      %333 = vector.broadcast %332 : vector<8x1xi1> to vector<8x128xi1>
      %334 = vector.broadcast %cst : f32 to vector<8x128xf32>
      %335 = arith.select %333, %327, %334 : vector<8x128xi1>, vector<8x128xf32>
      %c2_153 = arith.constant 2 : index
      %c8_154 = arith.constant 8 : index
      %c0_155 = arith.constant 0 : index
      %336 = vector.load %arg4[%c2_153, %c8_154, %c0_155] : memref<4x32x128xf32, #tpu.memory_space<vmem>>, vector<1x8x128xf32>
      %337 = vector.shape_cast %336 : vector<1x8x128xf32> to vector<8x128xf32>
      %338 = vector.shape_cast %335 : vector<8x128xf32> to vector<1x8x128xf32>
      tpu.vector_store %arg4[%c2_153, %c8_154, %c0_155], %338 {strides = array<i32>} : memref<4x32x128xf32, #tpu.memory_space<vmem>>, vector<1x8x128xf32>,
    } else {
    }
    %c16_i32_114 = arith.constant 16 : i32
    %250 = arith.cmpi sle, %25, %c16_i32_114 : i32
    %251 = arith.andi %27, %250 : i1
    %252 = arith.extui %251 : i1 to i32
    %c0_i32_115 = arith.constant 0 : i32
    %253 = arith.cmpi ne, %252, %c0_i32_115 : i32
    scf.if %253 {
      %cst = arith.constant 0.000000e+00 : f32
      %326 = vector.broadcast %cst : f32 to vector<8x128xf32>
      %c2 = arith.constant 2 : index
      %c16 = arith.constant 16 : index
      %c0 = arith.constant 0 : index
      %327 = vector.load %arg4[%c2, %c16, %c0] : memref<4x32x128xf32, #tpu.memory_space<vmem>>, vector<1x8x128xf32>
      %328 = vector.shape_cast %327 : vector<1x8x128xf32> to vector<8x128xf32>
      %329 = vector.shape_cast %326 : vector<8x128xf32> to vector<1x8x128xf32>
      tpu.vector_store %arg4[%c2, %c16, %c0], %329 {strides = array<i32>} : memref<4x32x128xf32, #tpu.memory_space<vmem>>, vector<1x8x128xf32>,
    } else {
    }
    %c16_i32_116 = arith.constant 16 : i32
    %254 = arith.cmpi sgt, %25, %c16_i32_116 : i32
    %c24_i32_117 = arith.constant 24 : i32
    %255 = arith.cmpi slt, %25, %c24_i32_117 : i32
    %256 = arith.andi %254, %255 : i1
    %257 = arith.andi %27, %256 : i1
    %258 = arith.extui %257 : i1 to i32
    %c0_i32_118 = arith.constant 0 : i32
    %259 = arith.cmpi ne, %258, %c0_i32_118 : i32
    scf.if %259 {
      %c2 = arith.constant 2 : index
      %c16 = arith.constant 16 : index
      %c0 = arith.constant 0 : index
      %326 = vector.load %arg4[%c2, %c16, %c0] : memref<4x32x128xf32, #tpu.memory_space<vmem>>, vector<1x8x128xf32>
      %327 = vector.shape_cast %326 : vector<1x8x128xf32> to vector<8x128xf32>
      %c16_i32_152 = arith.constant 16 : i32
      %328 = vector.broadcast %c16_i32_152 : i32 to vector<8x1xi32>
      %329 = arith.addi %328, %101 : vector<8x1xi32>
      %330 = vector.broadcast %25 : i32 to vector<8x1xi32>
      %331 = arith.cmpi slt, %329, %330 : vector<8x1xi32>
      %cst = arith.constant 0.000000e+00 : f32
      %332 = vector.shape_cast %331 : vector<8x1xi1> to vector<8x1xi1>
      %333 = vector.broadcast %332 : vector<8x1xi1> to vector<8x128xi1>
      %334 = vector.broadcast %cst : f32 to vector<8x128xf32>
      %335 = arith.select %333, %327, %334 : vector<8x128xi1>, vector<8x128xf32>
      %c2_153 = arith.constant 2 : index
      %c16_154 = arith.constant 16 : index
      %c0_155 = arith.constant 0 : index
      %336 = vector.load %arg4[%c2_153, %c16_154, %c0_155] : memref<4x32x128xf32, #tpu.memory_space<vmem>>, vector<1x8x128xf32>
      %337 = vector.shape_cast %336 : vector<1x8x128xf32> to vector<8x128xf32>
      %338 = vector.shape_cast %335 : vector<8x128xf32> to vector<1x8x128xf32>
      tpu.vector_store %arg4[%c2_153, %c16_154, %c0_155], %338 {strides = array<i32>} : memref<4x32x128xf32, #tpu.memory_space<vmem>>, vector<1x8x128xf32>,
    } else {
    }
    %c24_i32_119 = arith.constant 24 : i32
    %260 = arith.cmpi sle, %25, %c24_i32_119 : i32
    %261 = arith.andi %27, %260 : i1
    %262 = arith.extui %261 : i1 to i32
    %c0_i32_120 = arith.constant 0 : i32
    %263 = arith.cmpi ne, %262, %c0_i32_120 : i32
    scf.if %263 {
      %cst = arith.constant 0.000000e+00 : f32
      %326 = vector.broadcast %cst : f32 to vector<8x128xf32>
      %c2 = arith.constant 2 : index
      %c24 = arith.constant 24 : index
      %c0 = arith.constant 0 : index
      %327 = vector.load %arg4[%c2, %c24, %c0] : memref<4x32x128xf32, #tpu.memory_space<vmem>>, vector<1x8x128xf32>
      %328 = vector.shape_cast %327 : vector<1x8x128xf32> to vector<8x128xf32>
      %329 = vector.shape_cast %326 : vector<8x128xf32> to vector<1x8x128xf32>
      tpu.vector_store %arg4[%c2, %c24, %c0], %329 {strides = array<i32>} : memref<4x32x128xf32, #tpu.memory_space<vmem>>, vector<1x8x128xf32>,
    } else {
    }
    %c24_i32_121 = arith.constant 24 : i32
    %264 = arith.cmpi sgt, %25, %c24_i32_121 : i32
    %c32_i32_122 = arith.constant 32 : i32
    %265 = arith.cmpi slt, %25, %c32_i32_122 : i32
    %266 = arith.andi %264, %265 : i1
    %267 = arith.andi %27, %266 : i1
    %268 = arith.extui %267 : i1 to i32
    %c0_i32_123 = arith.constant 0 : i32
    %269 = arith.cmpi ne, %268, %c0_i32_123 : i32
    scf.if %269 {
      %c2 = arith.constant 2 : index
      %c24 = arith.constant 24 : index
      %c0 = arith.constant 0 : index
      %326 = vector.load %arg4[%c2, %c24, %c0] : memref<4x32x128xf32, #tpu.memory_space<vmem>>, vector<1x8x128xf32>
      %327 = vector.shape_cast %326 : vector<1x8x128xf32> to vector<8x128xf32>
      %c24_i32_152 = arith.constant 24 : i32
      %328 = vector.broadcast %c24_i32_152 : i32 to vector<8x1xi32>
      %329 = arith.addi %328, %101 : vector<8x1xi32>
      %330 = vector.broadcast %25 : i32 to vector<8x1xi32>
      %331 = arith.cmpi slt, %329, %330 : vector<8x1xi32>
      %cst = arith.constant 0.000000e+00 : f32
      %332 = vector.shape_cast %331 : vector<8x1xi1> to vector<8x1xi1>
      %333 = vector.broadcast %332 : vector<8x1xi1> to vector<8x128xi1>
      %334 = vector.broadcast %cst : f32 to vector<8x128xf32>
      %335 = arith.select %333, %327, %334 : vector<8x128xi1>, vector<8x128xf32>
      %c2_153 = arith.constant 2 : index
      %c24_154 = arith.constant 24 : index
      %c0_155 = arith.constant 0 : index
      %336 = vector.load %arg4[%c2_153, %c24_154, %c0_155] : memref<4x32x128xf32, #tpu.memory_space<vmem>>, vector<1x8x128xf32>
      %337 = vector.shape_cast %336 : vector<1x8x128xf32> to vector<8x128xf32>
      %338 = vector.shape_cast %335 : vector<8x128xf32> to vector<1x8x128xf32>
      tpu.vector_store %arg4[%c2_153, %c24_154, %c0_155], %338 {strides = array<i32>} : memref<4x32x128xf32, #tpu.memory_space<vmem>>, vector<1x8x128xf32>,
    } else {
    }
    %c0_i32_124 = arith.constant 0 : i32
    %270 = arith.cmpi sgt, %34, %c0_i32_124 : i32
    %271 = arith.andi %36, %270 : i1
    %272 = arith.extui %271 : i1 to i32
    %c0_i32_125 = arith.constant 0 : i32
    %273 = arith.cmpi ne, %272, %c0_i32_125 : i32
    scf.if %273 {
      %c0_i32_152 = arith.constant 0 : i32
      %326 = arith.addi %31, %c0_i32_152 : i32
      %c3_i32_153 = arith.constant 3 : i32
      %c3_i32_154 = arith.constant 3 : i32
      %c0_i32_155 = arith.constant 0 : i32
      %c0_i32_156 = arith.constant 0 : i32
      %327 = tpu.memref_slice %arg3[%326, %c0_i32_156] : memref<224x128xf32, #tpu.memory_space<any>> -> memref<8x128xf32, #tpu.memory_space<any>>
      %c0_i32_157 = arith.constant 0 : i32
      %c0_i32_158 = arith.constant 0 : i32
      %328 = tpu.memref_slice %arg4[%c3_i32_153, %c0_i32_157, %c0_i32_158] : memref<4x32x128xf32, #tpu.memory_space<vmem>> -> memref<1x8x128xf32, #tpu.memory_space<vmem>>
      %329 = tpu.memref_squeeze %328 : memref<1x8x128xf32, #tpu.memory_space<vmem>> -> memref<8x128xf32, #tpu.memory_space<vmem>>
      %330 = tpu.memref_slice %arg5[%c3_i32_154, %c0_i32_155] : memref<4x4x!tpu.dma_semaphore, #tpu.memory_space<semaphore_mem>> -> memref<1x1x!tpu.dma_semaphore, #tpu.memory_space<semaphore_mem>>
      %331 = tpu.memref_squeeze %330 : memref<1x1x!tpu.dma_semaphore, #tpu.memory_space<semaphore_mem>> -> memref<!tpu.dma_semaphore, #tpu.memory_space<semaphore_mem>>
      tpu.wait_dma2 semaphore(%331 : memref<!tpu.dma_semaphore, #tpu.memory_space<semaphore_mem>>) src(%327 : memref<8x128xf32, #tpu.memory_space<any>>) dst(%329 : memref<8x128xf32, #tpu.memory_space<vmem>>)
    } else {
    }
    %c8_i32_126 = arith.constant 8 : i32
    %274 = arith.cmpi sgt, %34, %c8_i32_126 : i32
    %275 = arith.andi %36, %274 : i1
    %276 = arith.extui %275 : i1 to i32
    %c0_i32_127 = arith.constant 0 : i32
    %277 = arith.cmpi ne, %276, %c0_i32_127 : i32
    scf.if %277 {
      %c8_i32_152 = arith.constant 8 : i32
      %326 = arith.addi %31, %c8_i32_152 : i32
      %c3_i32_153 = arith.constant 3 : i32
      %c3_i32_154 = arith.constant 3 : i32
      %c1_i32_155 = arith.constant 1 : i32
      %c0_i32_156 = arith.constant 0 : i32
      %327 = tpu.memref_slice %arg3[%326, %c0_i32_156] : memref<224x128xf32, #tpu.memory_space<any>> -> memref<8x128xf32, #tpu.memory_space<any>>
      %c8_i32_157 = arith.constant 8 : i32
      %c0_i32_158 = arith.constant 0 : i32
      %328 = tpu.memref_slice %arg4[%c3_i32_153, %c8_i32_157, %c0_i32_158] : memref<4x32x128xf32, #tpu.memory_space<vmem>> -> memref<1x8x128xf32, #tpu.memory_space<vmem>>
      %329 = tpu.memref_squeeze %328 : memref<1x8x128xf32, #tpu.memory_space<vmem>> -> memref<8x128xf32, #tpu.memory_space<vmem>>
      %330 = tpu.memref_slice %arg5[%c3_i32_154, %c1_i32_155] : memref<4x4x!tpu.dma_semaphore, #tpu.memory_space<semaphore_mem>> -> memref<1x1x!tpu.dma_semaphore, #tpu.memory_space<semaphore_mem>>
      %331 = tpu.memref_squeeze %330 : memref<1x1x!tpu.dma_semaphore, #tpu.memory_space<semaphore_mem>> -> memref<!tpu.dma_semaphore, #tpu.memory_space<semaphore_mem>>
      tpu.wait_dma2 semaphore(%331 : memref<!tpu.dma_semaphore, #tpu.memory_space<semaphore_mem>>) src(%327 : memref<8x128xf32, #tpu.memory_space<any>>) dst(%329 : memref<8x128xf32, #tpu.memory_space<vmem>>)
    } else {
    }
    %c16_i32_128 = arith.constant 16 : i32
    %278 = arith.cmpi sgt, %34, %c16_i32_128 : i32
    %279 = arith.andi %36, %278 : i1
    %280 = arith.extui %279 : i1 to i32
    %c0_i32_129 = arith.constant 0 : i32
    %281 = arith.cmpi ne, %280, %c0_i32_129 : i32
    scf.if %281 {
      %c16_i32_152 = arith.constant 16 : i32
      %326 = arith.addi %31, %c16_i32_152 : i32
      %c3_i32_153 = arith.constant 3 : i32
      %c3_i32_154 = arith.constant 3 : i32
      %c2_i32_155 = arith.constant 2 : i32
      %c0_i32_156 = arith.constant 0 : i32
      %327 = tpu.memref_slice %arg3[%326, %c0_i32_156] : memref<224x128xf32, #tpu.memory_space<any>> -> memref<8x128xf32, #tpu.memory_space<any>>
      %c16_i32_157 = arith.constant 16 : i32
      %c0_i32_158 = arith.constant 0 : i32
      %328 = tpu.memref_slice %arg4[%c3_i32_153, %c16_i32_157, %c0_i32_158] : memref<4x32x128xf32, #tpu.memory_space<vmem>> -> memref<1x8x128xf32, #tpu.memory_space<vmem>>
      %329 = tpu.memref_squeeze %328 : memref<1x8x128xf32, #tpu.memory_space<vmem>> -> memref<8x128xf32, #tpu.memory_space<vmem>>
      %330 = tpu.memref_slice %arg5[%c3_i32_154, %c2_i32_155] : memref<4x4x!tpu.dma_semaphore, #tpu.memory_space<semaphore_mem>> -> memref<1x1x!tpu.dma_semaphore, #tpu.memory_space<semaphore_mem>>
      %331 = tpu.memref_squeeze %330 : memref<1x1x!tpu.dma_semaphore, #tpu.memory_space<semaphore_mem>> -> memref<!tpu.dma_semaphore, #tpu.memory_space<semaphore_mem>>
      tpu.wait_dma2 semaphore(%331 : memref<!tpu.dma_semaphore, #tpu.memory_space<semaphore_mem>>) src(%327 : memref<8x128xf32, #tpu.memory_space<any>>) dst(%329 : memref<8x128xf32, #tpu.memory_space<vmem>>)
    } else {
    }
    %c24_i32_130 = arith.constant 24 : i32
    %282 = arith.cmpi sgt, %34, %c24_i32_130 : i32
    %283 = arith.andi %36, %282 : i1
    %284 = arith.extui %283 : i1 to i32
    %c0_i32_131 = arith.constant 0 : i32
    %285 = arith.cmpi ne, %284, %c0_i32_131 : i32
    scf.if %285 {
      %c24_i32_152 = arith.constant 24 : i32
      %326 = arith.addi %31, %c24_i32_152 : i32
      %c3_i32_153 = arith.constant 3 : i32
      %c3_i32_154 = arith.constant 3 : i32
      %c3_i32_155 = arith.constant 3 : i32
      %c0_i32_156 = arith.constant 0 : i32
      %327 = tpu.memref_slice %arg3[%326, %c0_i32_156] : memref<224x128xf32, #tpu.memory_space<any>> -> memref<8x128xf32, #tpu.memory_space<any>>
      %c24_i32_157 = arith.constant 24 : i32
      %c0_i32_158 = arith.constant 0 : i32
      %328 = tpu.memref_slice %arg4[%c3_i32_153, %c24_i32_157, %c0_i32_158] : memref<4x32x128xf32, #tpu.memory_space<vmem>> -> memref<1x8x128xf32, #tpu.memory_space<vmem>>
      %329 = tpu.memref_squeeze %328 : memref<1x8x128xf32, #tpu.memory_space<vmem>> -> memref<8x128xf32, #tpu.memory_space<vmem>>
      %330 = tpu.memref_slice %arg5[%c3_i32_154, %c3_i32_155] : memref<4x4x!tpu.dma_semaphore, #tpu.memory_space<semaphore_mem>> -> memref<1x1x!tpu.dma_semaphore, #tpu.memory_space<semaphore_mem>>
      %331 = tpu.memref_squeeze %330 : memref<1x1x!tpu.dma_semaphore, #tpu.memory_space<semaphore_mem>> -> memref<!tpu.dma_semaphore, #tpu.memory_space<semaphore_mem>>
      tpu.wait_dma2 semaphore(%331 : memref<!tpu.dma_semaphore, #tpu.memory_space<semaphore_mem>>) src(%327 : memref<8x128xf32, #tpu.memory_space<any>>) dst(%329 : memref<8x128xf32, #tpu.memory_space<vmem>>)
    } else {
    }
    %c0_i32_132 = arith.constant 0 : i32
    %286 = arith.cmpi sle, %34, %c0_i32_132 : i32
    %287 = arith.andi %36, %286 : i1
    %288 = arith.extui %287 : i1 to i32
    %c0_i32_133 = arith.constant 0 : i32
    %289 = arith.cmpi ne, %288, %c0_i32_133 : i32
    scf.if %289 {
      %cst = arith.constant 0.000000e+00 : f32
      %326 = vector.broadcast %cst : f32 to vector<8x128xf32>
      %c3 = arith.constant 3 : index
      %c0 = arith.constant 0 : index
      %c0_152 = arith.constant 0 : index
      %327 = vector.load %arg4[%c3, %c0, %c0_152] : memref<4x32x128xf32, #tpu.memory_space<vmem>>, vector<1x8x128xf32>
      %328 = vector.shape_cast %327 : vector<1x8x128xf32> to vector<8x128xf32>
      %329 = vector.shape_cast %326 : vector<8x128xf32> to vector<1x8x128xf32>
      tpu.vector_store %arg4[%c3, %c0, %c0_152], %329 {strides = array<i32>} : memref<4x32x128xf32, #tpu.memory_space<vmem>>, vector<1x8x128xf32>,
    } else {
    }
    %c0_i32_134 = arith.constant 0 : i32
    %290 = arith.cmpi sgt, %34, %c0_i32_134 : i32
    %c8_i32_135 = arith.constant 8 : i32
    %291 = arith.cmpi slt, %34, %c8_i32_135 : i32
    %292 = arith.andi %290, %291 : i1
    %293 = arith.andi %36, %292 : i1
    %294 = arith.extui %293 : i1 to i32
    %c0_i32_136 = arith.constant 0 : i32
    %295 = arith.cmpi ne, %294, %c0_i32_136 : i32
    scf.if %295 {
      %c3 = arith.constant 3 : index
      %c0 = arith.constant 0 : index
      %c0_152 = arith.constant 0 : index
      %326 = vector.load %arg4[%c3, %c0, %c0_152] : memref<4x32x128xf32, #tpu.memory_space<vmem>>, vector<1x8x128xf32>
      %327 = vector.shape_cast %326 : vector<1x8x128xf32> to vector<8x128xf32>
      %c0_i32_153 = arith.constant 0 : i32
      %328 = vector.broadcast %c0_i32_153 : i32 to vector<8x1xi32>
      %329 = arith.addi %328, %101 : vector<8x1xi32>
      %330 = vector.broadcast %34 : i32 to vector<8x1xi32>
      %331 = arith.cmpi slt, %329, %330 : vector<8x1xi32>
      %cst = arith.constant 0.000000e+00 : f32
      %332 = vector.shape_cast %331 : vector<8x1xi1> to vector<8x1xi1>
      %333 = vector.broadcast %332 : vector<8x1xi1> to vector<8x128xi1>
      %334 = vector.broadcast %cst : f32 to vector<8x128xf32>
      %335 = arith.select %333, %327, %334 : vector<8x128xi1>, vector<8x128xf32>
      %c3_154 = arith.constant 3 : index
      %c0_155 = arith.constant 0 : index
      %c0_156 = arith.constant 0 : index
      %336 = vector.load %arg4[%c3_154, %c0_155, %c0_156] : memref<4x32x128xf32, #tpu.memory_space<vmem>>, vector<1x8x128xf32>
      %337 = vector.shape_cast %336 : vector<1x8x128xf32> to vector<8x128xf32>
      %338 = vector.shape_cast %335 : vector<8x128xf32> to vector<1x8x128xf32>
      tpu.vector_store %arg4[%c3_154, %c0_155, %c0_156], %338 {strides = array<i32>} : memref<4x32x128xf32, #tpu.memory_space<vmem>>, vector<1x8x128xf32>,
    } else {
    }
    %c8_i32_137 = arith.constant 8 : i32
    %296 = arith.cmpi sle, %34, %c8_i32_137 : i32
    %297 = arith.andi %36, %296 : i1
    %298 = arith.extui %297 : i1 to i32
    %c0_i32_138 = arith.constant 0 : i32
    %299 = arith.cmpi ne, %298, %c0_i32_138 : i32
    scf.if %299 {
      %cst = arith.constant 0.000000e+00 : f32
      %326 = vector.broadcast %cst : f32 to vector<8x128xf32>
      %c3 = arith.constant 3 : index
      %c8 = arith.constant 8 : index
      %c0 = arith.constant 0 : index
      %327 = vector.load %arg4[%c3, %c8, %c0] : memref<4x32x128xf32, #tpu.memory_space<vmem>>, vector<1x8x128xf32>
      %328 = vector.shape_cast %327 : vector<1x8x128xf32> to vector<8x128xf32>
      %329 = vector.shape_cast %326 : vector<8x128xf32> to vector<1x8x128xf32>
      tpu.vector_store %arg4[%c3, %c8, %c0], %329 {strides = array<i32>} : memref<4x32x128xf32, #tpu.memory_space<vmem>>, vector<1x8x128xf32>,
    } else {
    }
    %c8_i32_139 = arith.constant 8 : i32
    %300 = arith.cmpi sgt, %34, %c8_i32_139 : i32
    %c16_i32_140 = arith.constant 16 : i32
    %301 = arith.cmpi slt, %34, %c16_i32_140 : i32
    %302 = arith.andi %300, %301 : i1
    %303 = arith.andi %36, %302 : i1
    %304 = arith.extui %303 : i1 to i32
    %c0_i32_141 = arith.constant 0 : i32
    %305 = arith.cmpi ne, %304, %c0_i32_141 : i32
    scf.if %305 {
      %c3 = arith.constant 3 : index
      %c8 = arith.constant 8 : index
      %c0 = arith.constant 0 : index
      %326 = vector.load %arg4[%c3, %c8, %c0] : memref<4x32x128xf32, #tpu.memory_space<vmem>>, vector<1x8x128xf32>
      %327 = vector.shape_cast %326 : vector<1x8x128xf32> to vector<8x128xf32>
      %c8_i32_152 = arith.constant 8 : i32
      %328 = vector.broadcast %c8_i32_152 : i32 to vector<8x1xi32>
      %329 = arith.addi %328, %101 : vector<8x1xi32>
      %330 = vector.broadcast %34 : i32 to vector<8x1xi32>
      %331 = arith.cmpi slt, %329, %330 : vector<8x1xi32>
      %cst = arith.constant 0.000000e+00 : f32
      %332 = vector.shape_cast %331 : vector<8x1xi1> to vector<8x1xi1>
      %333 = vector.broadcast %332 : vector<8x1xi1> to vector<8x128xi1>
      %334 = vector.broadcast %cst : f32 to vector<8x128xf32>
      %335 = arith.select %333, %327, %334 : vector<8x128xi1>, vector<8x128xf32>
      %c3_153 = arith.constant 3 : index
      %c8_154 = arith.constant 8 : index
      %c0_155 = arith.constant 0 : index
      %336 = vector.load %arg4[%c3_153, %c8_154, %c0_155] : memref<4x32x128xf32, #tpu.memory_space<vmem>>, vector<1x8x128xf32>
      %337 = vector.shape_cast %336 : vector<1x8x128xf32> to vector<8x128xf32>
      %338 = vector.shape_cast %335 : vector<8x128xf32> to vector<1x8x128xf32>
      tpu.vector_store %arg4[%c3_153, %c8_154, %c0_155], %338 {strides = array<i32>} : memref<4x32x128xf32, #tpu.memory_space<vmem>>, vector<1x8x128xf32>,
    } else {
    }
    %c16_i32_142 = arith.constant 16 : i32
    %306 = arith.cmpi sle, %34, %c16_i32_142 : i32
    %307 = arith.andi %36, %306 : i1
    %308 = arith.extui %307 : i1 to i32
    %c0_i32_143 = arith.constant 0 : i32
    %309 = arith.cmpi ne, %308, %c0_i32_143 : i32
    scf.if %309 {
      %cst = arith.constant 0.000000e+00 : f32
      %326 = vector.broadcast %cst : f32 to vector<8x128xf32>
      %c3 = arith.constant 3 : index
      %c16 = arith.constant 16 : index
      %c0 = arith.constant 0 : index
      %327 = vector.load %arg4[%c3, %c16, %c0] : memref<4x32x128xf32, #tpu.memory_space<vmem>>, vector<1x8x128xf32>
      %328 = vector.shape_cast %327 : vector<1x8x128xf32> to vector<8x128xf32>
      %329 = vector.shape_cast %326 : vector<8x128xf32> to vector<1x8x128xf32>
      tpu.vector_store %arg4[%c3, %c16, %c0], %329 {strides = array<i32>} : memref<4x32x128xf32, #tpu.memory_space<vmem>>, vector<1x8x128xf32>,
    } else {
    }
    %c16_i32_144 = arith.constant 16 : i32
    %310 = arith.cmpi sgt, %34, %c16_i32_144 : i32
    %c24_i32_145 = arith.constant 24 : i32
    %311 = arith.cmpi slt, %34, %c24_i32_145 : i32
    %312 = arith.andi %310, %311 : i1
    %313 = arith.andi %36, %312 : i1
    %314 = arith.extui %313 : i1 to i32
    %c0_i32_146 = arith.constant 0 : i32
    %315 = arith.cmpi ne, %314, %c0_i32_146 : i32
    scf.if %315 {
      %c3 = arith.constant 3 : index
      %c16 = arith.constant 16 : index
      %c0 = arith.constant 0 : index
      %326 = vector.load %arg4[%c3, %c16, %c0] : memref<4x32x128xf32, #tpu.memory_space<vmem>>, vector<1x8x128xf32>
      %327 = vector.shape_cast %326 : vector<1x8x128xf32> to vector<8x128xf32>
      %c16_i32_152 = arith.constant 16 : i32
      %328 = vector.broadcast %c16_i32_152 : i32 to vector<8x1xi32>
      %329 = arith.addi %328, %101 : vector<8x1xi32>
      %330 = vector.broadcast %34 : i32 to vector<8x1xi32>
      %331 = arith.cmpi slt, %329, %330 : vector<8x1xi32>
      %cst = arith.constant 0.000000e+00 : f32
      %332 = vector.shape_cast %331 : vector<8x1xi1> to vector<8x1xi1>
      %333 = vector.broadcast %332 : vector<8x1xi1> to vector<8x128xi1>
      %334 = vector.broadcast %cst : f32 to vector<8x128xf32>
      %335 = arith.select %333, %327, %334 : vector<8x128xi1>, vector<8x128xf32>
      %c3_153 = arith.constant 3 : index
      %c16_154 = arith.constant 16 : index
      %c0_155 = arith.constant 0 : index
      %336 = vector.load %arg4[%c3_153, %c16_154, %c0_155] : memref<4x32x128xf32, #tpu.memory_space<vmem>>, vector<1x8x128xf32>
      %337 = vector.shape_cast %336 : vector<1x8x128xf32> to vector<8x128xf32>
      %338 = vector.shape_cast %335 : vector<8x128xf32> to vector<1x8x128xf32>
      tpu.vector_store %arg4[%c3_153, %c16_154, %c0_155], %338 {strides = array<i32>} : memref<4x32x128xf32, #tpu.memory_space<vmem>>, vector<1x8x128xf32>,
    } else {
    }
    %c24_i32_147 = arith.constant 24 : i32
    %316 = arith.cmpi sle, %34, %c24_i32_147 : i32
    %317 = arith.andi %36, %316 : i1
    %318 = arith.extui %317 : i1 to i32
    %c0_i32_148 = arith.constant 0 : i32
    %319 = arith.cmpi ne, %318, %c0_i32_148 : i32
    scf.if %319 {
      %cst = arith.constant 0.000000e+00 : f32
      %326 = vector.broadcast %cst : f32 to vector<8x128xf32>
      %c3 = arith.constant 3 : index
      %c24 = arith.constant 24 : index
      %c0 = arith.constant 0 : index
      %327 = vector.load %arg4[%c3, %c24, %c0] : memref<4x32x128xf32, #tpu.memory_space<vmem>>, vector<1x8x128xf32>
      %328 = vector.shape_cast %327 : vector<1x8x128xf32> to vector<8x128xf32>
      %329 = vector.shape_cast %326 : vector<8x128xf32> to vector<1x8x128xf32>
      tpu.vector_store %arg4[%c3, %c24, %c0], %329 {strides = array<i32>} : memref<4x32x128xf32, #tpu.memory_space<vmem>>, vector<1x8x128xf32>,
    } else {
    }
    %c24_i32_149 = arith.constant 24 : i32
    %320 = arith.cmpi sgt, %34, %c24_i32_149 : i32
    %c32_i32_150 = arith.constant 32 : i32
    %321 = arith.cmpi slt, %34, %c32_i32_150 : i32
    %322 = arith.andi %320, %321 : i1
    %323 = arith.andi %36, %322 : i1
    %324 = arith.extui %323 : i1 to i32
    %c0_i32_151 = arith.constant 0 : i32
    %325 = arith.cmpi ne, %324, %c0_i32_151 : i32
    scf.if %325 {
      %c3 = arith.constant 3 : index
      %c24 = arith.constant 24 : index
      %c0 = arith.constant 0 : index
      %326 = vector.load %arg4[%c3, %c24, %c0] : memref<4x32x128xf32, #tpu.memory_space<vmem>>, vector<1x8x128xf32>
      %327 = vector.shape_cast %326 : vector<1x8x128xf32> to vector<8x128xf32>
      %c24_i32_152 = arith.constant 24 : i32
      %328 = vector.broadcast %c24_i32_152 : i32 to vector<8x1xi32>
      %329 = arith.addi %328, %101 : vector<8x1xi32>
      %330 = vector.broadcast %34 : i32 to vector<8x1xi32>
      %331 = arith.cmpi slt, %329, %330 : vector<8x1xi32>
      %cst = arith.constant 0.000000e+00 : f32
      %332 = vector.shape_cast %331 : vector<8x1xi1> to vector<8x1xi1>
      %333 = vector.broadcast %332 : vector<8x1xi1> to vector<8x128xi1>
      %334 = vector.broadcast %cst : f32 to vector<8x128xf32>
      %335 = arith.select %333, %327, %334 : vector<8x128xi1>, vector<8x128xf32>
      %c3_153 = arith.constant 3 : index
      %c24_154 = arith.constant 24 : index
      %c0_155 = arith.constant 0 : index
      %336 = vector.load %arg4[%c3_153, %c24_154, %c0_155] : memref<4x32x128xf32, #tpu.memory_space<vmem>>, vector<1x8x128xf32>
      %337 = vector.shape_cast %336 : vector<1x8x128xf32> to vector<8x128xf32>
      %338 = vector.shape_cast %335 : vector<8x128xf32> to vector<1x8x128xf32>
      tpu.vector_store %arg4[%c3_153, %c24_154, %c0_155], %338 {strides = array<i32>} : memref<4x32x128xf32, #tpu.memory_space<vmem>>, vector<1x8x128xf32>,
    } else {
    }
    return
  }
  func.func @transform_1(%arg0: i32, %arg1: memref<16xi32, #tpu.memory_space<smem>>, %arg2: memref<16xi32, #tpu.memory_space<smem>>) -> (i32, i32, i32) {
    %c0_i32 = arith.constant 0 : i32
    %c0_i32_0 = arith.constant 0 : i32
    %c0_i32_1 = arith.constant 0 : i32
    return %arg0, %c0_i32, %c0_i32_0 : i32, i32, i32
  }
}

</mosaic_0001>

<llo_original>
// kernel: tpu_custom_call.1
$region0: #{tpu_custom_call.1}
  #allocation0 [shape = 'u32[]', space=smem, size = 0x4, offset = 0x4, fixed_abs, tag = 'smem constant byte address 0x4 - core index']
  #allocation1 [shape = 'u32[144,128]{1,0:T(1,128)}', space=vmem, size = 0x12000, scoped, tag = 'internal scratch']
  #allocation2 [shape = 's32[16]{0}', space=sflag, size = 0x40, scoped, tag = 'scratch operand']
  #allocation3 [shape = 's32[1]{0}', space=sflag, size = 0x4, scoped, tag = 'scoped memory for tpu_custom_call.1']
  #allocation4 [shape = 'u8[512]{0}', space=smem, size = 0x200, scoped, tag = 'prefetched SMEM operand 0']
  #allocation5 [shape = 'u8[512]{0}', space=smem, size = 0x200, scoped, tag = 'prefetched SMEM operand 1']
  #allocation8 [shape = 's32[]', space=sflag, size = 0x4, offset = 0, fixed_abs, tag = 'sflag constant byte address 0x0 - dummy sync flag']
  #allocation9 [shape = 's32[]', space=sflag, size = 0x4, offset = 0, fixed_abs, tag = 'sflag constant byte address 0x0 - dummy sync flag']
  #allocation10 [shape = 'u32[]', space=smem, size = 0x4, offset = 0x44, fixed_abs, tag = 'smem constant byte address 0x44 - assertion arg 0']
  #allocation11 [shape = 'u32[]', space=smem, size = 0x4, offset = 0x48, fixed_abs, tag = 'smem constant byte address 0x48 - assertion arg 1']
  #allocation12 [shape = 's32[]', space=sflag, size = 0x4, offset = 0, fixed_abs, tag = 'sflag constant byte address 0x0 - dummy sync flag']
  #allocation13 [shape = 's32[]', space=sflag, size = 0x4, offset = 0, fixed_abs, tag = 'sflag constant byte address 0x0 - dummy sync flag']
  #allocation14 [shape = 's32[]', space=sflag, size = 0x4, offset = 0, fixed_abs, tag = 'sflag constant byte address 0x0 - dummy sync flag']
  #allocation15 [shape = 's32[]', space=sflag, size = 0x4, offset = 0, fixed_abs, tag = 'sflag constant byte address 0x0 - dummy sync flag']
  #allocation16 [shape = 's32[]', space=sflag, size = 0x4, offset = 0, fixed_abs, tag = 'sflag constant byte address 0x0 - dummy sync flag']
  #allocation17 [shape = 's32[]', space=sflag, size = 0x4, offset = 0, fixed_abs, tag = 'sflag constant byte address 0x0 - dummy sync flag']
  #allocation18 [shape = 's32[]', space=sflag, size = 0x4, offset = 0, fixed_abs, tag = 'sflag constant byte address 0x0 - dummy sync flag']
  #allocation19 [shape = 's32[]', space=sflag, size = 0x4, offset = 0, fixed_abs, tag = 'sflag constant byte address 0x0 - dummy sync flag']
  #allocation20 [shape = 's32[]', space=sflag, size = 0x4, offset = 0, fixed_abs, tag = 'sflag constant byte address 0x0 - dummy sync flag']
  #allocation21 [shape = 's32[]', space=sflag, size = 0x4, offset = 0, fixed_abs, tag = 'sflag constant byte address 0x0 - dummy sync flag']
  #allocation22 [shape = 's32[]', space=sflag, size = 0x4, offset = 0, fixed_abs, tag = 'sflag constant byte address 0x0 - dummy sync flag']
  #allocation23 [shape = 's32[]', space=sflag, size = 0x4, offset = 0, fixed_abs, tag = 'sflag constant byte address 0x0 - dummy sync flag']
  #allocation24 [shape = 's32[]', space=sflag, size = 0x4, offset = 0, fixed_abs, tag = 'sflag constant byte address 0x0 - dummy sync flag']
  #allocation25 [shape = 's32[]', space=sflag, size = 0x4, offset = 0, fixed_abs, tag = 'sflag constant byte address 0x0 - dummy sync flag']
  #allocation26 [shape = 's32[]', space=sflag, size = 0x4, offset = 0, fixed_abs, tag = 'sflag constant byte address 0x0 - dummy sync flag']
  #allocation27 [shape = 's32[]', space=sflag, size = 0x4, offset = 0, fixed_abs, tag = 'sflag constant byte address 0x0 - dummy sync flag']
  #allocation28 [shape = 's32[]', space=sflag, size = 0x4, offset = 0, fixed_abs, tag = 'sflag constant byte address 0x0 - dummy sync flag']
  #allocation29 [shape = 's32[]', space=sflag, size = 0x4, offset = 0, fixed_abs, tag = 'sflag constant byte address 0x0 - dummy sync flag']
  #allocation30 [shape = 's32[]', space=sflag, size = 0x4, offset = 0, fixed_abs, tag = 'sflag constant byte address 0x0 - dummy sync flag']
  #allocation31 [shape = 's32[]', space=sflag, size = 0x4, offset = 0, fixed_abs, tag = 'sflag constant byte address 0x0 - dummy sync flag']
  #allocation32 [shape = 's32[]', space=sflag, size = 0x4, offset = 0, fixed_abs, tag = 'sflag constant byte address 0x0 - dummy sync flag']
  #allocation33 [shape = 's32[]', space=sflag, size = 0x4, offset = 0, fixed_abs, tag = 'sflag constant byte address 0x0 - dummy sync flag']
  #allocation34 [shape = 's32[]', space=sflag, size = 0x4, offset = 0, fixed_abs, tag = 'sflag constant byte address 0x0 - dummy sync flag']
  #allocation35 [shape = 's32[]', space=sflag, size = 0x4, offset = 0, fixed_abs, tag = 'sflag constant byte address 0x0 - dummy sync flag']
  #allocation36 [shape = 's32[]', space=sflag, size = 0x4, offset = 0, fixed_abs, tag = 'sflag constant byte address 0x0 - dummy sync flag']
  #allocation37 [shape = 's32[]', space=sflag, size = 0x4, offset = 0, fixed_abs, tag = 'sflag constant byte address 0x0 - dummy sync flag']
  #allocation38 [shape = 's32[]', space=sflag, size = 0x4, offset = 0, fixed_abs, tag = 'sflag constant byte address 0x0 - dummy sync flag']
  #allocation39 [shape = 's32[]', space=sflag, size = 0x4, offset = 0, fixed_abs, tag = 'sflag constant byte address 0x0 - dummy sync flag']
  #allocation40 [shape = 's32[]', space=sflag, size = 0x4, offset = 0, fixed_abs, tag = 'sflag constant byte address 0x0 - dummy sync flag']
  #allocation41 [shape = 's32[]', space=sflag, size = 0x4, offset = 0, fixed_abs, tag = 'sflag constant byte address 0x0 - dummy sync flag']
  %s0 = inlined_call_operand.hbm [shape: s32[16], index: 0, kind: input, shape index: {}]
  %s1 = inlined_call_operand.vmem [shape: s32[16], index: 1, kind: input, shape index: {}]
  %s2 = inlined_call_operand.hbm [shape: f32[224,128], index: 2, kind: input, shape index: {}]
  %s3 = inlined_call_operand.hbm [shape: f32[16,32,128], index: 3, kind: output, shape index: {}]
  %s4 = sld [smem:[#allocation0]]
  $region345: #{tpu_custom_call.1} parent=0
    _
  %s6 = ssub.s32 1, %s4
  %s7 = scalar_select 0, %s6, %s4
  %9 = dma.hbm_to_smem %s0, 16, [#allocation4], [#allocation3]
  %s10 = sshll.u32 %s1, 4
  %s11 = int_to_ptr.vmem [resolvable:$true] %s10
  %13 = dma.vmem_to_smem %s11, 16, [#allocation5], [#allocation3]
  %14 = dma.done [#allocation3], 32
  %15 = sfence
  $region1: #{tpu_custom_call.1} parent=0
    #allocation6 [shape = 'u8[131072]{0}', space=vmem, size = 0x20000, scoped, tag = 'output window, operand 0']
    #allocation7 [shape = 's32[2]{0}', space=sflag, size = 0x8, scoped, tag = 'scoped memory for tpu_custom_call.1']
    %16 = vsyncpa [#allocation7], 0
    %s17 = scalar_lea.sflag [#allocation7], 1
    %18 = vsyncpa %s17, 0
    loop: start=0, step=1, limit=5
    $region2: #{tpu_custom_call.1} parent=1 // loop_pre_header
      _
    $region3: #{tpu_custom_call.1} parent=1 // loop_header
      %s20 = sphi 0, %s24
      %p21 = scmp.ge.s32.totalorder %s20, 5
      %s29 = sphi 0, %s31
      %s32 = sphi 0, %s29
      %s42 = sphi 0, %s32
    $region4: #{tpu_custom_call.1} parent=1 // loop_header_branch
      %23 = sbr.rel (%p21) target = $region8
    $region5: #{tpu_custom_call.1} parent=1 // loop_body
      %s25 = ssub.s32 %s20, 1
      %s26 = sadd.s32 %s20, 1
      %s27 = ssub.s32 %s20, %s26
      %p28 = scmp.eq.s32.totalorder %s27, 0
      %s30 = sadd.s32 %s29, 1
      %s31 = scalar_select %p28, %s29, %s30
      %p33 = pneg %p28
      %p34 = scmp.eq.s32.totalorder %s20, 3
      %p35 = por %p33, %p34
      %p36 = scmp.ne.s32.totalorder %s29, %s32
      %p37 = scmp.eq.s32.totalorder %s20, 0
      %p38 = por %p36, %p37
      %p39 = scmp.ne.s32.totalorder %s29, %s32
      %p40 = scmp.eq.s32.totalorder %s25, 3
      %p41 = por %p39, %p40
      %p43 = scmp.ne.s32.totalorder %s32, %s42
      %p44 = scmp.eq.s32.totalorder %s25, 0
      %p45 = por %p43, %p44
      %p46 = scmp.lt.s32.totalorder %s20, 4
      // Predicated region
      $region9: #{tpu_custom_call.1} parent=5 // pred_check
        %p47 = pneg %p46
      $region10: #{tpu_custom_call.1} parent=5 // pred_check_branch
        %49 = sbr.rel (%p47) target = $region12
      $region11: #{tpu_custom_call.1} parent=5 // pred_region
        %p50 = pneg %p38
        %p51 = pneg %p35
        %s52 = sand.u32 %s29, 1
        %s53 = scalar_lea.sflag [#allocation7], %s52
        %s54 = sand.u32 %s29, 1
        %s55 = smul.addr %s54, 128
        %s56 = scalar_lea.vmem [#allocation6], %s55
        %s57 = smul.u32 4, %s20
        %s58 = smul.u32 %s20, 4
        %s59 = sld [smem:[#allocation4 + %s58]]
        %s60 = sld [smem:[#allocation5 + %s58]]
        %p61 = scmp.lt.s32.totalorder %s58, 16
        %s62 = sadd.s32 %s58, 1
        %s63 = sld [smem:[#allocation4 + %s62]]
        %s64 = sld [smem:[#allocation5 + %s62]]
        %p65 = scmp.lt.s32.totalorder %s62, 16
        %s66 = sadd.s32 %s58, 2
        %s67 = sld [smem:[#allocation4 + %s66]]
        %s68 = sld [smem:[#allocation5 + %s66]]
        %p69 = scmp.lt.s32.totalorder %s66, 16
        %s70 = sadd.s32 %s58, 3
        %s71 = sld [smem:[#allocation4 + %s70]]
        %s72 = sld [smem:[#allocation5 + %s70]]
        %p73 = scmp.lt.s32.totalorder %s70, 16
        %p74 = scmp.gt.s32.totalorder %s60, 0
        %p75 = pnand %p61, %p74
        %p76 = pneg %p75
        // Predicated region
        $region13: #{tpu_custom_call.1} parent=11 // pred_check
          _
        $region14: #{tpu_custom_call.1} parent=11 // pred_check_branch
          %78 = sbr.rel (%p75) target = $region16
        $region15: #{tpu_custom_call.1} parent=11 // pred_region
          %s79 = smul.addr %s59, 16
          %s80 = scalar_lea.hbm %s2, %s79
          // Predicated region
          $region17: #{tpu_custom_call.1} parent=15 // pred_check
            _
          $region18: #{tpu_custom_call.1} parent=15 // pred_check_branch
            %82 = sbr.rel target = $region20
          $region19: #{tpu_custom_call.1} parent=15 // pred_region
            %83 = sst [smem:[#allocation10]] [#allocation9]
            %84 = sst [smem:[#allocation11]] [#allocation8]
          $region20: #{tpu_custom_call.1} parent=15 // pred_fallthru
            _
          %86 = shalt.err (0)
          %s88 = sshll.u32 %s56, 4
          %s89 = int_to_ptr.vmem [resolvable:$true] %s88
          %91 = dma.hbm_to_vmem [thread:$0]  %s80, 128, %s89, [#allocation2]
        $region16: #{tpu_custom_call.1} parent=11 // pred_fallthru
          _
        %p92 = scmp.gt.s32.totalorder %s60, 8
        %p93 = pnand %p61, %p92
        %p94 = pneg %p93
        // Predicated region
        $region21: #{tpu_custom_call.1} parent=11 // pred_check
          _
        $region22: #{tpu_custom_call.1} parent=11 // pred_check_branch
          %96 = sbr.rel (%p93) target = $region24
        $region23: #{tpu_custom_call.1} parent=11 // pred_region
          %s97 = sadd.s32 %s59, 8
          %s98 = smul.addr %s97, 16
          %s99 = scalar_lea.hbm %s2, %s98
          %s100 = scalar_lea.vmem %s56, 8 [#allocation6]
          %s101 = scalar_lea.sflag [#allocation2], 1
          // Predicated region
          $region25: #{tpu_custom_call.1} parent=23 // pred_check
            _
          $region26: #{tpu_custom_call.1} parent=23 // pred_check_branch
            %103 = sbr.rel target = $region28
          $region27: #{tpu_custom_call.1} parent=23 // pred_region
            %104 = sst [smem:[#allocation10]] [#allocation13]
            %105 = sst [smem:[#allocation11]] [#allocation12]
          $region28: #{tpu_custom_call.1} parent=23 // pred_fallthru
            _
          %107 = shalt.err (0)
          %s109 = sshll.u32 %s100, 4
          %s110 = int_to_ptr.vmem [resolvable:$true] %s109
          %112 = dma.hbm_to_vmem [thread:$0]  %s99, 128, %s110, %s101
        $region24: #{tpu_custom_call.1} parent=11 // pred_fallthru
          _
        %p113 = scmp.gt.s32.totalorder %s60, 16
        %p114 = pnand %p61, %p113
        %p115 = pneg %p114
        // Predicated region
        $region29: #{tpu_custom_call.1} parent=11 // pred_check
          _
        $region30: #{tpu_custom_call.1} parent=11 // pred_check_branch
          %117 = sbr.rel (%p114) target = $region32
        $region31: #{tpu_custom_call.1} parent=11 // pred_region
          %s118 = sadd.s32 %s59, 16
          %s119 = smul.addr %s118, 16
          %s120 = scalar_lea.hbm %s2, %s119
          %s121 = scalar_lea.vmem %s56, 16 [#allocation6]
          %s122 = scalar_lea.sflag [#allocation2], 2
          // Predicated region
          $region33: #{tpu_custom_call.1} parent=31 // pred_check
            _
          $region34: #{tpu_custom_call.1} parent=31 // pred_check_branch
            %124 = sbr.rel target = $region36
          $region35: #{tpu_custom_call.1} parent=31 // pred_region
            %125 = sst [smem:[#allocation10]] [#allocation15]
            %126 = sst [smem:[#allocation11]] [#allocation14]
          $region36: #{tpu_custom_call.1} parent=31 // pred_fallthru
            _
          %128 = shalt.err (0)
          %s130 = sshll.u32 %s121, 4
          %s131 = int_to_ptr.vmem [resolvable:$true] %s130
          %133 = dma.hbm_to_vmem [thread:$0]  %s120, 128, %s131, %s122
        $region32: #{tpu_custom_call.1} parent=11 // pred_fallthru
          _
        %p134 = scmp.gt.s32.totalorder %s60, 24
        %p135 = pnand %p61, %p134
        %p136 = pneg %p135
        // Predicated region
        $region37: #{tpu_custom_call.1} parent=11 // pred_check
          _
        $region38: #{tpu_custom_call.1} parent=11 // pred_check_branch
          %138 = sbr.rel (%p135) target = $region40
        $region39: #{tpu_custom_call.1} parent=11 // pred_region
          %s139 = sadd.s32 %s59, 24
          %s140 = smul.addr %s139, 16
          %s141 = scalar_lea.hbm %s2, %s140
          %s142 = scalar_lea.vmem %s56, 24 [#allocation6]
          %s143 = scalar_lea.sflag [#allocation2], 3
          // Predicated region
          $region41: #{tpu_custom_call.1} parent=39 // pred_check
            _
          $region42: #{tpu_custom_call.1} parent=39 // pred_check_branch
            %145 = sbr.rel target = $region44
          $region43: #{tpu_custom_call.1} parent=39 // pred_region
            %146 = sst [smem:[#allocation10]] [#allocation17]
            %147 = sst [smem:[#allocation11]] [#allocation16]
          $region44: #{tpu_custom_call.1} parent=39 // pred_fallthru
            _
          %149 = shalt.err (0)
          %s151 = sshll.u32 %s142, 4
          %s152 = int_to_ptr.vmem [resolvable:$true] %s151
          %154 = dma.hbm_to_vmem [thread:$0]  %s141, 128, %s152, %s143
        $region40: #{tpu_custom_call.1} parent=11 // pred_fallthru
          _
        %p155 = scmp.gt.s32.totalorder %s64, 0
        %p156 = pnand %p65, %p155
        %p157 = pneg %p156
        // Predicated region
        $region45: #{tpu_custom_call.1} parent=11 // pred_check
          _
        $region46: #{tpu_custom_call.1} parent=11 // pred_check_branch
          %159 = sbr.rel (%p156) target = $region48
        $region47: #{tpu_custom_call.1} parent=11 // pred_region
          %s160 = smul.addr %s63, 16
          %s161 = scalar_lea.hbm %s2, %s160
          %s162 = scalar_lea.vmem %s56, 32 [#allocation6]
          %s163 = scalar_lea.sflag [#allocation2], 4
          // Predicated region
          $region49: #{tpu_custom_call.1} parent=47 // pred_check
            _
          $region50: #{tpu_custom_call.1} parent=47 // pred_check_branch
            %165 = sbr.rel target = $region52
          $region51: #{tpu_custom_call.1} parent=47 // pred_region
            %166 = sst [smem:[#allocation10]] [#allocation19]
            %167 = sst [smem:[#allocation11]] [#allocation18]
          $region52: #{tpu_custom_call.1} parent=47 // pred_fallthru
            _
          %169 = shalt.err (0)
          %s171 = sshll.u32 %s162, 4
          %s172 = int_to_ptr.vmem [resolvable:$true] %s171
          %174 = dma.hbm_to_vmem [thread:$0]  %s161, 128, %s172, %s163
        $region48: #{tpu_custom_call.1} parent=11 // pred_fallthru
          _
        %p175 = scmp.gt.s32.totalorder %s64, 8
        %p176 = pnand %p65, %p175
        %p177 = pneg %p176
        // Predicated region
        $region53: #{tpu_custom_call.1} parent=11 // pred_check
          _
        $region54: #{tpu_custom_call.1} parent=11 // pred_check_branch
          %179 = sbr.rel (%p176) target = $region56
        $region55: #{tpu_custom_call.1} parent=11 // pred_region
          %s180 = sadd.s32 %s63, 8
          %s181 = smul.addr %s180, 16
          %s182 = scalar_lea.hbm %s2, %s181
          %s183 = scalar_lea.vmem %s56, 40 [#allocation6]
          %s184 = scalar_lea.sflag [#allocation2], 5
          // Predicated region
          $region57: #{tpu_custom_call.1} parent=55 // pred_check
            _
          $region58: #{tpu_custom_call.1} parent=55 // pred_check_branch
            %186 = sbr.rel target = $region60
          $region59: #{tpu_custom_call.1} parent=55 // pred_region
            %187 = sst [smem:[#allocation10]] [#allocation21]
            %188 = sst [smem:[#allocation11]] [#allocation20]
          $region60: #{tpu_custom_call.1} parent=55 // pred_fallthru
            _
          %190 = shalt.err (0)
          %s192 = sshll.u32 %s183, 4
          %s193 = int_to_ptr.vmem [resolvable:$true] %s192
          %195 = dma.hbm_to_vmem [thread:$0]  %s182, 128, %s193, %s184
        $region56: #{tpu_custom_call.1} parent=11 // pred_fallthru
          _
        %p196 = scmp.gt.s32.totalorder %s64, 16
        %p197 = pnand %p65, %p196
        %p198 = pneg %p197
        // Predicated region
        $region61: #{tpu_custom_call.1} parent=11 // pred_check
          _
        $region62: #{tpu_custom_call.1} parent=11 // pred_check_branch
          %200 = sbr.rel (%p197) target = $region64
        $region63: #{tpu_custom_call.1} parent=11 // pred_region
          %s201 = sadd.s32 %s63, 16
          %s202 = smul.addr %s201, 16
          %s203 = scalar_lea.hbm %s2, %s202
          %s204 = scalar_lea.vmem %s56, 48 [#allocation6]
          %s205 = scalar_lea.sflag [#allocation2], 6
          // Predicated region
          $region65: #{tpu_custom_call.1} parent=63 // pred_check
            _
          $region66: #{tpu_custom_call.1} parent=63 // pred_check_branch
            %207 = sbr.rel target = $region68
          $region67: #{tpu_custom_call.1} parent=63 // pred_region
            %208 = sst [smem:[#allocation10]] [#allocation23]
            %209 = sst [smem:[#allocation11]] [#allocation22]
          $region68: #{tpu_custom_call.1} parent=63 // pred_fallthru
            _
          %211 = shalt.err (0)
          %s213 = sshll.u32 %s204, 4
          %s214 = int_to_ptr.vmem [resolvable:$true] %s213
          %216 = dma.hbm_to_vmem [thread:$0]  %s203, 128, %s214, %s205
        $region64: #{tpu_custom_call.1} parent=11 // pred_fallthru
          _
        %p217 = scmp.gt.s32.totalorder %s64, 24
        %p218 = pnand %p65, %p217
        %p219 = pneg %p218
        // Predicated region
        $region69: #{tpu_custom_call.1} parent=11 // pred_check
          _
        $region70: #{tpu_custom_call.1} parent=11 // pred_check_branch
          %221 = sbr.rel (%p218) target = $region72
        $region71: #{tpu_custom_call.1} parent=11 // pred_region
          %s222 = sadd.s32 %s63, 24
          %s223 = smul.addr %s222, 16
          %s224 = scalar_lea.hbm %s2, %s223
          %s225 = scalar_lea.vmem %s56, 56 [#allocation6]
          %s226 = scalar_lea.sflag [#allocation2], 7
          // Predicated region
          $region73: #{tpu_custom_call.1} parent=71 // pred_check
            _
          $region74: #{tpu_custom_call.1} parent=71 // pred_check_branch
            %228 = sbr.rel target = $region76
          $region75: #{tpu_custom_call.1} parent=71 // pred_region
            %229 = sst [smem:[#allocation10]] [#allocation25]
            %230 = sst [smem:[#allocation11]] [#allocation24]
          $region76: #{tpu_custom_call.1} parent=71 // pred_fallthru
            _
          %232 = shalt.err (0)
          %s234 = sshll.u32 %s225, 4
          %s235 = int_to_ptr.vmem [resolvable:$true] %s234
          %237 = dma.hbm_to_vmem [thread:$0]  %s224, 128, %s235, %s226
        $region72: #{tpu_custom_call.1} parent=11 // pred_fallthru
          _
        %p238 = scmp.gt.s32.totalorder %s68, 0
        %p239 = pnand %p69, %p238
        %p240 = pneg %p239
        // Predicated region
        $region77: #{tpu_custom_call.1} parent=11 // pred_check
          _
        $region78: #{tpu_custom_call.1} parent=11 // pred_check_branch
          %242 = sbr.rel (%p239) target = $region80
        $region79: #{tpu_custom_call.1} parent=11 // pred_region
          %s243 = smul.addr %s67, 16
          %s244 = scalar_lea.hbm %s2, %s243
          %s245 = scalar_lea.vmem %s56, 64 [#allocation6]
          %s246 = scalar_lea.sflag [#allocation2], 8
          // Predicated region
          $region81: #{tpu_custom_call.1} parent=79 // pred_check
            _
          $region82: #{tpu_custom_call.1} parent=79 // pred_check_branch
            %248 = sbr.rel target = $region84
          $region83: #{tpu_custom_call.1} parent=79 // pred_region
            %249 = sst [smem:[#allocation10]] [#allocation27]
            %250 = sst [smem:[#allocation11]] [#allocation26]
          $region84: #{tpu_custom_call.1} parent=79 // pred_fallthru
            _
          %252 = shalt.err (0)
          %s254 = sshll.u32 %s245, 4
          %s255 = int_to_ptr.vmem [resolvable:$true] %s254
          %257 = dma.hbm_to_vmem [thread:$0]  %s244, 128, %s255, %s246
        $region80: #{tpu_custom_call.1} parent=11 // pred_fallthru
          _
        %p258 = scmp.gt.s32.totalorder %s68, 8
        %p259 = pnand %p69, %p258
        %p260 = pneg %p259
        // Predicated region
        $region85: #{tpu_custom_call.1} parent=11 // pred_check
          _
        $region86: #{tpu_custom_call.1} parent=11 // pred_check_branch
          %262 = sbr.rel (%p259) target = $region88
        $region87: #{tpu_custom_call.1} parent=11 // pred_region
          %s263 = sadd.s32 %s67, 8
          %s264 = smul.addr %s263, 16
          %s265 = scalar_lea.hbm %s2, %s264
          %s266 = scalar_lea.vmem %s56, 72 [#allocation6]
          %s267 = scalar_lea.sflag [#allocation2], 9
          // Predicated region
          $region89: #{tpu_custom_call.1} parent=87 // pred_check
            _
          $region90: #{tpu_custom_call.1} parent=87 // pred_check_branch
            %269 = sbr.rel target = $region92
          $region91: #{tpu_custom_call.1} parent=87 // pred_region
            %270 = sst [smem:[#allocation10]] [#allocation29]
            %271 = sst [smem:[#allocation11]] [#allocation28]
          $region92: #{tpu_custom_call.1} parent=87 // pred_fallthru
            _
          %273 = shalt.err (0)
          %s275 = sshll.u32 %s266, 4
          %s276 = int_to_ptr.vmem [resolvable:$true] %s275
          %278 = dma.hbm_to_vmem [thread:$0]  %s265, 128, %s276, %s267
        $region88: #{tpu_custom_call.1} parent=11 // pred_fallthru
          _
        %p279 = scmp.gt.s32.totalorder %s68, 16
        %p280 = pnand %p69, %p279
        %p281 = pneg %p280
        // Predicated region
        $region93: #{tpu_custom_call.1} parent=11 // pred_check
          _
        $region94: #{tpu_custom_call.1} parent=11 // pred_check_branch
          %283 = sbr.rel (%p280) target = $region96
        $region95: #{tpu_custom_call.1} parent=11 // pred_region
          %s284 = sadd.s32 %s67, 16
          %s285 = smul.addr %s284, 16
          %s286 = scalar_lea.hbm %s2, %s285
          %s287 = scalar_lea.vmem %s56, 80 [#allocation6]
          %s288 = scalar_lea.sflag [#allocation2], 10
          // Predicated region
          $region97: #{tpu_custom_call.1} parent=95 // pred_check
            _
          $region98: #{tpu_custom_call.1} parent=95 // pred_check_branch
            %290 = sbr.rel target = $region100
          $region99: #{tpu_custom_call.1} parent=95 // pred_region
            %291 = sst [smem:[#allocation10]] [#allocation31]
            %292 = sst [smem:[#allocation11]] [#allocation30]
          $region100: #{tpu_custom_call.1} parent=95 // pred_fallthru
            _
          %294 = shalt.err (0)
          %s296 = sshll.u32 %s287, 4
          %s297 = int_to_ptr.vmem [resolvable:$true] %s296
          %299 = dma.hbm_to_vmem [thread:$0]  %s286, 128, %s297, %s288
        $region96: #{tpu_custom_call.1} parent=11 // pred_fallthru
          _
        %p300 = scmp.gt.s32.totalorder %s68, 24
        %p301 = pnand %p69, %p300
        %p302 = pneg %p301
        // Predicated region
        $region101: #{tpu_custom_call.1} parent=11 // pred_check
          _
        $region102: #{tpu_custom_call.1} parent=11 // pred_check_branch
          %304 = sbr.rel (%p301) target = $region104
        $region103: #{tpu_custom_call.1} parent=11 // pred_region
          %s305 = sadd.s32 %s67, 24
          %s306 = smul.addr %s305, 16
          %s307 = scalar_lea.hbm %s2, %s306
          %s308 = scalar_lea.vmem %s56, 88 [#allocation6]
          %s309 = scalar_lea.sflag [#allocation2], 11
          // Predicated region
          $region105: #{tpu_custom_call.1} parent=103 // pred_check
            _
          $region106: #{tpu_custom_call.1} parent=103 // pred_check_branch
            %311 = sbr.rel target = $region108
          $region107: #{tpu_custom_call.1} parent=103 // pred_region
            %312 = sst [smem:[#allocation10]] [#allocation33]
            %313 = sst [smem:[#allocation11]] [#allocation32]
          $region108: #{tpu_custom_call.1} parent=103 // pred_fallthru
            _
          %315 = shalt.err (0)
          %s317 = sshll.u32 %s308, 4
          %s318 = int_to_ptr.vmem [resolvable:$true] %s317
          %320 = dma.hbm_to_vmem [thread:$0]  %s307, 128, %s318, %s309
        $region104: #{tpu_custom_call.1} parent=11 // pred_fallthru
          _
        %p321 = scmp.gt.s32.totalorder %s72, 0
        %p322 = pnand %p73, %p321
        %p323 = pneg %p322
        // Predicated region
        $region109: #{tpu_custom_call.1} parent=11 // pred_check
          _
        $region110: #{tpu_custom_call.1} parent=11 // pred_check_branch
          %325 = sbr.rel (%p322) target = $region112
        $region111: #{tpu_custom_call.1} parent=11 // pred_region
          %s326 = smul.addr %s71, 16
          %s327 = scalar_lea.hbm %s2, %s326
          %s328 = scalar_lea.vmem %s56, 96 [#allocation6]
          %s329 = scalar_lea.sflag [#allocation2], 12
          // Predicated region
          $region113: #{tpu_custom_call.1} parent=111 // pred_check
            _
          $region114: #{tpu_custom_call.1} parent=111 // pred_check_branch
            %331 = sbr.rel target = $region116
          $region115: #{tpu_custom_call.1} parent=111 // pred_region
            %332 = sst [smem:[#allocation10]] [#allocation35]
            %333 = sst [smem:[#allocation11]] [#allocation34]
          $region116: #{tpu_custom_call.1} parent=111 // pred_fallthru
            _
          %335 = shalt.err (0)
          %s337 = sshll.u32 %s328, 4
          %s338 = int_to_ptr.vmem [resolvable:$true] %s337
          %340 = dma.hbm_to_vmem [thread:$0]  %s327, 128, %s338, %s329
        $region112: #{tpu_custom_call.1} parent=11 // pred_fallthru
          _
        %p341 = scmp.gt.s32.totalorder %s72, 8
        %p342 = pnand %p73, %p341
        %p343 = pneg %p342
        // Predicated region
        $region117: #{tpu_custom_call.1} parent=11 // pred_check
          _
        $region118: #{tpu_custom_call.1} parent=11 // pred_check_branch
          %345 = sbr.rel (%p342) target = $region120
        $region119: #{tpu_custom_call.1} parent=11 // pred_region
          %s346 = sadd.s32 %s71, 8
          %s347 = smul.addr %s346, 16
          %s348 = scalar_lea.hbm %s2, %s347
          %s349 = scalar_lea.vmem %s56, 104 [#allocation6]
          %s350 = scalar_lea.sflag [#allocation2], 13
          // Predicated region
          $region121: #{tpu_custom_call.1} parent=119 // pred_check
            _
          $region122: #{tpu_custom_call.1} parent=119 // pred_check_branch
            %352 = sbr.rel target = $region124
          $region123: #{tpu_custom_call.1} parent=119 // pred_region
            %353 = sst [smem:[#allocation10]] [#allocation37]
            %354 = sst [smem:[#allocation11]] [#allocation36]
          $region124: #{tpu_custom_call.1} parent=119 // pred_fallthru
            _
          %356 = shalt.err (0)
          %s358 = sshll.u32 %s349, 4
          %s359 = int_to_ptr.vmem [resolvable:$true] %s358
          %361 = dma.hbm_to_vmem [thread:$0]  %s348, 128, %s359, %s350
        $region120: #{tpu_custom_call.1} parent=11 // pred_fallthru
          _
        %p362 = scmp.gt.s32.totalorder %s72, 16
        %p363 = pnand %p73, %p362
        %p364 = pneg %p363
        // Predicated region
        $region125: #{tpu_custom_call.1} parent=11 // pred_check
          _
        $region126: #{tpu_custom_call.1} parent=11 // pred_check_branch
          %366 = sbr.rel (%p363) target = $region128
        $region127: #{tpu_custom_call.1} parent=11 // pred_region
          %s367 = sadd.s32 %s71, 16
          %s368 = smul.addr %s367, 16
          %s369 = scalar_lea.hbm %s2, %s368
          %s370 = scalar_lea.vmem %s56, 112 [#allocation6]
          %s371 = scalar_lea.sflag [#allocation2], 14
          // Predicated region
          $region129: #{tpu_custom_call.1} parent=127 // pred_check
            _
          $region130: #{tpu_custom_call.1} parent=127 // pred_check_branch
            %373 = sbr.rel target = $region132
          $region131: #{tpu_custom_call.1} parent=127 // pred_region
            %374 = sst [smem:[#allocation10]] [#allocation39]
            %375 = sst [smem:[#allocation11]] [#allocation38]
          $region132: #{tpu_custom_call.1} parent=127 // pred_fallthru
            _
          %377 = shalt.err (0)
          %s379 = sshll.u32 %s370, 4
          %s380 = int_to_ptr.vmem [resolvable:$true] %s379
          %382 = dma.hbm_to_vmem [thread:$0]  %s369, 128, %s380, %s371
        $region128: #{tpu_custom_call.1} parent=11 // pred_fallthru
          _
        %p383 = scmp.gt.s32.totalorder %s72, 24
        %p384 = pnand %p73, %p383
        %p385 = pneg %p384
        // Predicated region
        $region133: #{tpu_custom_call.1} parent=11 // pred_check
          _
        $region134: #{tpu_custom_call.1} parent=11 // pred_check_branch
          %387 = sbr.rel (%p384) target = $region136
        $region135: #{tpu_custom_call.1} parent=11 // pred_region
          %s388 = sadd.s32 %s71, 24
          %s389 = smul.addr %s388, 16
          %s390 = scalar_lea.hbm %s2, %s389
          %s391 = scalar_lea.vmem %s56, 120 [#allocation6]
          %s392 = scalar_lea.sflag [#allocation2], 15
          // Predicated region
          $region137: #{tpu_custom_call.1} parent=135 // pred_check
            _
          $region138: #{tpu_custom_call.1} parent=135 // pred_check_branch
            %394 = sbr.rel target = $region140
          $region139: #{tpu_custom_call.1} parent=135 // pred_region
            %395 = sst [smem:[#allocation10]] [#allocation41]
            %396 = sst [smem:[#allocation11]] [#allocation40]
          $region140: #{tpu_custom_call.1} parent=135 // pred_fallthru
            _
          %398 = shalt.err (0)
          %s400 = sshll.u32 %s391, 4
          %s401 = int_to_ptr.vmem [resolvable:$true] %s400
          %403 = dma.hbm_to_vmem [thread:$0]  %s390, 128, %s401, %s392
        $region136: #{tpu_custom_call.1} parent=11 // pred_fallthru
          _
        %v404 = vlaneseq
        %v405 = vshrl.u32 %v404, 7
        // Predicated region
        $region141: #{tpu_custom_call.1} parent=11 // pred_check
          _
        $region142: #{tpu_custom_call.1} parent=11 // pred_check_branch
          %407 = sbr.rel (%p75) target = $region144
        $region143: #{tpu_custom_call.1} parent=11 // pred_region
          %s408 = smul.u32 8, 1
          %s409 = sshll.u32 %s408, 4
          %410 = dma.done [#allocation2], %s409
        $region144: #{tpu_custom_call.1} parent=11 // pred_fallthru
          _
        // Predicated region
        $region145: #{tpu_custom_call.1} parent=11 // pred_check
          _
        $region146: #{tpu_custom_call.1} parent=11 // pred_check_branch
          %412 = sbr.rel (%p93) target = $region148
        $region147: #{tpu_custom_call.1} parent=11 // pred_region
          %s413 = scalar_lea.sflag [#allocation2], 1
          %s414 = smul.u32 8, 1
          %s415 = sshll.u32 %s414, 4
          %416 = dma.done %s413, %s415
        $region148: #{tpu_custom_call.1} parent=11 // pred_fallthru
          _
        // Predicated region
        $region149: #{tpu_custom_call.1} parent=11 // pred_check
          _
        $region150: #{tpu_custom_call.1} parent=11 // pred_check_branch
          %418 = sbr.rel (%p114) target = $region152
        $region151: #{tpu_custom_call.1} parent=11 // pred_region
          %s419 = scalar_lea.sflag [#allocation2], 2
          %s420 = smul.u32 8, 1
          %s421 = sshll.u32 %s420, 4
          %422 = dma.done %s419, %s421
        $region152: #{tpu_custom_call.1} parent=11 // pred_fallthru
          _
        // Predicated region
        $region153: #{tpu_custom_call.1} parent=11 // pred_check
          _
        $region154: #{tpu_custom_call.1} parent=11 // pred_check_branch
          %424 = sbr.rel (%p135) target = $region156
        $region155: #{tpu_custom_call.1} parent=11 // pred_region
          %s425 = scalar_lea.sflag [#allocation2], 3
          %s426 = smul.u32 8, 1
          %s427 = sshll.u32 %s426, 4
          %428 = dma.done %s425, %s427
        $region156: #{tpu_custom_call.1} parent=11 // pred_fallthru
          _
        %p429 = scmp.le.s32.totalorder %s60, 0
        %p430 = pnand %p61, %p429
        %p431 = pneg %p430
        // Predicated region
        $region157: #{tpu_custom_call.1} parent=11 // pred_check
          _
        $region158: #{tpu_custom_call.1} parent=11 // pred_check_branch
          %433 = sbr.rel (%p430) target = $region160
        $region159: #{tpu_custom_call.1} parent=11 // pred_region
          %434 = vst [vmem:[%s56] sm:$0xff] 0.0
        $region160: #{tpu_custom_call.1} parent=11 // pred_fallthru
          _
        %p435 = scmp.lt.s32.totalorder %s60, 8
        %p436 = pnand %p74, %p435
        %p437 = pneg %p436
        %p438 = pnand %p61, %p437
        %p439 = pneg %p438
        // Predicated region
        $region161: #{tpu_custom_call.1} parent=11 // pred_check
          _
        $region162: #{tpu_custom_call.1} parent=11 // pred_check_branch
          %441 = sbr.rel (%p438) target = $region164
        $region163: #{tpu_custom_call.1} parent=11 // pred_region
          %v442 = vld [vmem:[%s56] sm:$0xff]
          %v443 = vstv %s60
          %vm444 = vcmp.lt.s32.totalorder %v405, %v443
          %v445 = vsel %vm444, 1, 0
          %vm446 = vcmp.eq.s32.totalorder %v445, 1
          %v447 = vsel %vm446, %v442, 0.0
          %448 = vst [vmem:[%s56] sm:$0xff] %v447
        $region164: #{tpu_custom_call.1} parent=11 // pred_fallthru
          _
        %p449 = scmp.le.s32.totalorder %s60, 8
        %p450 = pnand %p61, %p449
        %p451 = pneg %p450
        // Predicated region
        $region165: #{tpu_custom_call.1} parent=11 // pred_check
          _
        $region166: #{tpu_custom_call.1} parent=11 // pred_check_branch
          %453 = sbr.rel (%p450) target = $region168
        $region167: #{tpu_custom_call.1} parent=11 // pred_region
          %454 = vst [vmem:[%s56 + $0x8] sm:$0xff] 0.0
        $region168: #{tpu_custom_call.1} parent=11 // pred_fallthru
          _
        %p455 = scmp.lt.s32.totalorder %s60, 16
        %p456 = pnand %p92, %p455
        %p457 = pneg %p456
        %p458 = pnand %p61, %p457
        %p459 = pneg %p458
        // Predicated region
        $region169: #{tpu_custom_call.1} parent=11 // pred_check
          _
        $region170: #{tpu_custom_call.1} parent=11 // pred_check_branch
          %461 = sbr.rel (%p458) target = $region172
        $region171: #{tpu_custom_call.1} parent=11 // pred_region
          %v462 = vld [vmem:[%s56 + $0x8] sm:$0xff]
          %v463 = vadd.s32 %v405, 8
          %v464 = vstv %s60
          %vm465 = vcmp.lt.s32.totalorder %v463, %v464
          %v466 = vsel %vm465, 1, 0
          %vm467 = vcmp.eq.s32.totalorder %v466, 1
          %v468 = vsel %vm467, %v462, 0.0
          %469 = vst [vmem:[%s56 + $0x8] sm:$0xff] %v468
        $region172: #{tpu_custom_call.1} parent=11 // pred_fallthru
          _
        %p470 = scmp.le.s32.totalorder %s60, 16
        %p471 = pnand %p61, %p470
        %p472 = pneg %p471
        // Predicated region
        $region173: #{tpu_custom_call.1} parent=11 // pred_check
          _
        $region174: #{tpu_custom_call.1} parent=11 // pred_check_branch
          %474 = sbr.rel (%p471) target = $region176
        $region175: #{tpu_custom_call.1} parent=11 // pred_region
          %475 = vst [vmem:[%s56 + $0x10] sm:$0xff] 0.0
        $region176: #{tpu_custom_call.1} parent=11 // pred_fallthru
          _
        %p476 = scmp.lt.s32.totalorder %s60, 24
        %p477 = pnand %p113, %p476
        %p478 = pneg %p477
        %p479 = pnand %p61, %p478
        %p480 = pneg %p479
        // Predicated region
        $region177: #{tpu_custom_call.1} parent=11 // pred_check
          _
        $region178: #{tpu_custom_call.1} parent=11 // pred_check_branch
          %482 = sbr.rel (%p479) target = $region180
        $region179: #{tpu_custom_call.1} parent=11 // pred_region
          %v483 = vld [vmem:[%s56 + $0x10] sm:$0xff]
          %v484 = vadd.s32 %v405, 16
          %v485 = vstv %s60
          %vm486 = vcmp.lt.s32.totalorder %v484, %v485
          %v487 = vsel %vm486, 1, 0
          %vm488 = vcmp.eq.s32.totalorder %v487, 1
          %v489 = vsel %vm488, %v483, 0.0
          %490 = vst [vmem:[%s56 + $0x10] sm:$0xff] %v489
        $region180: #{tpu_custom_call.1} parent=11 // pred_fallthru
          _
        %p491 = scmp.le.s32.totalorder %s60, 24
        %p492 = pnand %p61, %p491
        %p493 = pneg %p492
        // Predicated region
        $region181: #{tpu_custom_call.1} parent=11 // pred_check
          _
        $region182: #{tpu_custom_call.1} parent=11 // pred_check_branch
          %495 = sbr.rel (%p492) target = $region184
        $region183: #{tpu_custom_call.1} parent=11 // pred_region
          %496 = vst [vmem:[%s56 + $0x18] sm:$0xff] 0.0
        $region184: #{tpu_custom_call.1} parent=11 // pred_fallthru
          _
        %p497 = scmp.lt.s32.totalorder %s60, 32
        %p498 = pnand %p134, %p497
        %p499 = pneg %p498
        %p500 = pnand %p61, %p499
        %p501 = pneg %p500
        // Predicated region
        $region185: #{tpu_custom_call.1} parent=11 // pred_check
          _
        $region186: #{tpu_custom_call.1} parent=11 // pred_check_branch
          %503 = sbr.rel (%p500) target = $region188
        $region187: #{tpu_custom_call.1} parent=11 // pred_region
          %v504 = vld [vmem:[%s56 + $0x18] sm:$0xff]
          %v505 = vadd.s32 %v405, 24
          %v506 = vstv %s60
          %vm507 = vcmp.lt.s32.totalorder %v505, %v506
          %v508 = vsel %vm507, 1, 0
          %vm509 = vcmp.eq.s32.totalorder %v508, 1
          %v510 = vsel %vm509, %v504, 0.0
          %511 = vst [vmem:[%s56 + $0x18] sm:$0xff] %v510
        $region188: #{tpu_custom_call.1} parent=11 // pred_fallthru
          _
        // Predicated region
        $region189: #{tpu_custom_call.1} parent=11 // pred_check
          _
        $region190: #{tpu_custom_call.1} parent=11 // pred_check_branch
          %513 = sbr.rel (%p156) target = $region192
        $region191: #{tpu_custom_call.1} parent=11 // pred_region
          %s514 = scalar_lea.sflag [#allocation2], 4
          %s515 = smul.u32 8, 1
          %s516 = sshll.u32 %s515, 4
          %517 = dma.done %s514, %s516
        $region192: #{tpu_custom_call.1} parent=11 // pred_fallthru
          _
        // Predicated region
        $region193: #{tpu_custom_call.1} parent=11 // pred_check
          _
        $region194: #{tpu_custom_call.1} parent=11 // pred_check_branch
          %519 = sbr.rel (%p176) target = $region196
        $region195: #{tpu_custom_call.1} parent=11 // pred_region
          %s520 = scalar_lea.sflag [#allocation2], 5
          %s521 = smul.u32 8, 1
          %s522 = sshll.u32 %s521, 4
          %523 = dma.done %s520, %s522
        $region196: #{tpu_custom_call.1} parent=11 // pred_fallthru
          _
        // Predicated region
        $region197: #{tpu_custom_call.1} parent=11 // pred_check
          _
        $region198: #{tpu_custom_call.1} parent=11 // pred_check_branch
          %525 = sbr.rel (%p197) target = $region200
        $region199: #{tpu_custom_call.1} parent=11 // pred_region
          %s526 = scalar_lea.sflag [#allocation2], 6
          %s527 = smul.u32 8, 1
          %s528 = sshll.u32 %s527, 4
          %529 = dma.done %s526, %s528
        $region200: #{tpu_custom_call.1} parent=11 // pred_fallthru
          _
        // Predicated region
        $region201: #{tpu_custom_call.1} parent=11 // pred_check
          _
        $region202: #{tpu_custom_call.1} parent=11 // pred_check_branch
          %531 = sbr.rel (%p218) target = $region204
        $region203: #{tpu_custom_call.1} parent=11 // pred_region
          %s532 = scalar_lea.sflag [#allocation2], 7
          %s533 = smul.u32 8, 1
          %s534 = sshll.u32 %s533, 4
          %535 = dma.done %s532, %s534
        $region204: #{tpu_custom_call.1} parent=11 // pred_fallthru
          _
        %p536 = scmp.le.s32.totalorder %s64, 0
        %p537 = pnand %p65, %p536
        %p538 = pneg %p537
        // Predicated region
        $region205: #{tpu_custom_call.1} parent=11 // pred_check
          _
        $region206: #{tpu_custom_call.1} parent=11 // pred_check_branch
          %540 = sbr.rel (%p537) target = $region208
        $region207: #{tpu_custom_call.1} parent=11 // pred_region
          %s541 = scalar_lea.vmem %s56, 32 [#allocation6]
          %542 = vst [vmem:[%s541] sm:$0xff] 0.0
        $region208: #{tpu_custom_call.1} parent=11 // pred_fallthru
          _
        %p543 = scmp.lt.s32.totalorder %s64, 8
        %p544 = pnand %p155, %p543
        %p545 = pneg %p544
        %p546 = pnand %p65, %p545
        %p547 = pneg %p546
        // Predicated region
        $region209: #{tpu_custom_call.1} parent=11 // pred_check
          _
        $region210: #{tpu_custom_call.1} parent=11 // pred_check_branch
          %549 = sbr.rel (%p546) target = $region212
        $region211: #{tpu_custom_call.1} parent=11 // pred_region
          %s550 = scalar_lea.vmem %s56, 32 [#allocation6]
          %v551 = vld [vmem:[%s550] sm:$0xff]
          %v552 = vstv %s64
          %vm553 = vcmp.lt.s32.totalorder %v405, %v552
          %v554 = vsel %vm553, 1, 0
          %vm555 = vcmp.eq.s32.totalorder %v554, 1
          %v556 = vsel %vm555, %v551, 0.0
          %557 = vst [vmem:[%s550] sm:$0xff] %v556
        $region212: #{tpu_custom_call.1} parent=11 // pred_fallthru
          _
        %p558 = scmp.le.s32.totalorder %s64, 8
        %p559 = pnand %p65, %p558
        %p560 = pneg %p559
        // Predicated region
        $region213: #{tpu_custom_call.1} parent=11 // pred_check
          _
        $region214: #{tpu_custom_call.1} parent=11 // pred_check_branch
          %562 = sbr.rel (%p559) target = $region216
        $region215: #{tpu_custom_call.1} parent=11 // pred_region
          %s563 = scalar_lea.vmem %s56, 32 [#allocation6]
          %564 = vst [vmem:[%s563 + $0x8] sm:$0xff] 0.0
        $region216: #{tpu_custom_call.1} parent=11 // pred_fallthru
          _
        %p565 = scmp.lt.s32.totalorder %s64, 16
        %p566 = pnand %p175, %p565
        %p567 = pneg %p566
        %p568 = pnand %p65, %p567
        %p569 = pneg %p568
        // Predicated region
        $region217: #{tpu_custom_call.1} parent=11 // pred_check
          _
        $region218: #{tpu_custom_call.1} parent=11 // pred_check_branch
          %571 = sbr.rel (%p568) target = $region220
        $region219: #{tpu_custom_call.1} parent=11 // pred_region
          %s572 = scalar_lea.vmem %s56, 32 [#allocation6]
          %v573 = vld [vmem:[%s572 + $0x8] sm:$0xff]
          %v574 = vadd.s32 %v405, 8
          %v575 = vstv %s64
          %vm576 = vcmp.lt.s32.totalorder %v574, %v575
          %v577 = vsel %vm576, 1, 0
          %vm578 = vcmp.eq.s32.totalorder %v577, 1
          %v579 = vsel %vm578, %v573, 0.0
          %580 = vst [vmem:[%s572 + $0x8] sm:$0xff] %v579
        $region220: #{tpu_custom_call.1} parent=11 // pred_fallthru
          _
        %p581 = scmp.le.s32.totalorder %s64, 16
        %p582 = pnand %p65, %p581
        %p583 = pneg %p582
        // Predicated region
        $region221: #{tpu_custom_call.1} parent=11 // pred_check
          _
        $region222: #{tpu_custom_call.1} parent=11 // pred_check_branch
          %585 = sbr.rel (%p582) target = $region224
        $region223: #{tpu_custom_call.1} parent=11 // pred_region
          %s586 = scalar_lea.vmem %s56, 32 [#allocation6]
          %587 = vst [vmem:[%s586 + $0x10] sm:$0xff] 0.0
        $region224: #{tpu_custom_call.1} parent=11 // pred_fallthru
          _
        %p588 = scmp.lt.s32.totalorder %s64, 24
        %p589 = pnand %p196, %p588
        %p590 = pneg %p589
        %p591 = pnand %p65, %p590
        %p592 = pneg %p591
        // Predicated region
        $region225: #{tpu_custom_call.1} parent=11 // pred_check
          _
        $region226: #{tpu_custom_call.1} parent=11 // pred_check_branch
          %594 = sbr.rel (%p591) target = $region228
        $region227: #{tpu_custom_call.1} parent=11 // pred_region
          %s595 = scalar_lea.vmem %s56, 32 [#allocation6]
          %v596 = vld [vmem:[%s595 + $0x10] sm:$0xff]
          %v597 = vadd.s32 %v405, 16
          %v598 = vstv %s64
          %vm599 = vcmp.lt.s32.totalorder %v597, %v598
          %v600 = vsel %vm599, 1, 0
          %vm601 = vcmp.eq.s32.totalorder %v600, 1
          %v602 = vsel %vm601, %v596, 0.0
          %603 = vst [vmem:[%s595 + $0x10] sm:$0xff] %v602
        $region228: #{tpu_custom_call.1} parent=11 // pred_fallthru
          _
        %p604 = scmp.le.s32.totalorder %s64, 24
        %p605 = pnand %p65, %p604
        %p606 = pneg %p605
        // Predicated region
        $region229: #{tpu_custom_call.1} parent=11 // pred_check
          _
        $region230: #{tpu_custom_call.1} parent=11 // pred_check_branch
          %608 = sbr.rel (%p605) target = $region232
        $region231: #{tpu_custom_call.1} parent=11 // pred_region
          %s609 = scalar_lea.vmem %s56, 32 [#allocation6]
          %610 = vst [vmem:[%s609 + $0x18] sm:$0xff] 0.0
        $region232: #{tpu_custom_call.1} parent=11 // pred_fallthru
          _
        %p611 = scmp.lt.s32.totalorder %s64, 32
        %p612 = pnand %p217, %p611
        %p613 = pneg %p612
        %p614 = pnand %p65, %p613
        %p615 = pneg %p614
        // Predicated region
        $region233: #{tpu_custom_call.1} parent=11 // pred_check
          _
        $region234: #{tpu_custom_call.1} parent=11 // pred_check_branch
          %617 = sbr.rel (%p614) target = $region236
        $region235: #{tpu_custom_call.1} parent=11 // pred_region
          %s618 = scalar_lea.vmem %s56, 32 [#allocation6]
          %v619 = vld [vmem:[%s618 + $0x18] sm:$0xff]
          %v620 = vadd.s32 %v405, 24
          %v621 = vstv %s64
          %vm622 = vcmp.lt.s32.totalorder %v620, %v621
          %v623 = vsel %vm622, 1, 0
          %vm624 = vcmp.eq.s32.totalorder %v623, 1
          %v625 = vsel %vm624, %v619, 0.0
          %626 = vst [vmem:[%s618 + $0x18] sm:$0xff] %v625
        $region236: #{tpu_custom_call.1} parent=11 // pred_fallthru
          _
        // Predicated region
        $region237: #{tpu_custom_call.1} parent=11 // pred_check
          _
        $region238: #{tpu_custom_call.1} parent=11 // pred_check_branch
          %628 = sbr.rel (%p239) target = $region240
        $region239: #{tpu_custom_call.1} parent=11 // pred_region
          %s629 = scalar_lea.sflag [#allocation2], 8
          %s630 = smul.u32 8, 1
          %s631 = sshll.u32 %s630, 4
          %632 = dma.done %s629, %s631
        $region240: #{tpu_custom_call.1} parent=11 // pred_fallthru
          _
        // Predicated region
        $region241: #{tpu_custom_call.1} parent=11 // pred_check
          _
        $region242: #{tpu_custom_call.1} parent=11 // pred_check_branch
          %634 = sbr.rel (%p259) target = $region244
        $region243: #{tpu_custom_call.1} parent=11 // pred_region
          %s635 = scalar_lea.sflag [#allocation2], 9
          %s636 = smul.u32 8, 1
          %s637 = sshll.u32 %s636, 4
          %638 = dma.done %s635, %s637
        $region244: #{tpu_custom_call.1} parent=11 // pred_fallthru
          _
        // Predicated region
        $region245: #{tpu_custom_call.1} parent=11 // pred_check
          _
        $region246: #{tpu_custom_call.1} parent=11 // pred_check_branch
          %640 = sbr.rel (%p280) target = $region248
        $region247: #{tpu_custom_call.1} parent=11 // pred_region
          %s641 = scalar_lea.sflag [#allocation2], 10
          %s642 = smul.u32 8, 1
          %s643 = sshll.u32 %s642, 4
          %644 = dma.done %s641, %s643
        $region248: #{tpu_custom_call.1} parent=11 // pred_fallthru
          _
        // Predicated region
        $region249: #{tpu_custom_call.1} parent=11 // pred_check
          _
        $region250: #{tpu_custom_call.1} parent=11 // pred_check_branch
          %646 = sbr.rel (%p301) target = $region252
        $region251: #{tpu_custom_call.1} parent=11 // pred_region
          %s647 = scalar_lea.sflag [#allocation2], 11
          %s648 = smul.u32 8, 1
          %s649 = sshll.u32 %s648, 4
          %650 = dma.done %s647, %s649
        $region252: #{tpu_custom_call.1} parent=11 // pred_fallthru
          _
        %p651 = scmp.le.s32.totalorder %s68, 0
        %p652 = pnand %p69, %p651
        %p653 = pneg %p652
        // Predicated region
        $region253: #{tpu_custom_call.1} parent=11 // pred_check
          _
        $region254: #{tpu_custom_call.1} parent=11 // pred_check_branch
          %655 = sbr.rel (%p652) target = $region256
        $region255: #{tpu_custom_call.1} parent=11 // pred_region
          %s656 = scalar_lea.vmem %s56, 64 [#allocation6]
          %657 = vst [vmem:[%s656] sm:$0xff] 0.0
        $region256: #{tpu_custom_call.1} parent=11 // pred_fallthru
          _
        %p658 = scmp.lt.s32.totalorder %s68, 8
        %p659 = pnand %p238, %p658
        %p660 = pneg %p659
        %p661 = pnand %p69, %p660
        %p662 = pneg %p661
        // Predicated region
        $region257: #{tpu_custom_call.1} parent=11 // pred_check
          _
        $region258: #{tpu_custom_call.1} parent=11 // pred_check_branch
          %664 = sbr.rel (%p661) target = $region260
        $region259: #{tpu_custom_call.1} parent=11 // pred_region
          %s665 = scalar_lea.vmem %s56, 64 [#allocation6]
          %v666 = vld [vmem:[%s665] sm:$0xff]
          %v667 = vstv %s68
          %vm668 = vcmp.lt.s32.totalorder %v405, %v667
          %v669 = vsel %vm668, 1, 0
          %vm670 = vcmp.eq.s32.totalorder %v669, 1
          %v671 = vsel %vm670, %v666, 0.0
          %672 = vst [vmem:[%s665] sm:$0xff] %v671
        $region260: #{tpu_custom_call.1} parent=11 // pred_fallthru
          _
        %p673 = scmp.le.s32.totalorder %s68, 8
        %p674 = pnand %p69, %p673
        %p675 = pneg %p674
        // Predicated region
        $region261: #{tpu_custom_call.1} parent=11 // pred_check
          _
        $region262: #{tpu_custom_call.1} parent=11 // pred_check_branch
          %677 = sbr.rel (%p674) target = $region264
        $region263: #{tpu_custom_call.1} parent=11 // pred_region
          %s678 = scalar_lea.vmem %s56, 64 [#allocation6]
          %679 = vst [vmem:[%s678 + $0x8] sm:$0xff] 0.0
        $region264: #{tpu_custom_call.1} parent=11 // pred_fallthru
          _
        %p680 = scmp.lt.s32.totalorder %s68, 16
        %p681 = pnand %p258, %p680
        %p682 = pneg %p681
        %p683 = pnand %p69, %p682
        %p684 = pneg %p683
        // Predicated region
        $region265: #{tpu_custom_call.1} parent=11 // pred_check
          _
        $region266: #{tpu_custom_call.1} parent=11 // pred_check_branch
          %686 = sbr.rel (%p683) target = $region268
        $region267: #{tpu_custom_call.1} parent=11 // pred_region
          %s687 = scalar_lea.vmem %s56, 64 [#allocation6]
          %v688 = vld [vmem:[%s687 + $0x8] sm:$0xff]
          %v689 = vadd.s32 %v405, 8
          %v690 = vstv %s68
          %vm691 = vcmp.lt.s32.totalorder %v689, %v690
          %v692 = vsel %vm691, 1, 0
          %vm693 = vcmp.eq.s32.totalorder %v692, 1
          %v694 = vsel %vm693, %v688, 0.0
          %695 = vst [vmem:[%s687 + $0x8] sm:$0xff] %v694
        $region268: #{tpu_custom_call.1} parent=11 // pred_fallthru
          _
        %p696 = scmp.le.s32.totalorder %s68, 16
        %p697 = pnand %p69, %p696
        %p698 = pneg %p697
        // Predicated region
        $region269: #{tpu_custom_call.1} parent=11 // pred_check
          _
        $region270: #{tpu_custom_call.1} parent=11 // pred_check_branch
          %700 = sbr.rel (%p697) target = $region272
        $region271: #{tpu_custom_call.1} parent=11 // pred_region
          %s701 = scalar_lea.vmem %s56, 64 [#allocation6]
          %702 = vst [vmem:[%s701 + $0x10] sm:$0xff] 0.0
        $region272: #{tpu_custom_call.1} parent=11 // pred_fallthru
          _
        %p703 = scmp.lt.s32.totalorder %s68, 24
        %p704 = pnand %p279, %p703
        %p705 = pneg %p704
        %p706 = pnand %p69, %p705
        %p707 = pneg %p706
        // Predicated region
        $region273: #{tpu_custom_call.1} parent=11 // pred_check
          _
        $region274: #{tpu_custom_call.1} parent=11 // pred_check_branch
          %709 = sbr.rel (%p706) target = $region276
        $region275: #{tpu_custom_call.1} parent=11 // pred_region
          %s710 = scalar_lea.vmem %s56, 64 [#allocation6]
          %v711 = vld [vmem:[%s710 + $0x10] sm:$0xff]
          %v712 = vadd.s32 %v405, 16
          %v713 = vstv %s68
          %vm714 = vcmp.lt.s32.totalorder %v712, %v713
          %v715 = vsel %vm714, 1, 0
          %vm716 = vcmp.eq.s32.totalorder %v715, 1
          %v717 = vsel %vm716, %v711, 0.0
          %718 = vst [vmem:[%s710 + $0x10] sm:$0xff] %v717
        $region276: #{tpu_custom_call.1} parent=11 // pred_fallthru
          _
        %p719 = scmp.le.s32.totalorder %s68, 24
        %p720 = pnand %p69, %p719
        %p721 = pneg %p720
        // Predicated region
        $region277: #{tpu_custom_call.1} parent=11 // pred_check
          _
        $region278: #{tpu_custom_call.1} parent=11 // pred_check_branch
          %723 = sbr.rel (%p720) target = $region280
        $region279: #{tpu_custom_call.1} parent=11 // pred_region
          %s724 = scalar_lea.vmem %s56, 64 [#allocation6]
          %725 = vst [vmem:[%s724 + $0x18] sm:$0xff] 0.0
        $region280: #{tpu_custom_call.1} parent=11 // pred_fallthru
          _
        %p726 = scmp.lt.s32.totalorder %s68, 32
        %p727 = pnand %p300, %p726
        %p728 = pneg %p727
        %p729 = pnand %p69, %p728
        %p730 = pneg %p729
        // Predicated region
        $region281: #{tpu_custom_call.1} parent=11 // pred_check
          _
        $region282: #{tpu_custom_call.1} parent=11 // pred_check_branch
          %732 = sbr.rel (%p729) target = $region284
        $region283: #{tpu_custom_call.1} parent=11 // pred_region
          %s733 = scalar_lea.vmem %s56, 64 [#allocation6]
          %v734 = vld [vmem:[%s733 + $0x18] sm:$0xff]
          %v735 = vadd.s32 %v405, 24
          %v736 = vstv %s68
          %vm737 = vcmp.lt.s32.totalorder %v735, %v736
          %v738 = vsel %vm737, 1, 0
          %vm739 = vcmp.eq.s32.totalorder %v738, 1
          %v740 = vsel %vm739, %v734, 0.0
          %741 = vst [vmem:[%s733 + $0x18] sm:$0xff] %v740
        $region284: #{tpu_custom_call.1} parent=11 // pred_fallthru
          _
        // Predicated region
        $region285: #{tpu_custom_call.1} parent=11 // pred_check
          _
        $region286: #{tpu_custom_call.1} parent=11 // pred_check_branch
          %743 = sbr.rel (%p322) target = $region288
        $region287: #{tpu_custom_call.1} parent=11 // pred_region
          %s744 = scalar_lea.sflag [#allocation2], 12
          %s745 = smul.u32 8, 1
          %s746 = sshll.u32 %s745, 4
          %747 = dma.done %s744, %s746
        $region288: #{tpu_custom_call.1} parent=11 // pred_fallthru
          _
        // Predicated region
        $region289: #{tpu_custom_call.1} parent=11 // pred_check
          _
        $region290: #{tpu_custom_call.1} parent=11 // pred_check_branch
          %749 = sbr.rel (%p342) target = $region292
        $region291: #{tpu_custom_call.1} parent=11 // pred_region
          %s750 = scalar_lea.sflag [#allocation2], 13
          %s751 = smul.u32 8, 1
          %s752 = sshll.u32 %s751, 4
          %753 = dma.done %s750, %s752
        $region292: #{tpu_custom_call.1} parent=11 // pred_fallthru
          _
        // Predicated region
        $region293: #{tpu_custom_call.1} parent=11 // pred_check
          _
        $region294: #{tpu_custom_call.1} parent=11 // pred_check_branch
          %755 = sbr.rel (%p363) target = $region296
        $region295: #{tpu_custom_call.1} parent=11 // pred_region
          %s756 = scalar_lea.sflag [#allocation2], 14
          %s757 = smul.u32 8, 1
          %s758 = sshll.u32 %s757, 4
          %759 = dma.done %s756, %s758
        $region296: #{tpu_custom_call.1} parent=11 // pred_fallthru
          _
        // Predicated region
        $region297: #{tpu_custom_call.1} parent=11 // pred_check
          _
        $region298: #{tpu_custom_call.1} parent=11 // pred_check_branch
          %761 = sbr.rel (%p384) target = $region300
        $region299: #{tpu_custom_call.1} parent=11 // pred_region
          %s762 = scalar_lea.sflag [#allocation2], 15
          %s763 = smul.u32 8, 1
          %s764 = sshll.u32 %s763, 4
          %765 = dma.done %s762, %s764
        $region300: #{tpu_custom_call.1} parent=11 // pred_fallthru
          _
        %p766 = scmp.le.s32.totalorder %s72, 0
        %p767 = pnand %p73, %p766
        %p768 = pneg %p767
        // Predicated region
        $region301: #{tpu_custom_call.1} parent=11 // pred_check
          _
        $region302: #{tpu_custom_call.1} parent=11 // pred_check_branch
          %770 = sbr.rel (%p767) target = $region304
        $region303: #{tpu_custom_call.1} parent=11 // pred_region
          %s771 = scalar_lea.vmem %s56, 96 [#allocation6]
          %772 = vst [vmem:[%s771] sm:$0xff] 0.0
        $region304: #{tpu_custom_call.1} parent=11 // pred_fallthru
          _
        %p773 = scmp.lt.s32.totalorder %s72, 8
        %p774 = pnand %p321, %p773
        %p775 = pneg %p774
        %p776 = pnand %p73, %p775
        %p777 = pneg %p776
        // Predicated region
        $region305: #{tpu_custom_call.1} parent=11 // pred_check
          _
        $region306: #{tpu_custom_call.1} parent=11 // pred_check_branch
          %779 = sbr.rel (%p776) target = $region308
        $region307: #{tpu_custom_call.1} parent=11 // pred_region
          %s780 = scalar_lea.vmem %s56, 96 [#allocation6]
          %v781 = vld [vmem:[%s780] sm:$0xff]
          %v782 = vstv %s72
          %vm783 = vcmp.lt.s32.totalorder %v405, %v782
          %v784 = vsel %vm783, 1, 0
          %vm785 = vcmp.eq.s32.totalorder %v784, 1
          %v786 = vsel %vm785, %v781, 0.0
          %787 = vst [vmem:[%s780] sm:$0xff] %v786
        $region308: #{tpu_custom_call.1} parent=11 // pred_fallthru
          _
        %p788 = scmp.le.s32.totalorder %s72, 8
        %p789 = pnand %p73, %p788
        %p790 = pneg %p789
        // Predicated region
        $region309: #{tpu_custom_call.1} parent=11 // pred_check
          _
        $region310: #{tpu_custom_call.1} parent=11 // pred_check_branch
          %792 = sbr.rel (%p789) target = $region312
        $region311: #{tpu_custom_call.1} parent=11 // pred_region
          %s793 = scalar_lea.vmem %s56, 96 [#allocation6]
          %794 = vst [vmem:[%s793 + $0x8] sm:$0xff] 0.0
        $region312: #{tpu_custom_call.1} parent=11 // pred_fallthru
          _
        %p795 = scmp.lt.s32.totalorder %s72, 16
        %p796 = pnand %p341, %p795
        %p797 = pneg %p796
        %p798 = pnand %p73, %p797
        %p799 = pneg %p798
        // Predicated region
        $region313: #{tpu_custom_call.1} parent=11 // pred_check
          _
        $region314: #{tpu_custom_call.1} parent=11 // pred_check_branch
          %801 = sbr.rel (%p798) target = $region316
        $region315: #{tpu_custom_call.1} parent=11 // pred_region
          %s802 = scalar_lea.vmem %s56, 96 [#allocation6]
          %v803 = vld [vmem:[%s802 + $0x8] sm:$0xff]
          %v804 = vadd.s32 %v405, 8
          %v805 = vstv %s72
          %vm806 = vcmp.lt.s32.totalorder %v804, %v805
          %v807 = vsel %vm806, 1, 0
          %vm808 = vcmp.eq.s32.totalorder %v807, 1
          %v809 = vsel %vm808, %v803, 0.0
          %810 = vst [vmem:[%s802 + $0x8] sm:$0xff] %v809
        $region316: #{tpu_custom_call.1} parent=11 // pred_fallthru
          _
        %p811 = scmp.le.s32.totalorder %s72, 16
        %p812 = pnand %p73, %p811
        %p813 = pneg %p812
        // Predicated region
        $region317: #{tpu_custom_call.1} parent=11 // pred_check
          _
        $region318: #{tpu_custom_call.1} parent=11 // pred_check_branch
          %815 = sbr.rel (%p812) target = $region320
        $region319: #{tpu_custom_call.1} parent=11 // pred_region
          %s816 = scalar_lea.vmem %s56, 96 [#allocation6]
          %817 = vst [vmem:[%s816 + $0x10] sm:$0xff] 0.0
        $region320: #{tpu_custom_call.1} parent=11 // pred_fallthru
          _
        %p818 = scmp.lt.s32.totalorder %s72, 24
        %p819 = pnand %p362, %p818
        %p820 = pneg %p819
        %p821 = pnand %p73, %p820
        %p822 = pneg %p821
        // Predicated region
        $region321: #{tpu_custom_call.1} parent=11 // pred_check
          _
        $region322: #{tpu_custom_call.1} parent=11 // pred_check_branch
          %824 = sbr.rel (%p821) target = $region324
        $region323: #{tpu_custom_call.1} parent=11 // pred_region
          %s825 = scalar_lea.vmem %s56, 96 [#allocation6]
          %v826 = vld [vmem:[%s825 + $0x10] sm:$0xff]
          %v827 = vadd.s32 %v405, 16
          %v828 = vstv %s72
          %vm829 = vcmp.lt.s32.totalorder %v827, %v828
          %v830 = vsel %vm829, 1, 0
          %vm831 = vcmp.eq.s32.totalorder %v830, 1
          %v832 = vsel %vm831, %v826, 0.0
          %833 = vst [vmem:[%s825 + $0x10] sm:$0xff] %v832
        $region324: #{tpu_custom_call.1} parent=11 // pred_fallthru
          _
        %p834 = scmp.le.s32.totalorder %s72, 24
        %p835 = pnand %p73, %p834
        %p836 = pneg %p835
        // Predicated region
        $region325: #{tpu_custom_call.1} parent=11 // pred_check
          _
        $region326: #{tpu_custom_call.1} parent=11 // pred_check_branch
          %838 = sbr.rel (%p835) target = $region328
        $region327: #{tpu_custom_call.1} parent=11 // pred_region
          %s839 = scalar_lea.vmem %s56, 96 [#allocation6]
          %840 = vst [vmem:[%s839 + $0x18] sm:$0xff] 0.0
        $region328: #{tpu_custom_call.1} parent=11 // pred_fallthru
          _
        %p841 = scmp.lt.s32.totalorder %s72, 32
        %p842 = pnand %p383, %p841
        %p843 = pneg %p842
        %p844 = pnand %p73, %p843
        %p845 = pneg %p844
        // Predicated region
        $region329: #{tpu_custom_call.1} parent=11 // pred_check
          _
        $region330: #{tpu_custom_call.1} parent=11 // pred_check_branch
          %847 = sbr.rel (%p844) target = $region332
        $region331: #{tpu_custom_call.1} parent=11 // pred_region
          %s848 = scalar_lea.vmem %s56, 96 [#allocation6]
          %v849 = vld [vmem:[%s848 + $0x18] sm:$0xff]
          %v850 = vadd.s32 %v405, 24
          %v851 = vstv %s72
          %vm852 = vcmp.lt.s32.totalorder %v850, %v851
          %v853 = vsel %vm852, 1, 0
          %vm854 = vcmp.eq.s32.totalorder %v853, 1
          %v855 = vsel %vm854, %v849, 0.0
          %856 = vst [vmem:[%s848 + $0x18] sm:$0xff] %v855
        $region332: #{tpu_custom_call.1} parent=11 // pred_fallthru
          _
        %s857 = sand.u32 %s29, 1
        %s858 = scalar_lea.sflag [#allocation7], %s857
        %s859 = sand.u32 %s29, 1
        %s860 = smul.addr %s859, 128
        %s861 = scalar_lea.vmem [#allocation6], %s860
        // Predicated region
        $region333: #{tpu_custom_call.1} parent=11 // pred_check
          %p862 = pneg %p35
        $region334: #{tpu_custom_call.1} parent=11 // pred_check_branch
          %864 = sbr.rel (%p862) target = $region336
        $region335: #{tpu_custom_call.1} parent=11 // pred_region
          %s865 = smul.u32 4, %s20
          %s867 = ssub.s32 2048, 2048
          %868 = vsyncadd %s858, %s867
          %s869 = smul.addr %s865, 4
          %s870 = smul.addr %s869, 128
          %s871 = scalar_lea.hbm %s3, %s870
          %s872 = sshll.u32 %s861, 4
          %s873 = int_to_ptr.vmem [resolvable:$true] %s872
          %878 = dma.vmem_to_hbm [thread:$0]  %s873, 2048, %s871, %s858, 128, 128, 8
        $region336: #{tpu_custom_call.1} parent=11 // pred_fallthru
          _
      $region12: #{tpu_custom_call.1} parent=5 // pred_fallthru
        _
      %p879 = scmp.le.s32.totalorder 1, %s20
      // Predicated region
      $region337: #{tpu_custom_call.1} parent=5 // pred_check
        %p880 = pneg %p879
      $region338: #{tpu_custom_call.1} parent=5 // pred_check_branch
        %882 = sbr.rel (%p880) target = $region340
      $region339: #{tpu_custom_call.1} parent=5 // pred_region
        %s883 = ssub.s32 %s20, 1
        // Predicated region
        $region341: #{tpu_custom_call.1} parent=339 // pred_check
          %p884 = pneg %p41
        $region342: #{tpu_custom_call.1} parent=339 // pred_check_branch
          %886 = sbr.rel (%p884) target = $region344
        $region343: #{tpu_custom_call.1} parent=339 // pred_region
          %s887 = sand.u32 %s32, 1
          %s888 = scalar_lea.sflag [#allocation7], %s887
          %s889 = sand.u32 %s32, 1
          %s890 = smul.addr %s889, 128
          %s891 = scalar_lea.vmem [#allocation6], %s890
          %892 = dma.done %s888, 2048
        $region344: #{tpu_custom_call.1} parent=339 // pred_fallthru
          _
      $region340: #{tpu_custom_call.1} parent=5 // pred_fallthru
        _
    $region6: #{tpu_custom_call.1} parent=1 // loop_footer
      %s24 = sadd.s32 1, %s20
    $region7: #{tpu_custom_call.1} parent=1 // loop_footer_branch
      %19 = sbr.rel target = $region3
    $region8: #{tpu_custom_call.1} parent=1 // loop_exit
      _
    %893 = vsyncpa [#allocation7], 1
    %s894 = scalar_lea.sflag [#allocation7], 1
    %895 = vsyncpa %s894, 1
  %896 = vsyncmov [#allocation2]
  %s897 = vpop.sfrf %896
  %p898 = scmp.eq.s32.totalorder %s897, 0
  %p899 = pneg %p898
  %901 = shalt.err (%p899)
  %s902 = scalar_lea.sflag [#allocation2], 1
  %903 = vsyncmov %s902
  %s904 = vpop.sfrf %903
  %p905 = scmp.eq.s32.totalorder %s904, 0
  %p906 = pneg %p905
  %908 = shalt.err (%p906)
  %s909 = scalar_lea.sflag [#allocation2], 2
  %910 = vsyncmov %s909
  %s911 = vpop.sfrf %910
  %p912 = scmp.eq.s32.totalorder %s911, 0
  %p913 = pneg %p912
  %915 = shalt.err (%p913)
  %s916 = scalar_lea.sflag [#allocation2], 3
  %917 = vsyncmov %s916
  %s918 = vpop.sfrf %917
  %p919 = scmp.eq.s32.totalorder %s918, 0
  %p920 = pneg %p919
  %922 = shalt.err (%p920)
  %s923 = scalar_lea.sflag [#allocation2], 4
  %924 = vsyncmov %s923
  %s925 = vpop.sfrf %924
  %p926 = scmp.eq.s32.totalorder %s925, 0
  %p927 = pneg %p926
  %929 = shalt.err (%p927)
  %s930 = scalar_lea.sflag [#allocation2], 5
  %931 = vsyncmov %s930
  %s932 = vpop.sfrf %931
  %p933 = scmp.eq.s32.totalorder %s932, 0
  %p934 = pneg %p933
  %936 = shalt.err (%p934)
  %s937 = scalar_lea.sflag [#allocation2], 6
  %938 = vsyncmov %s937
  %s939 = vpop.sfrf %938
  %p940 = scmp.eq.s32.totalorder %s939, 0
  %p941 = pneg %p940
  %943 = shalt.err (%p941)
  %s944 = scalar_lea.sflag [#allocation2], 7
  %945 = vsyncmov %s944
  %s946 = vpop.sfrf %945
  %p947 = scmp.eq.s32.totalorder %s946, 0
  %p948 = pneg %p947
  %950 = shalt.err (%p948)
  %s951 = scalar_lea.sflag [#allocation2], 8
  %952 = vsyncmov %s951
  %s953 = vpop.sfrf %952
  %p954 = scmp.eq.s32.totalorder %s953, 0
  %p955 = pneg %p954
  %957 = shalt.err (%p955)
  %s958 = scalar_lea.sflag [#allocation2], 9
  %959 = vsyncmov %s958
  %s960 = vpop.sfrf %959
  %p961 = scmp.eq.s32.totalorder %s960, 0
  %p962 = pneg %p961
  %964 = shalt.err (%p962)
  %s965 = scalar_lea.sflag [#allocation2], 10
  %966 = vsyncmov %s965
  %s967 = vpop.sfrf %966
  %p968 = scmp.eq.s32.totalorder %s967, 0
  %p969 = pneg %p968
  %971 = shalt.err (%p969)
  %s972 = scalar_lea.sflag [#allocation2], 11
  %973 = vsyncmov %s972
  %s974 = vpop.sfrf %973
  %p975 = scmp.eq.s32.totalorder %s974, 0
  %p976 = pneg %p975
  %978 = shalt.err (%p976)
  %s979 = scalar_lea.sflag [#allocation2], 12
  %980 = vsyncmov %s979
  %s981 = vpop.sfrf %980
  %p982 = scmp.eq.s32.totalorder %s981, 0
  %p983 = pneg %p982
  %985 = shalt.err (%p983)
  %s986 = scalar_lea.sflag [#allocation2], 13
  %987 = vsyncmov %s986
  %s988 = vpop.sfrf %987
  %p989 = scmp.eq.s32.totalorder %s988, 0
  %p990 = pneg %p989
  %992 = shalt.err (%p990)
  %s993 = scalar_lea.sflag [#allocation2], 14
  %994 = vsyncmov %s993
  %s995 = vpop.sfrf %994
  %p996 = scmp.eq.s32.totalorder %s995, 0
  %p997 = pneg %p996
  %999 = shalt.err (%p997)
  %s1000 = scalar_lea.sflag [#allocation2], 15
  %1001 = vsyncmov %s1000
  %s1002 = vpop.sfrf %1001
  %p1003 = scmp.eq.s32.totalorder %s1002, 0
  %p1004 = pneg %p1003
  %1006 = shalt.err (%p1004)

</llo_original>
